<compile_context>
chip_gen: v7x
topology: tpu7x:2x2x1
jax: 0.10.0
libtpu: 0.0.40
codegen_flags: <defaults>
</compile_context>

<pallas_src>
import jax
import jax.numpy as jnp
from jax.experimental import pallas as pl
from jax.experimental.pallas import tpu as pltpu

# ---- problem sizes (small, consistent with the module) ----
B = 2          # flattened leading dims
L = 8          # sequence length
F = 32         # feature / model dim (= ff in_size = ff out_size)
H = 4          # attention heads
DH = F // H    # per-head dim
HID = 64       # ff hidden_size
LN_EPS = 1e-5


def encoder_layer_kernel(
    x_ref, mbias_ref,
    wq_ref, bq_ref, wk_ref, bk_ref, wv_ref, bv_ref, wo_ref, bo_ref,
    w1_ref, b1_ref, w2_ref, b2_ref, ln_g_ref, ln_b_ref,
    o_ref,
):
    f32 = jnp.float32
    bf16 = jnp.bfloat16

    x = x_ref[...].astype(bf16)                       # (B*L, F) for the MXU

    # ---- per-head Q/K/V projections on the flattened (B*L, F) activations ----
    # wq/wk/wv: (H, F, DH) bf16, biases: (H, 1, DH) f32.
    # The 1/sqrt(DH) softmax scale is already folded into wq/bq (wrapper-side).
    qs, ks, vs = [], [], []
    for h in range(H):
        qs.append(jnp.dot(x, wq_ref[h], preferred_element_type=f32) + bq_ref[h])
        ks.append(jnp.dot(x, wk_ref[h], preferred_element_type=f32) + bk_ref[h])
        vs.append(jnp.dot(x, wv_ref[h], preferred_element_type=f32) + bv_ref[h])

    # ---- attention per (batch, head); accumulate the output projection ----
    att_rows = []
    for b in range(B):
        rows = slice(b * L, (b + 1) * L)              # static, sublane-aligned
        bias = mbias_ref[b]                           # (1, L): 0 valid / -1e9 padded keys
        att_b = jnp.zeros((L, F), f32)
        for h in range(H):
            qb = qs[h][rows]                          # (L, DH) f32
            kb = ks[h][rows]
            vb = vs[h][rows]

            # scores: bf16 MXU inputs, f32 accumulation; additive key mask
            s = jnp.dot(qb.astype(bf16), kb.T.astype(bf16),
                        preferred_element_type=f32) + bias          # (L, L)
            m = jnp.max(s, axis=-1, keepdims=True)
            e = jnp.exp(s - m)
            p = e * pl.reciprocal(jnp.sum(e, axis=-1, keepdims=True),
                                  approx=True)                       # softmax
            hout = jnp.dot(p.astype(bf16), vb.astype(bf16),
                           preferred_element_type=f32)               # (L, DH)
            # accumulate output projection instead of concatenating heads
            att_b = att_b + jnp.dot(hout.astype(bf16), wo_ref[h],
                                    preferred_element_type=f32)      # (L, F)
        att_rows.append(att_b)

    att = jnp.concatenate(att_rows, axis=0) + bo_ref[...]            # (B*L, F)

    # ---- LinearResidualBlock: LN( W2 relu(W1 att + b1) + b2 + att ) ----
    hdn = jnp.maximum(
        jnp.dot(att.astype(bf16), w1_ref[...], preferred_element_type=f32)
        + b1_ref[...], 0.0)
    ff = jnp.dot(hdn.astype(bf16), w2_ref[...], preferred_element_type=f32) \
        + b2_ref[...]
    res = ff + att                                    # identity shortcut (in == out)

    # one-pass LayerNorm: var = E[x^2] - mu^2
    mu = jnp.mean(res, axis=-1, keepdims=True)
    var = jnp.mean(res * res, axis=-1, keepdims=True) - mu * mu
    normed = (res - mu) * jax.lax.rsqrt(var + LN_EPS)
    out = normed * ln_g_ref[...] + ln_b_ref[...]

    o_ref[...] = out.astype(o_ref.dtype)              # single (B*L, F) store


@jax.jit
def encoder_layer(x, mask, params):
    """x: (B, L, F) f32; mask: (B, L) with 1.0 = valid, 0.0 = padded key."""
    (wq, bq, wk, bk, wv, bv, wo, bo, w1, b1, w2, b2, ln_g, ln_b) = params
    Bx, Lx, Fx = x.shape
    bf16 = jnp.bfloat16

    # ---- one-time (wrapper-side) constant prep ----
    scale = 1.0 / (DH ** 0.5)
    # head-split Q/K/V weights: column slices of (F, F) -> (H, F, DH)
    wq_h = ((wq * scale).reshape(Fx, H, DH).transpose(1, 0, 2)).astype(bf16)
    wk_h = (wk.reshape(Fx, H, DH).transpose(1, 0, 2)).astype(bf16)
    wv_h = (wv.reshape(Fx, H, DH).transpose(1, 0, 2)).astype(bf16)
    bq_h = (bq * scale).reshape(1, H, DH).transpose(1, 0, 2)          # (H, 1, DH) f32
    bk_h = bk.reshape(1, H, DH).transpose(1, 0, 2)
    bv_h = bv.reshape(1, H, DH).transpose(1, 0, 2)
    # head-split output projection: row slices of (F, F) -> (H, DH, F)
    wo_h = wo.reshape(H, DH, Fx).astype(bf16)
    w1_c = w1.astype(bf16)
    w2_c = w2.astype(bf16)

    # additive key mask: 0 for valid keys, -1e9 for padded keys
    mask_bias = ((mask.astype(jnp.float32) - 1.0) * 1e9).reshape(Bx, 1, Lx)

    x_flat = x.reshape(Bx * Lx, Fx)                   # (B*L, F)

    vmem = pl.BlockSpec(memory_space=pltpu.MemorySpace.VMEM)
    out_flat = pl.pallas_call(
        encoder_layer_kernel,
        out_shape=jax.ShapeDtypeStruct((Bx * Lx, Fx), jnp.float32),
        in_specs=[vmem] * 16,                         # whole arrays in VMEM, no grid
        out_specs=vmem,
    )(x_flat, mask_bias,
      wq_h, bq_h, wk_h, bk_h, wv_h, bv_h, wo_h, bo,
      w1_c, b1, w2_c, b2, ln_g, ln_b)

    return out_flat.reshape(Bx, Lx, Fx)


def make_params(key):
    keys = jax.random.split(key, 8)
    s = 0.1
    wq = s * jax.random.normal(keys[0], (F, F), jnp.float32)
    wk = s * jax.random.normal(keys[1], (F, F), jnp.float32)
    wv = s * jax.random.normal(keys[2], (F, F), jnp.float32)
    wo = s * jax.random.normal(keys[3], (F, F), jnp.float32)
    w1 = s * jax.random.normal(keys[4], (F, HID), jnp.float32)
    w2 = s * jax.random.normal(keys[5], (HID, F), jnp.float32)
    bq = jnp.zeros((1, F), jnp.float32)
    bk = jnp.zeros((1, F), jnp.float32)
    bv = jnp.zeros((1, F), jnp.float32)
    bo = jnp.zeros((1, F), jnp.float32)
    b1 = jnp.zeros((1, HID), jnp.float32)
    b2 = jnp.zeros((1, F), jnp.float32)
    ln_g = jnp.ones((1, F), jnp.float32)
    ln_b = jnp.zeros((1, F), jnp.float32)
    return (wq, bq, wk, bk, wv, bv, wo, bo, w1, b1, w2, b2, ln_g, ln_b)


if __name__ == "__main__":
    key = jax.random.PRNGKey(0)
    kx, kp = jax.random.split(key)

    x = jax.random.normal(kx, (B, L, F), jnp.float32)
    # batch 0: all 8 tokens valid; batch 1: last 2 tokens padded
    lengths = jnp.array([8, 6], jnp.int32)
    mask = (jnp.arange(L)[None, :] < lengths[:, None]).astype(jnp.float32)  # (B, L)

    params = make_params(kp)

    out = encoder_layer(x, mask, params)
    jax.block_until_ready(out)

    assert out.shape == (B, L, F), out.shape
    assert bool(jnp.all(jnp.isfinite(out)))
    print("KERNEL_OK")
</pallas_src>

<mosaic_0001>
module attributes {stable_mosaic.version = 11 : i64} {
  func.func @encoder_layer_kernel(%arg0: memref<16x32xf32, #tpu.memory_space<vmem>>, %arg1: memref<2x1x8xf32, #tpu.memory_space<vmem>>, %arg2: memref<4x32x8xbf16, #tpu.memory_space<vmem>>, %arg3: memref<4x1x8xf32, #tpu.memory_space<vmem>>, %arg4: memref<4x32x8xbf16, #tpu.memory_space<vmem>>, %arg5: memref<4x1x8xf32, #tpu.memory_space<vmem>>, %arg6: memref<4x32x8xbf16, #tpu.memory_space<vmem>>, %arg7: memref<4x1x8xf32, #tpu.memory_space<vmem>>, %arg8: memref<4x8x32xbf16, #tpu.memory_space<vmem>>, %arg9: memref<1x32xf32, #tpu.memory_space<vmem>>, %arg10: memref<32x64xbf16, #tpu.memory_space<vmem>>, %arg11: memref<1x64xf32, #tpu.memory_space<vmem>>, %arg12: memref<64x32xbf16, #tpu.memory_space<vmem>>, %arg13: memref<1x32xf32, #tpu.memory_space<vmem>>, %arg14: memref<1x32xf32, #tpu.memory_space<vmem>>, %arg15: memref<1x32xf32, #tpu.memory_space<vmem>>, %arg16: memref<16x32xf32, #tpu.memory_space<vmem>>) attributes {dimension_semantics = [], scalar_prefetch = 0 : i64, scratch_operands = 0 : i64, tpu.core_type = #tpu.core_type<tc>} {
    %c0 = arith.constant 0 : index
    %c0_0 = arith.constant 0 : index
    %0 = vector.load %arg0[%c0, %c0_0] : memref<16x32xf32, #tpu.memory_space<vmem>>, vector<16x32xf32>
    %1 = arith.truncf %0 : vector<16x32xf32> to vector<16x32xbf16>
    %c0_1 = arith.constant 0 : index
    %c0_2 = arith.constant 0 : index
    %c0_3 = arith.constant 0 : index
    %2 = vector.load %arg2[%c0_1, %c0_2, %c0_3] : memref<4x32x8xbf16, #tpu.memory_space<vmem>>, vector<1x32x8xbf16>
    %3 = vector.shape_cast %2 : vector<1x32x8xbf16> to vector<32x8xbf16>
    %cst = arith.constant dense<0.000000e+00> : vector<16x8xf32>
    %4 = tpu.matmul %1, %3, %cst {dimension_numbers = #tpu.dot_dimension_numbers<[1], [0], [0], [1], [0, 0, 1, 1], [], []>} : vector<16x32xbf16>, vector<32x8xbf16>, vector<16x8xf32> -> vector<16x8xf32>
    %c0_4 = arith.constant 0 : index
    %c0_5 = arith.constant 0 : index
    %c0_6 = arith.constant 0 : index
    %5 = vector.load %arg3[%c0_4, %c0_5, %c0_6] : memref<4x1x8xf32, #tpu.memory_space<vmem>>, vector<1x1x8xf32>
    %6 = vector.shape_cast %5 : vector<1x1x8xf32> to vector<1x8xf32>
    %7 = vector.broadcast %6 : vector<1x8xf32> to vector<16x8xf32>
    %8 = arith.addf %4, %7 : vector<16x8xf32>
    %c0_7 = arith.constant 0 : index
    %c0_8 = arith.constant 0 : index
    %c0_9 = arith.constant 0 : index
    %9 = vector.load %arg4[%c0_7, %c0_8, %c0_9] : memref<4x32x8xbf16, #tpu.memory_space<vmem>>, vector<1x32x8xbf16>
    %10 = vector.shape_cast %9 : vector<1x32x8xbf16> to vector<32x8xbf16>
    %cst_10 = arith.constant dense<0.000000e+00> : vector<16x8xf32>
    %11 = tpu.matmul %1, %10, %cst_10 {dimension_numbers = #tpu.dot_dimension_numbers<[1], [0], [0], [1], [0, 0, 1, 1], [], []>} : vector<16x32xbf16>, vector<32x8xbf16>, vector<16x8xf32> -> vector<16x8xf32>
    %c0_11 = arith.constant 0 : index
    %c0_12 = arith.constant 0 : index
    %c0_13 = arith.constant 0 : index
    %12 = vector.load %arg5[%c0_11, %c0_12, %c0_13] : memref<4x1x8xf32, #tpu.memory_space<vmem>>, vector<1x1x8xf32>
    %13 = vector.shape_cast %12 : vector<1x1x8xf32> to vector<1x8xf32>
    %14 = vector.broadcast %13 : vector<1x8xf32> to vector<16x8xf32>
    %15 = arith.addf %11, %14 : vector<16x8xf32>
    %c0_14 = arith.constant 0 : index
    %c0_15 = arith.constant 0 : index
    %c0_16 = arith.constant 0 : index
    %16 = vector.load %arg6[%c0_14, %c0_15, %c0_16] : memref<4x32x8xbf16, #tpu.memory_space<vmem>>, vector<1x32x8xbf16>
    %17 = vector.shape_cast %16 : vector<1x32x8xbf16> to vector<32x8xbf16>
    %cst_17 = arith.constant dense<0.000000e+00> : vector<16x8xf32>
    %18 = tpu.matmul %1, %17, %cst_17 {dimension_numbers = #tpu.dot_dimension_numbers<[1], [0], [0], [1], [0, 0, 1, 1], [], []>} : vector<16x32xbf16>, vector<32x8xbf16>, vector<16x8xf32> -> vector<16x8xf32>
    %c0_18 = arith.constant 0 : index
    %c0_19 = arith.constant 0 : index
    %c0_20 = arith.constant 0 : index
    %19 = vector.load %arg7[%c0_18, %c0_19, %c0_20] : memref<4x1x8xf32, #tpu.memory_space<vmem>>, vector<1x1x8xf32>
    %20 = vector.shape_cast %19 : vector<1x1x8xf32> to vector<1x8xf32>
    %21 = vector.broadcast %20 : vector<1x8xf32> to vector<16x8xf32>
    %22 = arith.addf %18, %21 : vector<16x8xf32>
    %c1 = arith.constant 1 : index
    %c0_21 = arith.constant 0 : index
    %c0_22 = arith.constant 0 : index
    %23 = vector.load %arg2[%c1, %c0_21, %c0_22] : memref<4x32x8xbf16, #tpu.memory_space<vmem>>, vector<1x32x8xbf16>
    %24 = vector.shape_cast %23 : vector<1x32x8xbf16> to vector<32x8xbf16>
    %cst_23 = arith.constant dense<0.000000e+00> : vector<16x8xf32>
    %25 = tpu.matmul %1, %24, %cst_23 {dimension_numbers = #tpu.dot_dimension_numbers<[1], [0], [0], [1], [0, 0, 1, 1], [], []>} : vector<16x32xbf16>, vector<32x8xbf16>, vector<16x8xf32> -> vector<16x8xf32>
    %c1_24 = arith.constant 1 : index
    %c0_25 = arith.constant 0 : index
    %c0_26 = arith.constant 0 : index
    %26 = vector.load %arg3[%c1_24, %c0_25, %c0_26] : memref<4x1x8xf32, #tpu.memory_space<vmem>>, vector<1x1x8xf32>
    %27 = vector.shape_cast %26 : vector<1x1x8xf32> to vector<1x8xf32>
    %28 = vector.broadcast %27 : vector<1x8xf32> to vector<16x8xf32>
    %29 = arith.addf %25, %28 : vector<16x8xf32>
    %c1_27 = arith.constant 1 : index
    %c0_28 = arith.constant 0 : index
    %c0_29 = arith.constant 0 : index
    %30 = vector.load %arg4[%c1_27, %c0_28, %c0_29] : memref<4x32x8xbf16, #tpu.memory_space<vmem>>, vector<1x32x8xbf16>
    %31 = vector.shape_cast %30 : vector<1x32x8xbf16> to vector<32x8xbf16>
    %cst_30 = arith.constant dense<0.000000e+00> : vector<16x8xf32>
    %32 = tpu.matmul %1, %31, %cst_30 {dimension_numbers = #tpu.dot_dimension_numbers<[1], [0], [0], [1], [0, 0, 1, 1], [], []>} : vector<16x32xbf16>, vector<32x8xbf16>, vector<16x8xf32> -> vector<16x8xf32>
    %c1_31 = arith.constant 1 : index
    %c0_32 = arith.constant 0 : index
    %c0_33 = arith.constant 0 : index
    %33 = vector.load %arg5[%c1_31, %c0_32, %c0_33] : memref<4x1x8xf32, #tpu.memory_space<vmem>>, vector<1x1x8xf32>
    %34 = vector.shape_cast %33 : vector<1x1x8xf32> to vector<1x8xf32>
    %35 = vector.broadcast %34 : vector<1x8xf32> to vector<16x8xf32>
    %36 = arith.addf %32, %35 : vector<16x8xf32>
    %c1_34 = arith.constant 1 : index
    %c0_35 = arith.constant 0 : index
    %c0_36 = arith.constant 0 : index
    %37 = vector.load %arg6[%c1_34, %c0_35, %c0_36] : memref<4x32x8xbf16, #tpu.memory_space<vmem>>, vector<1x32x8xbf16>
    %38 = vector.shape_cast %37 : vector<1x32x8xbf16> to vector<32x8xbf16>
    %cst_37 = arith.constant dense<0.000000e+00> : vector<16x8xf32>
    %39 = tpu.matmul %1, %38, %cst_37 {dimension_numbers = #tpu.dot_dimension_numbers<[1], [0], [0], [1], [0, 0, 1, 1], [], []>} : vector<16x32xbf16>, vector<32x8xbf16>, vector<16x8xf32> -> vector<16x8xf32>
    %c1_38 = arith.constant 1 : index
    %c0_39 = arith.constant 0 : index
    %c0_40 = arith.constant 0 : index
    %40 = vector.load %arg7[%c1_38, %c0_39, %c0_40] : memref<4x1x8xf32, #tpu.memory_space<vmem>>, vector<1x1x8xf32>
    %41 = vector.shape_cast %40 : vector<1x1x8xf32> to vector<1x8xf32>
    %42 = vector.broadcast %41 : vector<1x8xf32> to vector<16x8xf32>
    %43 = arith.addf %39, %42 : vector<16x8xf32>
    %c2 = arith.constant 2 : index
    %c0_41 = arith.constant 0 : index
    %c0_42 = arith.constant 0 : index
    %44 = vector.load %arg2[%c2, %c0_41, %c0_42] : memref<4x32x8xbf16, #tpu.memory_space<vmem>>, vector<1x32x8xbf16>
    %45 = vector.shape_cast %44 : vector<1x32x8xbf16> to vector<32x8xbf16>
    %cst_43 = arith.constant dense<0.000000e+00> : vector<16x8xf32>
    %46 = tpu.matmul %1, %45, %cst_43 {dimension_numbers = #tpu.dot_dimension_numbers<[1], [0], [0], [1], [0, 0, 1, 1], [], []>} : vector<16x32xbf16>, vector<32x8xbf16>, vector<16x8xf32> -> vector<16x8xf32>
    %c2_44 = arith.constant 2 : index
    %c0_45 = arith.constant 0 : index
    %c0_46 = arith.constant 0 : index
    %47 = vector.load %arg3[%c2_44, %c0_45, %c0_46] : memref<4x1x8xf32, #tpu.memory_space<vmem>>, vector<1x1x8xf32>
    %48 = vector.shape_cast %47 : vector<1x1x8xf32> to vector<1x8xf32>
    %49 = vector.broadcast %48 : vector<1x8xf32> to vector<16x8xf32>
    %50 = arith.addf %46, %49 : vector<16x8xf32>
    %c2_47 = arith.constant 2 : index
    %c0_48 = arith.constant 0 : index
    %c0_49 = arith.constant 0 : index
    %51 = vector.load %arg4[%c2_47, %c0_48, %c0_49] : memref<4x32x8xbf16, #tpu.memory_space<vmem>>, vector<1x32x8xbf16>
    %52 = vector.shape_cast %51 : vector<1x32x8xbf16> to vector<32x8xbf16>
    %cst_50 = arith.constant dense<0.000000e+00> : vector<16x8xf32>
    %53 = tpu.matmul %1, %52, %cst_50 {dimension_numbers = #tpu.dot_dimension_numbers<[1], [0], [0], [1], [0, 0, 1, 1], [], []>} : vector<16x32xbf16>, vector<32x8xbf16>, vector<16x8xf32> -> vector<16x8xf32>
    %c2_51 = arith.constant 2 : index
    %c0_52 = arith.constant 0 : index
    %c0_53 = arith.constant 0 : index
    %54 = vector.load %arg5[%c2_51, %c0_52, %c0_53] : memref<4x1x8xf32, #tpu.memory_space<vmem>>, vector<1x1x8xf32>
    %55 = vector.shape_cast %54 : vector<1x1x8xf32> to vector<1x8xf32>
    %56 = vector.broadcast %55 : vector<1x8xf32> to vector<16x8xf32>
    %57 = arith.addf %53, %56 : vector<16x8xf32>
    %c2_54 = arith.constant 2 : index
    %c0_55 = arith.constant 0 : index
    %c0_56 = arith.constant 0 : index
    %58 = vector.load %arg6[%c2_54, %c0_55, %c0_56] : memref<4x32x8xbf16, #tpu.memory_space<vmem>>, vector<1x32x8xbf16>
    %59 = vector.shape_cast %58 : vector<1x32x8xbf16> to vector<32x8xbf16>
    %cst_57 = arith.constant dense<0.000000e+00> : vector<16x8xf32>
    %60 = tpu.matmul %1, %59, %cst_57 {dimension_numbers = #tpu.dot_dimension_numbers<[1], [0], [0], [1], [0, 0, 1, 1], [], []>} : vector<16x32xbf16>, vector<32x8xbf16>, vector<16x8xf32> -> vector<16x8xf32>
    %c2_58 = arith.constant 2 : index
    %c0_59 = arith.constant 0 : index
    %c0_60 = arith.constant 0 : index
    %61 = vector.load %arg7[%c2_58, %c0_59, %c0_60] : memref<4x1x8xf32, #tpu.memory_space<vmem>>, vector<1x1x8xf32>
    %62 = vector.shape_cast %61 : vector<1x1x8xf32> to vector<1x8xf32>
    %63 = vector.broadcast %62 : vector<1x8xf32> to vector<16x8xf32>
    %64 = arith.addf %60, %63 : vector<16x8xf32>
    %c3 = arith.constant 3 : index
    %c0_61 = arith.constant 0 : index
    %c0_62 = arith.constant 0 : index
    %65 = vector.load %arg2[%c3, %c0_61, %c0_62] : memref<4x32x8xbf16, #tpu.memory_space<vmem>>, vector<1x32x8xbf16>
    %66 = vector.shape_cast %65 : vector<1x32x8xbf16> to vector<32x8xbf16>
    %cst_63 = arith.constant dense<0.000000e+00> : vector<16x8xf32>
    %67 = tpu.matmul %1, %66, %cst_63 {dimension_numbers = #tpu.dot_dimension_numbers<[1], [0], [0], [1], [0, 0, 1, 1], [], []>} : vector<16x32xbf16>, vector<32x8xbf16>, vector<16x8xf32> -> vector<16x8xf32>
    %c3_64 = arith.constant 3 : index
    %c0_65 = arith.constant 0 : index
    %c0_66 = arith.constant 0 : index
    %68 = vector.load %arg3[%c3_64, %c0_65, %c0_66] : memref<4x1x8xf32, #tpu.memory_space<vmem>>, vector<1x1x8xf32>
    %69 = vector.shape_cast %68 : vector<1x1x8xf32> to vector<1x8xf32>
    %70 = vector.broadcast %69 : vector<1x8xf32> to vector<16x8xf32>
    %71 = arith.addf %67, %70 : vector<16x8xf32>
    %c3_67 = arith.constant 3 : index
    %c0_68 = arith.constant 0 : index
    %c0_69 = arith.constant 0 : index
    %72 = vector.load %arg4[%c3_67, %c0_68, %c0_69] : memref<4x32x8xbf16, #tpu.memory_space<vmem>>, vector<1x32x8xbf16>
    %73 = vector.shape_cast %72 : vector<1x32x8xbf16> to vector<32x8xbf16>
    %cst_70 = arith.constant dense<0.000000e+00> : vector<16x8xf32>
    %74 = tpu.matmul %1, %73, %cst_70 {dimension_numbers = #tpu.dot_dimension_numbers<[1], [0], [0], [1], [0, 0, 1, 1], [], []>} : vector<16x32xbf16>, vector<32x8xbf16>, vector<16x8xf32> -> vector<16x8xf32>
    %c3_71 = arith.constant 3 : index
    %c0_72 = arith.constant 0 : index
    %c0_73 = arith.constant 0 : index
    %75 = vector.load %arg5[%c3_71, %c0_72, %c0_73] : memref<4x1x8xf32, #tpu.memory_space<vmem>>, vector<1x1x8xf32>
    %76 = vector.shape_cast %75 : vector<1x1x8xf32> to vector<1x8xf32>
    %77 = vector.broadcast %76 : vector<1x8xf32> to vector<16x8xf32>
    %78 = arith.addf %74, %77 : vector<16x8xf32>
    %c3_74 = arith.constant 3 : index
    %c0_75 = arith.constant 0 : index
    %c0_76 = arith.constant 0 : index
    %79 = vector.load %arg6[%c3_74, %c0_75, %c0_76] : memref<4x32x8xbf16, #tpu.memory_space<vmem>>, vector<1x32x8xbf16>
    %80 = vector.shape_cast %79 : vector<1x32x8xbf16> to vector<32x8xbf16>
    %cst_77 = arith.constant dense<0.000000e+00> : vector<16x8xf32>
    %81 = tpu.matmul %1, %80, %cst_77 {dimension_numbers = #tpu.dot_dimension_numbers<[1], [0], [0], [1], [0, 0, 1, 1], [], []>} : vector<16x32xbf16>, vector<32x8xbf16>, vector<16x8xf32> -> vector<16x8xf32>
    %c3_78 = arith.constant 3 : index
    %c0_79 = arith.constant 0 : index
    %c0_80 = arith.constant 0 : index
    %82 = vector.load %arg7[%c3_78, %c0_79, %c0_80] : memref<4x1x8xf32, #tpu.memory_space<vmem>>, vector<1x1x8xf32>
    %83 = vector.shape_cast %82 : vector<1x1x8xf32> to vector<1x8xf32>
    %84 = vector.broadcast %83 : vector<1x8xf32> to vector<16x8xf32>
    %85 = arith.addf %81, %84 : vector<16x8xf32>
    %c0_81 = arith.constant 0 : index
    %c0_82 = arith.constant 0 : index
    %c0_83 = arith.constant 0 : index
    %86 = vector.load %arg1[%c0_81, %c0_82, %c0_83] : memref<2x1x8xf32, #tpu.memory_space<vmem>>, vector<1x1x8xf32>
    %87 = vector.shape_cast %86 : vector<1x1x8xf32> to vector<1x8xf32>
    %cst_84 = arith.constant 0.000000e+00 : f32
    %88 = vector.broadcast %cst_84 : f32 to vector<8x32xf32>
    %89 = vector.extract_strided_slice %8 {offsets = [0, 0], sizes = [8, 8], strides = [1, 1]} : vector<16x8xf32> to vector<8x8xf32>
    %90 = vector.extract_strided_slice %15 {offsets = [0, 0], sizes = [8, 8], strides = [1, 1]} : vector<16x8xf32> to vector<8x8xf32>
    %91 = vector.extract_strided_slice %22 {offsets = [0, 0], sizes = [8, 8], strides = [1, 1]} : vector<16x8xf32> to vector<8x8xf32>
    %92 = arith.truncf %89 : vector<8x8xf32> to vector<8x8xbf16>
    %93 = tpu.transpose %90, [1, 0] : vector<8x8xf32> -> vector<8x8xf32>
    %94 = arith.truncf %93 : vector<8x8xf32> to vector<8x8xbf16>
    %cst_85 = arith.constant dense<0.000000e+00> : vector<8x8xf32>
    %95 = tpu.matmul %92, %94, %cst_85 {dimension_numbers = #tpu.dot_dimension_numbers<[1], [0], [0], [1], [0, 0, 1, 1], [], []>} : vector<8x8xbf16>, vector<8x8xbf16>, vector<8x8xf32> -> vector<8x8xf32>
    %96 = vector.broadcast %87 : vector<1x8xf32> to vector<8x8xf32>
    %97 = arith.addf %95, %96 : vector<8x8xf32>
    %cst_86 = arith.constant dense<0xFF800000> : vector<8xf32>
    %98 = vector.multi_reduction <maximumf>, %97, %cst_86 [1] : vector<8x8xf32> to vector<8xf32>
    %99 = vector.shape_cast %98 : vector<8xf32> to vector<8x1xf32>
    %100 = vector.broadcast %99 : vector<8x1xf32> to vector<8x8xf32>
    %101 = arith.subf %97, %100 : vector<8x8xf32>
    %102 = math.exp %101 : vector<8x8xf32>
    %cst_87 = arith.constant dense<0.000000e+00> : vector<8xf32>
    %103 = vector.multi_reduction <add>, %102, %cst_87 [1] : vector<8x8xf32> to vector<8xf32>
    %104 = vector.shape_cast %103 : vector<8xf32> to vector<8x1xf32>
    %105 = tpu.reciprocal %104 {approx = true} : vector<8x1xf32> -> vector<8x1xf32>
    %106 = vector.broadcast %105 : vector<8x1xf32> to vector<8x8xf32>
    %107 = arith.mulf %102, %106 : vector<8x8xf32>
    %108 = arith.truncf %107 : vector<8x8xf32> to vector<8x8xbf16>
    %109 = arith.truncf %91 : vector<8x8xf32> to vector<8x8xbf16>
    %cst_88 = arith.constant dense<0.000000e+00> : vector<8x8xf32>
    %110 = tpu.matmul %108, %109, %cst_88 {dimension_numbers = #tpu.dot_dimension_numbers<[1], [0], [0], [1], [0, 0, 1, 1], [], []>} : vector<8x8xbf16>, vector<8x8xbf16>, vector<8x8xf32> -> vector<8x8xf32>
    %111 = arith.truncf %110 : vector<8x8xf32> to vector<8x8xbf16>
    %c0_89 = arith.constant 0 : index
    %c0_90 = arith.constant 0 : index
    %c0_91 = arith.constant 0 : index
    %112 = vector.load %arg8[%c0_89, %c0_90, %c0_91] : memref<4x8x32xbf16, #tpu.memory_space<vmem>>, vector<1x8x32xbf16>
    %113 = vector.shape_cast %112 : vector<1x8x32xbf16> to vector<8x32xbf16>
    %cst_92 = arith.constant dense<0.000000e+00> : vector<8x32xf32>
    %114 = tpu.matmul %111, %113, %cst_92 {dimension_numbers = #tpu.dot_dimension_numbers<[1], [0], [0], [1], [0, 0, 1, 1], [], []>} : vector<8x8xbf16>, vector<8x32xbf16>, vector<8x32xf32> -> vector<8x32xf32>
    %115 = arith.addf %88, %114 : vector<8x32xf32>
    %116 = vector.extract_strided_slice %29 {offsets = [0, 0], sizes = [8, 8], strides = [1, 1]} : vector<16x8xf32> to vector<8x8xf32>
    %117 = vector.extract_strided_slice %36 {offsets = [0, 0], sizes = [8, 8], strides = [1, 1]} : vector<16x8xf32> to vector<8x8xf32>
    %118 = vector.extract_strided_slice %43 {offsets = [0, 0], sizes = [8, 8], strides = [1, 1]} : vector<16x8xf32> to vector<8x8xf32>
    %119 = arith.truncf %116 : vector<8x8xf32> to vector<8x8xbf16>
    %120 = tpu.transpose %117, [1, 0] : vector<8x8xf32> -> vector<8x8xf32>
    %121 = arith.truncf %120 : vector<8x8xf32> to vector<8x8xbf16>
    %cst_93 = arith.constant dense<0.000000e+00> : vector<8x8xf32>
    %122 = tpu.matmul %119, %121, %cst_93 {dimension_numbers = #tpu.dot_dimension_numbers<[1], [0], [0], [1], [0, 0, 1, 1], [], []>} : vector<8x8xbf16>, vector<8x8xbf16>, vector<8x8xf32> -> vector<8x8xf32>
    %123 = vector.broadcast %87 : vector<1x8xf32> to vector<8x8xf32>
    %124 = arith.addf %122, %123 : vector<8x8xf32>
    %cst_94 = arith.constant dense<0xFF800000> : vector<8xf32>
    %125 = vector.multi_reduction <maximumf>, %124, %cst_94 [1] : vector<8x8xf32> to vector<8xf32>
    %126 = vector.shape_cast %125 : vector<8xf32> to vector<8x1xf32>
    %127 = vector.broadcast %126 : vector<8x1xf32> to vector<8x8xf32>
    %128 = arith.subf %124, %127 : vector<8x8xf32>
    %129 = math.exp %128 : vector<8x8xf32>
    %cst_95 = arith.constant dense<0.000000e+00> : vector<8xf32>
    %130 = vector.multi_reduction <add>, %129, %cst_95 [1] : vector<8x8xf32> to vector<8xf32>
    %131 = vector.shape_cast %130 : vector<8xf32> to vector<8x1xf32>
    %132 = tpu.reciprocal %131 {approx = true} : vector<8x1xf32> -> vector<8x1xf32>
    %133 = vector.broadcast %132 : vector<8x1xf32> to vector<8x8xf32>
    %134 = arith.mulf %129, %133 : vector<8x8xf32>
    %135 = arith.truncf %134 : vector<8x8xf32> to vector<8x8xbf16>
    %136 = arith.truncf %118 : vector<8x8xf32> to vector<8x8xbf16>
    %cst_96 = arith.constant dense<0.000000e+00> : vector<8x8xf32>
    %137 = tpu.matmul %135, %136, %cst_96 {dimension_numbers = #tpu.dot_dimension_numbers<[1], [0], [0], [1], [0, 0, 1, 1], [], []>} : vector<8x8xbf16>, vector<8x8xbf16>, vector<8x8xf32> -> vector<8x8xf32>
    %138 = arith.truncf %137 : vector<8x8xf32> to vector<8x8xbf16>
    %c1_97 = arith.constant 1 : index
    %c0_98 = arith.constant 0 : index
    %c0_99 = arith.constant 0 : index
    %139 = vector.load %arg8[%c1_97, %c0_98, %c0_99] : memref<4x8x32xbf16, #tpu.memory_space<vmem>>, vector<1x8x32xbf16>
    %140 = vector.shape_cast %139 : vector<1x8x32xbf16> to vector<8x32xbf16>
    %cst_100 = arith.constant dense<0.000000e+00> : vector<8x32xf32>
    %141 = tpu.matmul %138, %140, %cst_100 {dimension_numbers = #tpu.dot_dimension_numbers<[1], [0], [0], [1], [0, 0, 1, 1], [], []>} : vector<8x8xbf16>, vector<8x32xbf16>, vector<8x32xf32> -> vector<8x32xf32>
    %142 = arith.addf %115, %141 : vector<8x32xf32>
    %143 = vector.extract_strided_slice %50 {offsets = [0, 0], sizes = [8, 8], strides = [1, 1]} : vector<16x8xf32> to vector<8x8xf32>
    %144 = vector.extract_strided_slice %57 {offsets = [0, 0], sizes = [8, 8], strides = [1, 1]} : vector<16x8xf32> to vector<8x8xf32>
    %145 = vector.extract_strided_slice %64 {offsets = [0, 0], sizes = [8, 8], strides = [1, 1]} : vector<16x8xf32> to vector<8x8xf32>
    %146 = arith.truncf %143 : vector<8x8xf32> to vector<8x8xbf16>
    %147 = tpu.transpose %144, [1, 0] : vector<8x8xf32> -> vector<8x8xf32>
    %148 = arith.truncf %147 : vector<8x8xf32> to vector<8x8xbf16>
    %cst_101 = arith.constant dense<0.000000e+00> : vector<8x8xf32>
    %149 = tpu.matmul %146, %148, %cst_101 {dimension_numbers = #tpu.dot_dimension_numbers<[1], [0], [0], [1], [0, 0, 1, 1], [], []>} : vector<8x8xbf16>, vector<8x8xbf16>, vector<8x8xf32> -> vector<8x8xf32>
    %150 = vector.broadcast %87 : vector<1x8xf32> to vector<8x8xf32>
    %151 = arith.addf %149, %150 : vector<8x8xf32>
    %cst_102 = arith.constant dense<0xFF800000> : vector<8xf32>
    %152 = vector.multi_reduction <maximumf>, %151, %cst_102 [1] : vector<8x8xf32> to vector<8xf32>
    %153 = vector.shape_cast %152 : vector<8xf32> to vector<8x1xf32>
    %154 = vector.broadcast %153 : vector<8x1xf32> to vector<8x8xf32>
    %155 = arith.subf %151, %154 : vector<8x8xf32>
    %156 = math.exp %155 : vector<8x8xf32>
    %cst_103 = arith.constant dense<0.000000e+00> : vector<8xf32>
    %157 = vector.multi_reduction <add>, %156, %cst_103 [1] : vector<8x8xf32> to vector<8xf32>
    %158 = vector.shape_cast %157 : vector<8xf32> to vector<8x1xf32>
    %159 = tpu.reciprocal %158 {approx = true} : vector<8x1xf32> -> vector<8x1xf32>
    %160 = vector.broadcast %159 : vector<8x1xf32> to vector<8x8xf32>
    %161 = arith.mulf %156, %160 : vector<8x8xf32>
    %162 = arith.truncf %161 : vector<8x8xf32> to vector<8x8xbf16>
    %163 = arith.truncf %145 : vector<8x8xf32> to vector<8x8xbf16>
    %cst_104 = arith.constant dense<0.000000e+00> : vector<8x8xf32>
    %164 = tpu.matmul %162, %163, %cst_104 {dimension_numbers = #tpu.dot_dimension_numbers<[1], [0], [0], [1], [0, 0, 1, 1], [], []>} : vector<8x8xbf16>, vector<8x8xbf16>, vector<8x8xf32> -> vector<8x8xf32>
    %165 = arith.truncf %164 : vector<8x8xf32> to vector<8x8xbf16>
    %c2_105 = arith.constant 2 : index
    %c0_106 = arith.constant 0 : index
    %c0_107 = arith.constant 0 : index
    %166 = vector.load %arg8[%c2_105, %c0_106, %c0_107] : memref<4x8x32xbf16, #tpu.memory_space<vmem>>, vector<1x8x32xbf16>
    %167 = vector.shape_cast %166 : vector<1x8x32xbf16> to vector<8x32xbf16>
    %cst_108 = arith.constant dense<0.000000e+00> : vector<8x32xf32>
    %168 = tpu.matmul %165, %167, %cst_108 {dimension_numbers = #tpu.dot_dimension_numbers<[1], [0], [0], [1], [0, 0, 1, 1], [], []>} : vector<8x8xbf16>, vector<8x32xbf16>, vector<8x32xf32> -> vector<8x32xf32>
    %169 = arith.addf %142, %168 : vector<8x32xf32>
    %170 = vector.extract_strided_slice %71 {offsets = [0, 0], sizes = [8, 8], strides = [1, 1]} : vector<16x8xf32> to vector<8x8xf32>
    %171 = vector.extract_strided_slice %78 {offsets = [0, 0], sizes = [8, 8], strides = [1, 1]} : vector<16x8xf32> to vector<8x8xf32>
    %172 = vector.extract_strided_slice %85 {offsets = [0, 0], sizes = [8, 8], strides = [1, 1]} : vector<16x8xf32> to vector<8x8xf32>
    %173 = arith.truncf %170 : vector<8x8xf32> to vector<8x8xbf16>
    %174 = tpu.transpose %171, [1, 0] : vector<8x8xf32> -> vector<8x8xf32>
    %175 = arith.truncf %174 : vector<8x8xf32> to vector<8x8xbf16>
    %cst_109 = arith.constant dense<0.000000e+00> : vector<8x8xf32>
    %176 = tpu.matmul %173, %175, %cst_109 {dimension_numbers = #tpu.dot_dimension_numbers<[1], [0], [0], [1], [0, 0, 1, 1], [], []>} : vector<8x8xbf16>, vector<8x8xbf16>, vector<8x8xf32> -> vector<8x8xf32>
    %177 = vector.broadcast %87 : vector<1x8xf32> to vector<8x8xf32>
    %178 = arith.addf %176, %177 : vector<8x8xf32>
    %cst_110 = arith.constant dense<0xFF800000> : vector<8xf32>
    %179 = vector.multi_reduction <maximumf>, %178, %cst_110 [1] : vector<8x8xf32> to vector<8xf32>
    %180 = vector.shape_cast %179 : vector<8xf32> to vector<8x1xf32>
    %181 = vector.broadcast %180 : vector<8x1xf32> to vector<8x8xf32>
    %182 = arith.subf %178, %181 : vector<8x8xf32>
    %183 = math.exp %182 : vector<8x8xf32>
    %cst_111 = arith.constant dense<0.000000e+00> : vector<8xf32>
    %184 = vector.multi_reduction <add>, %183, %cst_111 [1] : vector<8x8xf32> to vector<8xf32>
    %185 = vector.shape_cast %184 : vector<8xf32> to vector<8x1xf32>
    %186 = tpu.reciprocal %185 {approx = true} : vector<8x1xf32> -> vector<8x1xf32>
    %187 = vector.broadcast %186 : vector<8x1xf32> to vector<8x8xf32>
    %188 = arith.mulf %183, %187 : vector<8x8xf32>
    %189 = arith.truncf %188 : vector<8x8xf32> to vector<8x8xbf16>
    %190 = arith.truncf %172 : vector<8x8xf32> to vector<8x8xbf16>
    %cst_112 = arith.constant dense<0.000000e+00> : vector<8x8xf32>
    %191 = tpu.matmul %189, %190, %cst_112 {dimension_numbers = #tpu.dot_dimension_numbers<[1], [0], [0], [1], [0, 0, 1, 1], [], []>} : vector<8x8xbf16>, vector<8x8xbf16>, vector<8x8xf32> -> vector<8x8xf32>
    %192 = arith.truncf %191 : vector<8x8xf32> to vector<8x8xbf16>
    %c3_113 = arith.constant 3 : index
    %c0_114 = arith.constant 0 : index
    %c0_115 = arith.constant 0 : index
    %193 = vector.load %arg8[%c3_113, %c0_114, %c0_115] : memref<4x8x32xbf16, #tpu.memory_space<vmem>>, vector<1x8x32xbf16>
    %194 = vector.shape_cast %193 : vector<1x8x32xbf16> to vector<8x32xbf16>
    %cst_116 = arith.constant dense<0.000000e+00> : vector<8x32xf32>
    %195 = tpu.matmul %192, %194, %cst_116 {dimension_numbers = #tpu.dot_dimension_numbers<[1], [0], [0], [1], [0, 0, 1, 1], [], []>} : vector<8x8xbf16>, vector<8x32xbf16>, vector<8x32xf32> -> vector<8x32xf32>
    %196 = arith.addf %169, %195 : vector<8x32xf32>
    %c1_117 = arith.constant 1 : index
    %c0_118 = arith.constant 0 : index
    %c0_119 = arith.constant 0 : index
    %197 = vector.load %arg1[%c1_117, %c0_118, %c0_119] : memref<2x1x8xf32, #tpu.memory_space<vmem>>, vector<1x1x8xf32>
    %198 = vector.shape_cast %197 : vector<1x1x8xf32> to vector<1x8xf32>
    %cst_120 = arith.constant 0.000000e+00 : f32
    %199 = vector.broadcast %cst_120 : f32 to vector<8x32xf32>
    %200 = vector.extract_strided_slice %8 {offsets = [8, 0], sizes = [8, 8], strides = [1, 1]} : vector<16x8xf32> to vector<8x8xf32>
    %201 = vector.extract_strided_slice %15 {offsets = [8, 0], sizes = [8, 8], strides = [1, 1]} : vector<16x8xf32> to vector<8x8xf32>
    %202 = vector.extract_strided_slice %22 {offsets = [8, 0], sizes = [8, 8], strides = [1, 1]} : vector<16x8xf32> to vector<8x8xf32>
    %203 = arith.truncf %200 : vector<8x8xf32> to vector<8x8xbf16>
    %204 = tpu.transpose %201, [1, 0] : vector<8x8xf32> -> vector<8x8xf32>
    %205 = arith.truncf %204 : vector<8x8xf32> to vector<8x8xbf16>
    %cst_121 = arith.constant dense<0.000000e+00> : vector<8x8xf32>
    %206 = tpu.matmul %203, %205, %cst_121 {dimension_numbers = #tpu.dot_dimension_numbers<[1], [0], [0], [1], [0, 0, 1, 1], [], []>} : vector<8x8xbf16>, vector<8x8xbf16>, vector<8x8xf32> -> vector<8x8xf32>
    %207 = vector.broadcast %198 : vector<1x8xf32> to vector<8x8xf32>
    %208 = arith.addf %206, %207 : vector<8x8xf32>
    %cst_122 = arith.constant dense<0xFF800000> : vector<8xf32>
    %209 = vector.multi_reduction <maximumf>, %208, %cst_122 [1] : vector<8x8xf32> to vector<8xf32>
    %210 = vector.shape_cast %209 : vector<8xf32> to vector<8x1xf32>
    %211 = vector.broadcast %210 : vector<8x1xf32> to vector<8x8xf32>
    %212 = arith.subf %208, %211 : vector<8x8xf32>
    %213 = math.exp %212 : vector<8x8xf32>
    %cst_123 = arith.constant dense<0.000000e+00> : vector<8xf32>
    %214 = vector.multi_reduction <add>, %213, %cst_123 [1] : vector<8x8xf32> to vector<8xf32>
    %215 = vector.shape_cast %214 : vector<8xf32> to vector<8x1xf32>
    %216 = tpu.reciprocal %215 {approx = true} : vector<8x1xf32> -> vector<8x1xf32>
    %217 = vector.broadcast %216 : vector<8x1xf32> to vector<8x8xf32>
    %218 = arith.mulf %213, %217 : vector<8x8xf32>
    %219 = arith.truncf %218 : vector<8x8xf32> to vector<8x8xbf16>
    %220 = arith.truncf %202 : vector<8x8xf32> to vector<8x8xbf16>
    %cst_124 = arith.constant dense<0.000000e+00> : vector<8x8xf32>
    %221 = tpu.matmul %219, %220, %cst_124 {dimension_numbers = #tpu.dot_dimension_numbers<[1], [0], [0], [1], [0, 0, 1, 1], [], []>} : vector<8x8xbf16>, vector<8x8xbf16>, vector<8x8xf32> -> vector<8x8xf32>
    %222 = arith.truncf %221 : vector<8x8xf32> to vector<8x8xbf16>
    %c0_125 = arith.constant 0 : index
    %c0_126 = arith.constant 0 : index
    %c0_127 = arith.constant 0 : index
    %223 = vector.load %arg8[%c0_125, %c0_126, %c0_127] : memref<4x8x32xbf16, #tpu.memory_space<vmem>>, vector<1x8x32xbf16>
    %224 = vector.shape_cast %223 : vector<1x8x32xbf16> to vector<8x32xbf16>
    %cst_128 = arith.constant dense<0.000000e+00> : vector<8x32xf32>
    %225 = tpu.matmul %222, %224, %cst_128 {dimension_numbers = #tpu.dot_dimension_numbers<[1], [0], [0], [1], [0, 0, 1, 1], [], []>} : vector<8x8xbf16>, vector<8x32xbf16>, vector<8x32xf32> -> vector<8x32xf32>
    %226 = arith.addf %199, %225 : vector<8x32xf32>
    %227 = vector.extract_strided_slice %29 {offsets = [8, 0], sizes = [8, 8], strides = [1, 1]} : vector<16x8xf32> to vector<8x8xf32>
    %228 = vector.extract_strided_slice %36 {offsets = [8, 0], sizes = [8, 8], strides = [1, 1]} : vector<16x8xf32> to vector<8x8xf32>
    %229 = vector.extract_strided_slice %43 {offsets = [8, 0], sizes = [8, 8], strides = [1, 1]} : vector<16x8xf32> to vector<8x8xf32>
    %230 = arith.truncf %227 : vector<8x8xf32> to vector<8x8xbf16>
    %231 = tpu.transpose %228, [1, 0] : vector<8x8xf32> -> vector<8x8xf32>
    %232 = arith.truncf %231 : vector<8x8xf32> to vector<8x8xbf16>
    %cst_129 = arith.constant dense<0.000000e+00> : vector<8x8xf32>
    %233 = tpu.matmul %230, %232, %cst_129 {dimension_numbers = #tpu.dot_dimension_numbers<[1], [0], [0], [1], [0, 0, 1, 1], [], []>} : vector<8x8xbf16>, vector<8x8xbf16>, vector<8x8xf32> -> vector<8x8xf32>
    %234 = vector.broadcast %198 : vector<1x8xf32> to vector<8x8xf32>
    %235 = arith.addf %233, %234 : vector<8x8xf32>
    %cst_130 = arith.constant dense<0xFF800000> : vector<8xf32>
    %236 = vector.multi_reduction <maximumf>, %235, %cst_130 [1] : vector<8x8xf32> to vector<8xf32>
    %237 = vector.shape_cast %236 : vector<8xf32> to vector<8x1xf32>
    %238 = vector.broadcast %237 : vector<8x1xf32> to vector<8x8xf32>
    %239 = arith.subf %235, %238 : vector<8x8xf32>
    %240 = math.exp %239 : vector<8x8xf32>
    %cst_131 = arith.constant dense<0.000000e+00> : vector<8xf32>
    %241 = vector.multi_reduction <add>, %240, %cst_131 [1] : vector<8x8xf32> to vector<8xf32>
    %242 = vector.shape_cast %241 : vector<8xf32> to vector<8x1xf32>
    %243 = tpu.reciprocal %242 {approx = true} : vector<8x1xf32> -> vector<8x1xf32>
    %244 = vector.broadcast %243 : vector<8x1xf32> to vector<8x8xf32>
    %245 = arith.mulf %240, %244 : vector<8x8xf32>
    %246 = arith.truncf %245 : vector<8x8xf32> to vector<8x8xbf16>
    %247 = arith.truncf %229 : vector<8x8xf32> to vector<8x8xbf16>
    %cst_132 = arith.constant dense<0.000000e+00> : vector<8x8xf32>
    %248 = tpu.matmul %246, %247, %cst_132 {dimension_numbers = #tpu.dot_dimension_numbers<[1], [0], [0], [1], [0, 0, 1, 1], [], []>} : vector<8x8xbf16>, vector<8x8xbf16>, vector<8x8xf32> -> vector<8x8xf32>
    %249 = arith.truncf %248 : vector<8x8xf32> to vector<8x8xbf16>
    %c1_133 = arith.constant 1 : index
    %c0_134 = arith.constant 0 : index
    %c0_135 = arith.constant 0 : index
    %250 = vector.load %arg8[%c1_133, %c0_134, %c0_135] : memref<4x8x32xbf16, #tpu.memory_space<vmem>>, vector<1x8x32xbf16>
    %251 = vector.shape_cast %250 : vector<1x8x32xbf16> to vector<8x32xbf16>
    %cst_136 = arith.constant dense<0.000000e+00> : vector<8x32xf32>
    %252 = tpu.matmul %249, %251, %cst_136 {dimension_numbers = #tpu.dot_dimension_numbers<[1], [0], [0], [1], [0, 0, 1, 1], [], []>} : vector<8x8xbf16>, vector<8x32xbf16>, vector<8x32xf32> -> vector<8x32xf32>
    %253 = arith.addf %226, %252 : vector<8x32xf32>
    %254 = vector.extract_strided_slice %50 {offsets = [8, 0], sizes = [8, 8], strides = [1, 1]} : vector<16x8xf32> to vector<8x8xf32>
    %255 = vector.extract_strided_slice %57 {offsets = [8, 0], sizes = [8, 8], strides = [1, 1]} : vector<16x8xf32> to vector<8x8xf32>
    %256 = vector.extract_strided_slice %64 {offsets = [8, 0], sizes = [8, 8], strides = [1, 1]} : vector<16x8xf32> to vector<8x8xf32>
    %257 = arith.truncf %254 : vector<8x8xf32> to vector<8x8xbf16>
    %258 = tpu.transpose %255, [1, 0] : vector<8x8xf32> -> vector<8x8xf32>
    %259 = arith.truncf %258 : vector<8x8xf32> to vector<8x8xbf16>
    %cst_137 = arith.constant dense<0.000000e+00> : vector<8x8xf32>
    %260 = tpu.matmul %257, %259, %cst_137 {dimension_numbers = #tpu.dot_dimension_numbers<[1], [0], [0], [1], [0, 0, 1, 1], [], []>} : vector<8x8xbf16>, vector<8x8xbf16>, vector<8x8xf32> -> vector<8x8xf32>
    %261 = vector.broadcast %198 : vector<1x8xf32> to vector<8x8xf32>
    %262 = arith.addf %260, %261 : vector<8x8xf32>
    %cst_138 = arith.constant dense<0xFF800000> : vector<8xf32>
    %263 = vector.multi_reduction <maximumf>, %262, %cst_138 [1] : vector<8x8xf32> to vector<8xf32>
    %264 = vector.shape_cast %263 : vector<8xf32> to vector<8x1xf32>
    %265 = vector.broadcast %264 : vector<8x1xf32> to vector<8x8xf32>
    %266 = arith.subf %262, %265 : vector<8x8xf32>
    %267 = math.exp %266 : vector<8x8xf32>
    %cst_139 = arith.constant dense<0.000000e+00> : vector<8xf32>
    %268 = vector.multi_reduction <add>, %267, %cst_139 [1] : vector<8x8xf32> to vector<8xf32>
    %269 = vector.shape_cast %268 : vector<8xf32> to vector<8x1xf32>
    %270 = tpu.reciprocal %269 {approx = true} : vector<8x1xf32> -> vector<8x1xf32>
    %271 = vector.broadcast %270 : vector<8x1xf32> to vector<8x8xf32>
    %272 = arith.mulf %267, %271 : vector<8x8xf32>
    %273 = arith.truncf %272 : vector<8x8xf32> to vector<8x8xbf16>
    %274 = arith.truncf %256 : vector<8x8xf32> to vector<8x8xbf16>
    %cst_140 = arith.constant dense<0.000000e+00> : vector<8x8xf32>
    %275 = tpu.matmul %273, %274, %cst_140 {dimension_numbers = #tpu.dot_dimension_numbers<[1], [0], [0], [1], [0, 0, 1, 1], [], []>} : vector<8x8xbf16>, vector<8x8xbf16>, vector<8x8xf32> -> vector<8x8xf32>
    %276 = arith.truncf %275 : vector<8x8xf32> to vector<8x8xbf16>
    %c2_141 = arith.constant 2 : index
    %c0_142 = arith.constant 0 : index
    %c0_143 = arith.constant 0 : index
    %277 = vector.load %arg8[%c2_141, %c0_142, %c0_143] : memref<4x8x32xbf16, #tpu.memory_space<vmem>>, vector<1x8x32xbf16>
    %278 = vector.shape_cast %277 : vector<1x8x32xbf16> to vector<8x32xbf16>
    %cst_144 = arith.constant dense<0.000000e+00> : vector<8x32xf32>
    %279 = tpu.matmul %276, %278, %cst_144 {dimension_numbers = #tpu.dot_dimension_numbers<[1], [0], [0], [1], [0, 0, 1, 1], [], []>} : vector<8x8xbf16>, vector<8x32xbf16>, vector<8x32xf32> -> vector<8x32xf32>
    %280 = arith.addf %253, %279 : vector<8x32xf32>
    %281 = vector.extract_strided_slice %71 {offsets = [8, 0], sizes = [8, 8], strides = [1, 1]} : vector<16x8xf32> to vector<8x8xf32>
    %282 = vector.extract_strided_slice %78 {offsets = [8, 0], sizes = [8, 8], strides = [1, 1]} : vector<16x8xf32> to vector<8x8xf32>
    %283 = vector.extract_strided_slice %85 {offsets = [8, 0], sizes = [8, 8], strides = [1, 1]} : vector<16x8xf32> to vector<8x8xf32>
    %284 = arith.truncf %281 : vector<8x8xf32> to vector<8x8xbf16>
    %285 = tpu.transpose %282, [1, 0] : vector<8x8xf32> -> vector<8x8xf32>
    %286 = arith.truncf %285 : vector<8x8xf32> to vector<8x8xbf16>
    %cst_145 = arith.constant dense<0.000000e+00> : vector<8x8xf32>
    %287 = tpu.matmul %284, %286, %cst_145 {dimension_numbers = #tpu.dot_dimension_numbers<[1], [0], [0], [1], [0, 0, 1, 1], [], []>} : vector<8x8xbf16>, vector<8x8xbf16>, vector<8x8xf32> -> vector<8x8xf32>
    %288 = vector.broadcast %198 : vector<1x8xf32> to vector<8x8xf32>
    %289 = arith.addf %287, %288 : vector<8x8xf32>
    %cst_146 = arith.constant dense<0xFF800000> : vector<8xf32>
    %290 = vector.multi_reduction <maximumf>, %289, %cst_146 [1] : vector<8x8xf32> to vector<8xf32>
    %291 = vector.shape_cast %290 : vector<8xf32> to vector<8x1xf32>
    %292 = vector.broadcast %291 : vector<8x1xf32> to vector<8x8xf32>
    %293 = arith.subf %289, %292 : vector<8x8xf32>
    %294 = math.exp %293 : vector<8x8xf32>
    %cst_147 = arith.constant dense<0.000000e+00> : vector<8xf32>
    %295 = vector.multi_reduction <add>, %294, %cst_147 [1] : vector<8x8xf32> to vector<8xf32>
    %296 = vector.shape_cast %295 : vector<8xf32> to vector<8x1xf32>
    %297 = tpu.reciprocal %296 {approx = true} : vector<8x1xf32> -> vector<8x1xf32>
    %298 = vector.broadcast %297 : vector<8x1xf32> to vector<8x8xf32>
    %299 = arith.mulf %294, %298 : vector<8x8xf32>
    %300 = arith.truncf %299 : vector<8x8xf32> to vector<8x8xbf16>
    %301 = arith.truncf %283 : vector<8x8xf32> to vector<8x8xbf16>
    %cst_148 = arith.constant dense<0.000000e+00> : vector<8x8xf32>
    %302 = tpu.matmul %300, %301, %cst_148 {dimension_numbers = #tpu.dot_dimension_numbers<[1], [0], [0], [1], [0, 0, 1, 1], [], []>} : vector<8x8xbf16>, vector<8x8xbf16>, vector<8x8xf32> -> vector<8x8xf32>
    %303 = arith.truncf %302 : vector<8x8xf32> to vector<8x8xbf16>
    %c3_149 = arith.constant 3 : index
    %c0_150 = arith.constant 0 : index
    %c0_151 = arith.constant 0 : index
    %304 = vector.load %arg8[%c3_149, %c0_150, %c0_151] : memref<4x8x32xbf16, #tpu.memory_space<vmem>>, vector<1x8x32xbf16>
    %305 = vector.shape_cast %304 : vector<1x8x32xbf16> to vector<8x32xbf16>
    %cst_152 = arith.constant dense<0.000000e+00> : vector<8x32xf32>
    %306 = tpu.matmul %303, %305, %cst_152 {dimension_numbers = #tpu.dot_dimension_numbers<[1], [0], [0], [1], [0, 0, 1, 1], [], []>} : vector<8x8xbf16>, vector<8x32xbf16>, vector<8x32xf32> -> vector<8x32xf32>
    %307 = arith.addf %280, %306 : vector<8x32xf32>
    %308 = tpu.concatenate %196, %307 in 0 : vector<8x32xf32>, vector<8x32xf32> -> vector<16x32xf32>
    %c0_153 = arith.constant 0 : index
    %c0_154 = arith.constant 0 : index
    %309 = vector.load %arg9[%c0_153, %c0_154] : memref<1x32xf32, #tpu.memory_space<vmem>>, vector<1x32xf32>
    %310 = vector.broadcast %309 : vector<1x32xf32> to vector<16x32xf32>
    %311 = arith.addf %308, %310 : vector<16x32xf32>
    %312 = arith.truncf %311 : vector<16x32xf32> to vector<16x32xbf16>
    %c0_155 = arith.constant 0 : index
    %c0_156 = arith.constant 0 : index
    %313 = vector.load %arg10[%c0_155, %c0_156] : memref<32x64xbf16, #tpu.memory_space<vmem>>, vector<32x64xbf16>
    %cst_157 = arith.constant dense<0.000000e+00> : vector<16x64xf32>
    %314 = tpu.matmul %312, %313, %cst_157 {dimension_numbers = #tpu.dot_dimension_numbers<[1], [0], [0], [1], [0, 0, 1, 1], [], []>} : vector<16x32xbf16>, vector<32x64xbf16>, vector<16x64xf32> -> vector<16x64xf32>
    %c0_158 = arith.constant 0 : index
    %c0_159 = arith.constant 0 : index
    %315 = vector.load %arg11[%c0_158, %c0_159] : memref<1x64xf32, #tpu.memory_space<vmem>>, vector<1x64xf32>
    %316 = vector.broadcast %315 : vector<1x64xf32> to vector<16x64xf32>
    %317 = arith.addf %314, %316 : vector<16x64xf32>
    %cst_160 = arith.constant 0.000000e+00 : f32
    %318 = vector.broadcast %cst_160 : f32 to vector<16x64xf32>
    %319 = arith.maximumf %317, %318 : vector<16x64xf32>
    %320 = arith.truncf %319 : vector<16x64xf32> to vector<16x64xbf16>
    %c0_161 = arith.constant 0 : index
    %c0_162 = arith.constant 0 : index
    %321 = vector.load %arg12[%c0_161, %c0_162] : memref<64x32xbf16, #tpu.memory_space<vmem>>, vector<64x32xbf16>
    %cst_163 = arith.constant dense<0.000000e+00> : vector<16x32xf32>
    %322 = tpu.matmul %320, %321, %cst_163 {dimension_numbers = #tpu.dot_dimension_numbers<[1], [0], [0], [1], [0, 0, 1, 1], [], []>} : vector<16x64xbf16>, vector<64x32xbf16>, vector<16x32xf32> -> vector<16x32xf32>
    %c0_164 = arith.constant 0 : index
    %c0_165 = arith.constant 0 : index
    %323 = vector.load %arg13[%c0_164, %c0_165] : memref<1x32xf32, #tpu.memory_space<vmem>>, vector<1x32xf32>
    %324 = vector.broadcast %323 : vector<1x32xf32> to vector<16x32xf32>
    %325 = arith.addf %322, %324 : vector<16x32xf32>
    %326 = arith.addf %325, %311 : vector<16x32xf32>
    %cst_166 = arith.constant dense<0.000000e+00> : vector<16xf32>
    %327 = vector.multi_reduction <add>, %326, %cst_166 [1] : vector<16x32xf32> to vector<16xf32>
    %328 = vector.shape_cast %327 : vector<16xf32> to vector<16x1xf32>
    %cst_167 = arith.constant 3.200000e+01 : f32
    %329 = vector.broadcast %cst_167 : f32 to vector<16x1xf32>
    %330 = arith.divf %328, %329 : vector<16x1xf32>
    %331 = arith.mulf %326, %326 : vector<16x32xf32>
    %cst_168 = arith.constant dense<0.000000e+00> : vector<16xf32>
    %332 = vector.multi_reduction <add>, %331, %cst_168 [1] : vector<16x32xf32> to vector<16xf32>
    %333 = vector.shape_cast %332 : vector<16xf32> to vector<16x1xf32>
    %cst_169 = arith.constant 3.200000e+01 : f32
    %334 = vector.broadcast %cst_169 : f32 to vector<16x1xf32>
    %335 = arith.divf %333, %334 : vector<16x1xf32>
    %336 = arith.mulf %330, %330 : vector<16x1xf32>
    %337 = arith.subf %335, %336 : vector<16x1xf32>
    %338 = vector.broadcast %330 : vector<16x1xf32> to vector<16x32xf32>
    %339 = arith.subf %326, %338 : vector<16x32xf32>
    %cst_170 = arith.constant 9.99999974E-6 : f32
    %340 = vector.broadcast %cst_170 : f32 to vector<16x1xf32>
    %341 = arith.addf %337, %340 : vector<16x1xf32>
    %342 = math.rsqrt %341 : vector<16x1xf32>
    %343 = vector.broadcast %342 : vector<16x1xf32> to vector<16x32xf32>
    %344 = arith.mulf %339, %343 : vector<16x32xf32>
    %c0_171 = arith.constant 0 : index
    %c0_172 = arith.constant 0 : index
    %345 = vector.load %arg14[%c0_171, %c0_172] : memref<1x32xf32, #tpu.memory_space<vmem>>, vector<1x32xf32>
    %346 = vector.broadcast %345 : vector<1x32xf32> to vector<16x32xf32>
    %347 = arith.mulf %344, %346 : vector<16x32xf32>
    %c0_173 = arith.constant 0 : index
    %c0_174 = arith.constant 0 : index
    %348 = vector.load %arg15[%c0_173, %c0_174] : memref<1x32xf32, #tpu.memory_space<vmem>>, vector<1x32xf32>
    %349 = vector.broadcast %348 : vector<1x32xf32> to vector<16x32xf32>
    %350 = arith.addf %347, %349 : vector<16x32xf32>
    %c0_175 = arith.constant 0 : index
    %c0_176 = arith.constant 0 : index
    %351 = vector.load %arg16[%c0_175, %c0_176] : memref<16x32xf32, #tpu.memory_space<vmem>>, vector<16x32xf32>
    tpu.vector_store %arg16[%c0_175, %c0_176], %350 {strides = array<i32>} : memref<16x32xf32, #tpu.memory_space<vmem>>, vector<16x32xf32>,
    return
  }
}

</mosaic_0001>

<llo_original>
// kernel: encoder_layer.1
$region0: #{encoder_layer.1}
  #allocation0 [shape = 'u32[]', space=smem, size = 0x4, offset = 0x4, fixed_abs, tag = 'smem constant byte address 0x4 - core index']
  #allocation1 [shape = 'u32[144,128]{1,0:T(1,128)}', space=vmem, size = 0x12000, scoped, tag = 'internal scratch']
  %s0 = inlined_call_operand.vmem [shape: f32[16,32], index: 0, kind: input, shape index: {}]
  %s1 = inlined_call_operand.vmem [shape: f32[2,1,8], index: 1, kind: input, shape index: {}]
  %s2 = inlined_call_operand.vmem [shape: bf16[4,32,8], index: 2, kind: input, shape index: {}]
  %s3 = inlined_call_operand.vmem [shape: f32[4,1,8], index: 3, kind: input, shape index: {}]
  %s4 = inlined_call_operand.vmem [shape: bf16[4,32,8], index: 4, kind: input, shape index: {}]
  %s5 = inlined_call_operand.vmem [shape: f32[4,1,8], index: 5, kind: input, shape index: {}]
  %s6 = inlined_call_operand.vmem [shape: bf16[4,32,8], index: 6, kind: input, shape index: {}]
  %s7 = inlined_call_operand.vmem [shape: f32[4,1,8], index: 7, kind: input, shape index: {}]
  %s8 = inlined_call_operand.vmem [shape: bf16[4,8,32], index: 8, kind: input, shape index: {}]
  %s9 = inlined_call_operand.vmem [shape: f32[1,32], index: 9, kind: input, shape index: {}]
  %s10 = inlined_call_operand.vmem [shape: bf16[32,64], index: 10, kind: input, shape index: {}]
  %s11 = inlined_call_operand.vmem [shape: f32[1,64], index: 11, kind: input, shape index: {}]
  %s12 = inlined_call_operand.vmem [shape: bf16[64,32], index: 12, kind: input, shape index: {}]
  %s13 = inlined_call_operand.vmem [shape: f32[1,32], index: 13, kind: input, shape index: {}]
  %s14 = inlined_call_operand.vmem [shape: f32[1,32], index: 14, kind: input, shape index: {}]
  %s15 = inlined_call_operand.vmem [shape: f32[1,32], index: 15, kind: input, shape index: {}]
  %s16 = inlined_call_operand.hbm [shape: f32[16,32], index: 16, kind: output, shape index: {}]
  %s17 = sld [smem:[#allocation0]]
  $region74: #{encoder_layer.1} parent=0
    _
  %s19 = ssub.s32 1, %s17
  %s20 = scalar_select 0, %s19, %s17
  $region1: #{encoder_layer.1} parent=0
    #allocation2 [shape = 'u8[8192]{0}', space=vmem, size = 0x2000, scoped, tag = 'output window, operand 0, single buffered']
    #allocation3 [shape = 's32[1]{0}', space=sflag, size = 0x4, scoped, tag = 'scoped memory for encoder_layer.1']
    %21 = vsyncpa [#allocation3], 0
    // Predicated region
    $region2: #{encoder_layer.1} parent=1 // pred_check
      _
    $region3: #{encoder_layer.1} parent=1 // pred_check_branch
      %23 = sbr.rel (0) target = $region5
    $region4: #{encoder_layer.1} parent=1 // pred_region
      _
    $region5: #{encoder_layer.1} parent=1 // pred_fallthru
      _
    // Predicated region
    $region6: #{encoder_layer.1} parent=1 // pred_check
      _
    $region7: #{encoder_layer.1} parent=1 // pred_check_branch
      %25 = sbr.rel (0) target = $region9
    $region8: #{encoder_layer.1} parent=1 // pred_region
      _
    $region9: #{encoder_layer.1} parent=1 // pred_fallthru
      _
    // Predicated region
    $region10: #{encoder_layer.1} parent=1 // pred_check
      _
    $region11: #{encoder_layer.1} parent=1 // pred_check_branch
      %27 = sbr.rel (0) target = $region13
    $region12: #{encoder_layer.1} parent=1 // pred_region
      _
    $region13: #{encoder_layer.1} parent=1 // pred_fallthru
      _
    // Predicated region
    $region14: #{encoder_layer.1} parent=1 // pred_check
      _
    $region15: #{encoder_layer.1} parent=1 // pred_check_branch
      %29 = sbr.rel (0) target = $region17
    $region16: #{encoder_layer.1} parent=1 // pred_region
      _
    $region17: #{encoder_layer.1} parent=1 // pred_fallthru
      _
    // Predicated region
    $region18: #{encoder_layer.1} parent=1 // pred_check
      _
    $region19: #{encoder_layer.1} parent=1 // pred_check_branch
      %31 = sbr.rel (0) target = $region21
    $region20: #{encoder_layer.1} parent=1 // pred_region
      _
    $region21: #{encoder_layer.1} parent=1 // pred_fallthru
      _
    // Predicated region
    $region22: #{encoder_layer.1} parent=1 // pred_check
      _
    $region23: #{encoder_layer.1} parent=1 // pred_check_branch
      %33 = sbr.rel (0) target = $region25
    $region24: #{encoder_layer.1} parent=1 // pred_region
      _
    $region25: #{encoder_layer.1} parent=1 // pred_fallthru
      _
    // Predicated region
    $region26: #{encoder_layer.1} parent=1 // pred_check
      _
    $region27: #{encoder_layer.1} parent=1 // pred_check_branch
      %35 = sbr.rel (0) target = $region29
    $region28: #{encoder_layer.1} parent=1 // pred_region
      _
    $region29: #{encoder_layer.1} parent=1 // pred_fallthru
      _
    // Predicated region
    $region30: #{encoder_layer.1} parent=1 // pred_check
      _
    $region31: #{encoder_layer.1} parent=1 // pred_check_branch
      %37 = sbr.rel (0) target = $region33
    $region32: #{encoder_layer.1} parent=1 // pred_region
      _
    $region33: #{encoder_layer.1} parent=1 // pred_fallthru
      _
    // Predicated region
    $region34: #{encoder_layer.1} parent=1 // pred_check
      _
    $region35: #{encoder_layer.1} parent=1 // pred_check_branch
      %39 = sbr.rel (0) target = $region37
    $region36: #{encoder_layer.1} parent=1 // pred_region
      _
    $region37: #{encoder_layer.1} parent=1 // pred_fallthru
      _
    // Predicated region
    $region38: #{encoder_layer.1} parent=1 // pred_check
      _
    $region39: #{encoder_layer.1} parent=1 // pred_check_branch
      %41 = sbr.rel (0) target = $region41
    $region40: #{encoder_layer.1} parent=1 // pred_region
      _
    $region41: #{encoder_layer.1} parent=1 // pred_fallthru
      _
    // Predicated region
    $region42: #{encoder_layer.1} parent=1 // pred_check
      _
    $region43: #{encoder_layer.1} parent=1 // pred_check_branch
      %43 = sbr.rel (0) target = $region45
    $region44: #{encoder_layer.1} parent=1 // pred_region
      _
    $region45: #{encoder_layer.1} parent=1 // pred_fallthru
      _
    // Predicated region
    $region46: #{encoder_layer.1} parent=1 // pred_check
      _
    $region47: #{encoder_layer.1} parent=1 // pred_check_branch
      %45 = sbr.rel (0) target = $region49
    $region48: #{encoder_layer.1} parent=1 // pred_region
      _
    $region49: #{encoder_layer.1} parent=1 // pred_fallthru
      _
    // Predicated region
    $region50: #{encoder_layer.1} parent=1 // pred_check
      _
    $region51: #{encoder_layer.1} parent=1 // pred_check_branch
      %47 = sbr.rel (0) target = $region53
    $region52: #{encoder_layer.1} parent=1 // pred_region
      _
    $region53: #{encoder_layer.1} parent=1 // pred_fallthru
      _
    // Predicated region
    $region54: #{encoder_layer.1} parent=1 // pred_check
      _
    $region55: #{encoder_layer.1} parent=1 // pred_check_branch
      %49 = sbr.rel (0) target = $region57
    $region56: #{encoder_layer.1} parent=1 // pred_region
      _
    $region57: #{encoder_layer.1} parent=1 // pred_fallthru
      _
    // Predicated region
    $region58: #{encoder_layer.1} parent=1 // pred_check
      _
    $region59: #{encoder_layer.1} parent=1 // pred_check_branch
      %51 = sbr.rel (0) target = $region61
    $region60: #{encoder_layer.1} parent=1 // pred_region
      _
    $region61: #{encoder_layer.1} parent=1 // pred_fallthru
      _
    // Predicated region
    $region62: #{encoder_layer.1} parent=1 // pred_check
      _
    $region63: #{encoder_layer.1} parent=1 // pred_check_branch
      %53 = sbr.rel (0) target = $region65
    $region64: #{encoder_layer.1} parent=1 // pred_region
      _
    $region65: #{encoder_layer.1} parent=1 // pred_fallthru
      _
    %v55 = vld [vmem:[%s0] sm:$0xff]
    %v56 = vld [vmem:[%s0 + $0x8] sm:$0xff]
    %v57 = vpack.c.bf16 %v56, %v55
    %v58 = vld [vmem:[%s2] sm:$0xf]
    %v59 = vld [vmem:[%s2 + $0x4] sm:$0xf]
    %v60 = vld [vmem:[%s2 + $0x8] sm:$0xf]
    %v61 = vld [vmem:[%s2 + $0xc] sm:$0xf]
    %v62 = vld [vmem:[%s3] sm:$0x1]
    %v64 = vlaneseq
    %v65 = vshrl.u32 %v64, 7
    %v66 = vsub.s32 0, %v65
    %v67 = vrot.slane %v62, %v66
    %v73 = vunpack.c.l.b16 %v58
    %v74 = vunpack.c.l.b16 %v59
    %v75 = vunpack.c.l.b16 %v60
    %v76 = vunpack.c.l.b16 %v61
    %v77 = vpack.c.b16 %v74, %v73
    %v78 = vpack.c.b16 %v76, %v75
    %vm81 = vcmask 261120
    %v83 = vsel %vm81, %v57, 0
    %85 = vmatprep.subr.bf16.mxu0 0
    %86 = vmatpush1.bf16.msra.mxu0 %v77
    %87 = vmatprep.subr.bf16.mxu0 0
    %88 = vmatpush1.bf16.msra.mxu0 %v78
    %89 = vmatprep.subr.bf16.mxu0 0
    %90 = vmatpush1.bf16.msra.mxu0 0
    %91 = vmatprep.subr.bf16.mxu0 0
    %92 = vmatpush1.bf16.msra.mxu0 0
    %93 = vmatprep.subr.bf16.mxu0 0
    %94 = vmatpush1.bf16.msra.mxu0 0
    %95 = vmatprep.subr.bf16.mxu0 0
    %96 = vmatpush1.bf16.msra.mxu0 0
    %97 = vmatprep.subr.bf16.mxu0 0
    %98 = vmatpush1.bf16.msra.mxu0 0
    %99 = vmatprep.subr.bf16.mxu0 0
    %100 = vmatpush1.bf16.msra.mxu0 0
    %101 = vmatprep.subr.bf16.mxu0 0
    %102 = vmatpush1.bf16.msra.mxu0 0
    %103 = vmatprep.subr.bf16.mxu0 0
    %104 = vmatpush1.bf16.msra.mxu0 0
    %105 = vmatprep.subr.bf16.mxu0 0
    %106 = vmatpush1.bf16.msra.mxu0 0
    %107 = vmatprep.subr.bf16.mxu0 0
    %108 = vmatpush1.bf16.msra.mxu0 0
    %109 = vmatprep.subr.bf16.mxu0 0
    %110 = vmatpush1.bf16.msra.mxu0 0
    %111 = vmatprep.subr.bf16.mxu0 0
    %112 = vmatpush1.bf16.msra.mxu0 0
    %113 = vmatprep.subr.bf16.mxu0 0
    %114 = vmatpush1.bf16.msra.mxu0 0
    %115 = vmatprep.subr.bf16.mxu0 0
    %116 = vmatpush1.bf16.msra.mxu0 0
    %117 = vmatprep.mubr.bf16.mxu0 0
    %118 = vmatmul.mubr.bf16.gmra.mrb[0].mxu0 %v83
    %v119 = vpop.f32.mrb[0].mxu0
    %v120 = vadd.f32 %v67, %v119
    %v121 = vpop.f32.mrb[0].mxu0
    %v122 = vpop.f32.mrb[0].mxu0
    %v123 = vadd.f32 %v67, %v122
    %v124 = vpop.f32.mrb[0].mxu0
    %125 = vdwg.mxu0
    %v126 = vld [vmem:[%s4] sm:$0xf]
    %v127 = vld [vmem:[%s4 + $0x4] sm:$0xf]
    %v128 = vld [vmem:[%s4 + $0x8] sm:$0xf]
    %v129 = vld [vmem:[%s4 + $0xc] sm:$0xf]
    %v130 = vld [vmem:[%s5] sm:$0x1]
    %v132 = vlaneseq
    %v133 = vshrl.u32 %v132, 7
    %v134 = vsub.s32 0, %v133
    %v135 = vrot.slane %v130, %v134
    %v141 = vunpack.c.l.b16 %v126
    %v142 = vunpack.c.l.b16 %v127
    %v143 = vunpack.c.l.b16 %v128
    %v144 = vunpack.c.l.b16 %v129
    %v145 = vpack.c.b16 %v142, %v141
    %v146 = vpack.c.b16 %v144, %v143
    %149 = vmatprep.subr.bf16.mxu0 0
    %150 = vmatpush1.bf16.msra.mxu0 %v145
    %151 = vmatprep.subr.bf16.mxu0 0
    %152 = vmatpush1.bf16.msra.mxu0 %v146
    %153 = vmatprep.subr.bf16.mxu0 0
    %154 = vmatpush1.bf16.msra.mxu0 0
    %155 = vmatprep.subr.bf16.mxu0 0
    %156 = vmatpush1.bf16.msra.mxu0 0
    %157 = vmatprep.subr.bf16.mxu0 0
    %158 = vmatpush1.bf16.msra.mxu0 0
    %159 = vmatprep.subr.bf16.mxu0 0
    %160 = vmatpush1.bf16.msra.mxu0 0
    %161 = vmatprep.subr.bf16.mxu0 0
    %162 = vmatpush1.bf16.msra.mxu0 0
    %163 = vmatprep.subr.bf16.mxu0 0
    %164 = vmatpush1.bf16.msra.mxu0 0
    %165 = vmatprep.subr.bf16.mxu0 0
    %166 = vmatpush1.bf16.msra.mxu0 0
    %167 = vmatprep.subr.bf16.mxu0 0
    %168 = vmatpush1.bf16.msra.mxu0 0
    %169 = vmatprep.subr.bf16.mxu0 0
    %170 = vmatpush1.bf16.msra.mxu0 0
    %171 = vmatprep.subr.bf16.mxu0 0
    %172 = vmatpush1.bf16.msra.mxu0 0
    %173 = vmatprep.subr.bf16.mxu0 0
    %174 = vmatpush1.bf16.msra.mxu0 0
    %175 = vmatprep.subr.bf16.mxu0 0
    %176 = vmatpush1.bf16.msra.mxu0 0
    %177 = vmatprep.subr.bf16.mxu0 0
    %178 = vmatpush1.bf16.msra.mxu0 0
    %179 = vmatprep.subr.bf16.mxu0 0
    %180 = vmatpush1.bf16.msra.mxu0 0
    %181 = vmatprep.mubr.bf16.mxu0 0
    %182 = vmatmul.mubr.bf16.gmra.mrb[0].mxu0 %v83
    %v183 = vpop.f32.mrb[0].mxu0
    %v184 = vadd.f32 %v135, %v183
    %v185 = vpop.f32.mrb[0].mxu0
    %v186 = vpop.f32.mrb[0].mxu0
    %v187 = vadd.f32 %v135, %v186
    %v188 = vpop.f32.mrb[0].mxu0
    %189 = vdwg.mxu0
    %v190 = vld [vmem:[%s6] sm:$0xf]
    %v191 = vld [vmem:[%s6 + $0x4] sm:$0xf]
    %v192 = vld [vmem:[%s6 + $0x8] sm:$0xf]
    %v193 = vld [vmem:[%s6 + $0xc] sm:$0xf]
    %v194 = vld [vmem:[%s7] sm:$0x1]
    %v196 = vlaneseq
    %v197 = vshrl.u32 %v196, 7
    %v198 = vsub.s32 0, %v197
    %v199 = vrot.slane %v194, %v198
    %v205 = vunpack.c.l.b16 %v190
    %v206 = vunpack.c.l.b16 %v191
    %v207 = vunpack.c.l.b16 %v192
    %v208 = vunpack.c.l.b16 %v193
    %v209 = vpack.c.b16 %v206, %v205
    %v210 = vpack.c.b16 %v208, %v207
    %213 = vmatprep.subr.bf16.mxu0 0
    %214 = vmatpush1.bf16.msra.mxu0 %v209
    %215 = vmatprep.subr.bf16.mxu0 0
    %216 = vmatpush1.bf16.msra.mxu0 %v210
    %217 = vmatprep.subr.bf16.mxu0 0
    %218 = vmatpush1.bf16.msra.mxu0 0
    %219 = vmatprep.subr.bf16.mxu0 0
    %220 = vmatpush1.bf16.msra.mxu0 0
    %221 = vmatprep.subr.bf16.mxu0 0
    %222 = vmatpush1.bf16.msra.mxu0 0
    %223 = vmatprep.subr.bf16.mxu0 0
    %224 = vmatpush1.bf16.msra.mxu0 0
    %225 = vmatprep.subr.bf16.mxu0 0
    %226 = vmatpush1.bf16.msra.mxu0 0
    %227 = vmatprep.subr.bf16.mxu0 0
    %228 = vmatpush1.bf16.msra.mxu0 0
    %229 = vmatprep.subr.bf16.mxu0 0
    %230 = vmatpush1.bf16.msra.mxu0 0
    %231 = vmatprep.subr.bf16.mxu0 0
    %232 = vmatpush1.bf16.msra.mxu0 0
    %233 = vmatprep.subr.bf16.mxu0 0
    %234 = vmatpush1.bf16.msra.mxu0 0
    %235 = vmatprep.subr.bf16.mxu0 0
    %236 = vmatpush1.bf16.msra.mxu0 0
    %237 = vmatprep.subr.bf16.mxu0 0
    %238 = vmatpush1.bf16.msra.mxu0 0
    %239 = vmatprep.subr.bf16.mxu0 0
    %240 = vmatpush1.bf16.msra.mxu0 0
    %241 = vmatprep.subr.bf16.mxu0 0
    %242 = vmatpush1.bf16.msra.mxu0 0
    %243 = vmatprep.subr.bf16.mxu0 0
    %244 = vmatpush1.bf16.msra.mxu0 0
    %245 = vmatprep.mubr.bf16.mxu0 0
    %246 = vmatmul.mubr.bf16.gmra.mrb[0].mxu0 %v83
    %v247 = vpop.f32.mrb[0].mxu0
    %v248 = vadd.f32 %v199, %v247
    %v249 = vpop.f32.mrb[0].mxu0
    %v250 = vpop.f32.mrb[0].mxu0
    %v251 = vadd.f32 %v199, %v250
    %v252 = vpop.f32.mrb[0].mxu0
    %253 = vdwg.mxu0
    %s254 = scalar_lea.vmem %s2, 16
    %v255 = vld [vmem:[%s254] sm:$0xf]
    %v256 = vld [vmem:[%s254 + $0x4] sm:$0xf]
    %v257 = vld [vmem:[%s254 + $0x8] sm:$0xf]
    %v258 = vld [vmem:[%s254 + $0xc] sm:$0xf]
    %s259 = scalar_lea.vmem %s3, 1
    %v260 = vld [vmem:[%s259] sm:$0x1]
    %v262 = vlaneseq
    %v263 = vshrl.u32 %v262, 7
    %v264 = vsub.s32 0, %v263
    %v265 = vrot.slane %v260, %v264
    %v271 = vunpack.c.l.b16 %v255
    %v272 = vunpack.c.l.b16 %v256
    %v273 = vunpack.c.l.b16 %v257
    %v274 = vunpack.c.l.b16 %v258
    %v275 = vpack.c.b16 %v272, %v271
    %v276 = vpack.c.b16 %v274, %v273
    %279 = vmatprep.subr.bf16.mxu0 0
    %280 = vmatpush1.bf16.msra.mxu0 %v275
    %281 = vmatprep.subr.bf16.mxu0 0
    %282 = vmatpush1.bf16.msra.mxu0 %v276
    %283 = vmatprep.subr.bf16.mxu0 0
    %284 = vmatpush1.bf16.msra.mxu0 0
    %285 = vmatprep.subr.bf16.mxu0 0
    %286 = vmatpush1.bf16.msra.mxu0 0
    %287 = vmatprep.subr.bf16.mxu0 0
    %288 = vmatpush1.bf16.msra.mxu0 0
    %289 = vmatprep.subr.bf16.mxu0 0
    %290 = vmatpush1.bf16.msra.mxu0 0
    %291 = vmatprep.subr.bf16.mxu0 0
    %292 = vmatpush1.bf16.msra.mxu0 0
    %293 = vmatprep.subr.bf16.mxu0 0
    %294 = vmatpush1.bf16.msra.mxu0 0
    %295 = vmatprep.subr.bf16.mxu0 0
    %296 = vmatpush1.bf16.msra.mxu0 0
    %297 = vmatprep.subr.bf16.mxu0 0
    %298 = vmatpush1.bf16.msra.mxu0 0
    %299 = vmatprep.subr.bf16.mxu0 0
    %300 = vmatpush1.bf16.msra.mxu0 0
    %301 = vmatprep.subr.bf16.mxu0 0
    %302 = vmatpush1.bf16.msra.mxu0 0
    %303 = vmatprep.subr.bf16.mxu0 0
    %304 = vmatpush1.bf16.msra.mxu0 0
    %305 = vmatprep.subr.bf16.mxu0 0
    %306 = vmatpush1.bf16.msra.mxu0 0
    %307 = vmatprep.subr.bf16.mxu0 0
    %308 = vmatpush1.bf16.msra.mxu0 0
    %309 = vmatprep.subr.bf16.mxu0 0
    %310 = vmatpush1.bf16.msra.mxu0 0
    %311 = vmatprep.mubr.bf16.mxu0 0
    %312 = vmatmul.mubr.bf16.gmra.mrb[0].mxu0 %v83
    %v313 = vpop.f32.mrb[0].mxu0
    %v314 = vadd.f32 %v265, %v313
    %v315 = vpop.f32.mrb[0].mxu0
    %v316 = vpop.f32.mrb[0].mxu0
    %v317 = vadd.f32 %v265, %v316
    %v318 = vpop.f32.mrb[0].mxu0
    %319 = vdwg.mxu0
    %s320 = scalar_lea.vmem %s4, 16
    %v321 = vld [vmem:[%s320] sm:$0xf]
    %v322 = vld [vmem:[%s320 + $0x4] sm:$0xf]
    %v323 = vld [vmem:[%s320 + $0x8] sm:$0xf]
    %v324 = vld [vmem:[%s320 + $0xc] sm:$0xf]
    %s325 = scalar_lea.vmem %s5, 1
    %v326 = vld [vmem:[%s325] sm:$0x1]
    %v328 = vlaneseq
    %v329 = vshrl.u32 %v328, 7
    %v330 = vsub.s32 0, %v329
    %v331 = vrot.slane %v326, %v330
    %v337 = vunpack.c.l.b16 %v321
    %v338 = vunpack.c.l.b16 %v322
    %v339 = vunpack.c.l.b16 %v323
    %v340 = vunpack.c.l.b16 %v324
    %v341 = vpack.c.b16 %v338, %v337
    %v342 = vpack.c.b16 %v340, %v339
    %345 = vmatprep.subr.bf16.mxu0 0
    %346 = vmatpush1.bf16.msra.mxu0 %v341
    %347 = vmatprep.subr.bf16.mxu0 0
    %348 = vmatpush1.bf16.msra.mxu0 %v342
    %349 = vmatprep.subr.bf16.mxu0 0
    %350 = vmatpush1.bf16.msra.mxu0 0
    %351 = vmatprep.subr.bf16.mxu0 0
    %352 = vmatpush1.bf16.msra.mxu0 0
    %353 = vmatprep.subr.bf16.mxu0 0
    %354 = vmatpush1.bf16.msra.mxu0 0
    %355 = vmatprep.subr.bf16.mxu0 0
    %356 = vmatpush1.bf16.msra.mxu0 0
    %357 = vmatprep.subr.bf16.mxu0 0
    %358 = vmatpush1.bf16.msra.mxu0 0
    %359 = vmatprep.subr.bf16.mxu0 0
    %360 = vmatpush1.bf16.msra.mxu0 0
    %361 = vmatprep.subr.bf16.mxu0 0
    %362 = vmatpush1.bf16.msra.mxu0 0
    %363 = vmatprep.subr.bf16.mxu0 0
    %364 = vmatpush1.bf16.msra.mxu0 0
    %365 = vmatprep.subr.bf16.mxu0 0
    %366 = vmatpush1.bf16.msra.mxu0 0
    %367 = vmatprep.subr.bf16.mxu0 0
    %368 = vmatpush1.bf16.msra.mxu0 0
    %369 = vmatprep.subr.bf16.mxu0 0
    %370 = vmatpush1.bf16.msra.mxu0 0
    %371 = vmatprep.subr.bf16.mxu0 0
    %372 = vmatpush1.bf16.msra.mxu0 0
    %373 = vmatprep.subr.bf16.mxu0 0
    %374 = vmatpush1.bf16.msra.mxu0 0
    %375 = vmatprep.subr.bf16.mxu0 0
    %376 = vmatpush1.bf16.msra.mxu0 0
    %377 = vmatprep.mubr.bf16.mxu0 0
    %378 = vmatmul.mubr.bf16.gmra.mrb[0].mxu0 %v83
    %v379 = vpop.f32.mrb[0].mxu0
    %v380 = vadd.f32 %v331, %v379
    %v381 = vpop.f32.mrb[0].mxu0
    %v382 = vpop.f32.mrb[0].mxu0
    %v383 = vadd.f32 %v331, %v382
    %v384 = vpop.f32.mrb[0].mxu0
    %385 = vdwg.mxu0
    %s386 = scalar_lea.vmem %s6, 16
    %v387 = vld [vmem:[%s386] sm:$0xf]
    %v388 = vld [vmem:[%s386 + $0x4] sm:$0xf]
    %v389 = vld [vmem:[%s386 + $0x8] sm:$0xf]
    %v390 = vld [vmem:[%s386 + $0xc] sm:$0xf]
    %s391 = scalar_lea.vmem %s7, 1
    %v392 = vld [vmem:[%s391] sm:$0x1]
    %v394 = vlaneseq
    %v395 = vshrl.u32 %v394, 7
    %v396 = vsub.s32 0, %v395
    %v397 = vrot.slane %v392, %v396
    %v403 = vunpack.c.l.b16 %v387
    %v404 = vunpack.c.l.b16 %v388
    %v405 = vunpack.c.l.b16 %v389
    %v406 = vunpack.c.l.b16 %v390
    %v407 = vpack.c.b16 %v404, %v403
    %v408 = vpack.c.b16 %v406, %v405
    %411 = vmatprep.subr.bf16.mxu0 0
    %412 = vmatpush1.bf16.msra.mxu0 %v407
    %413 = vmatprep.subr.bf16.mxu0 0
    %414 = vmatpush1.bf16.msra.mxu0 %v408
    %415 = vmatprep.subr.bf16.mxu0 0
    %416 = vmatpush1.bf16.msra.mxu0 0
    %417 = vmatprep.subr.bf16.mxu0 0
    %418 = vmatpush1.bf16.msra.mxu0 0
    %419 = vmatprep.subr.bf16.mxu0 0
    %420 = vmatpush1.bf16.msra.mxu0 0
    %421 = vmatprep.subr.bf16.mxu0 0
    %422 = vmatpush1.bf16.msra.mxu0 0
    %423 = vmatprep.subr.bf16.mxu0 0
    %424 = vmatpush1.bf16.msra.mxu0 0
    %425 = vmatprep.subr.bf16.mxu0 0
    %426 = vmatpush1.bf16.msra.mxu0 0
    %427 = vmatprep.subr.bf16.mxu0 0
    %428 = vmatpush1.bf16.msra.mxu0 0
    %429 = vmatprep.subr.bf16.mxu0 0
    %430 = vmatpush1.bf16.msra.mxu0 0
    %431 = vmatprep.subr.bf16.mxu0 0
    %432 = vmatpush1.bf16.msra.mxu0 0
    %433 = vmatprep.subr.bf16.mxu0 0
    %434 = vmatpush1.bf16.msra.mxu0 0
    %435 = vmatprep.subr.bf16.mxu0 0
    %436 = vmatpush1.bf16.msra.mxu0 0
    %437 = vmatprep.subr.bf16.mxu0 0
    %438 = vmatpush1.bf16.msra.mxu0 0
    %439 = vmatprep.subr.bf16.mxu0 0
    %440 = vmatpush1.bf16.msra.mxu0 0
    %441 = vmatprep.subr.bf16.mxu0 0
    %442 = vmatpush1.bf16.msra.mxu0 0
    %443 = vmatprep.mubr.bf16.mxu0 0
    %444 = vmatmul.mubr.bf16.gmra.mrb[0].mxu0 %v83
    %v445 = vpop.f32.mrb[0].mxu0
    %v446 = vadd.f32 %v397, %v445
    %v447 = vpop.f32.mrb[0].mxu0
    %v448 = vpop.f32.mrb[0].mxu0
    %v449 = vadd.f32 %v397, %v448
    %v450 = vpop.f32.mrb[0].mxu0
    %451 = vdwg.mxu0
    %s452 = scalar_lea.vmem %s2, 32
    %v453 = vld [vmem:[%s452] sm:$0xf]
    %v454 = vld [vmem:[%s452 + $0x4] sm:$0xf]
    %v455 = vld [vmem:[%s452 + $0x8] sm:$0xf]
    %v456 = vld [vmem:[%s452 + $0xc] sm:$0xf]
    %s457 = scalar_lea.vmem %s3, 2
    %v458 = vld [vmem:[%s457] sm:$0x1]
    %v460 = vlaneseq
    %v461 = vshrl.u32 %v460, 7
    %v462 = vsub.s32 0, %v461
    %v463 = vrot.slane %v458, %v462
    %v469 = vunpack.c.l.b16 %v453
    %v470 = vunpack.c.l.b16 %v454
    %v471 = vunpack.c.l.b16 %v455
    %v472 = vunpack.c.l.b16 %v456
    %v473 = vpack.c.b16 %v470, %v469
    %v474 = vpack.c.b16 %v472, %v471
    %477 = vmatprep.subr.bf16.mxu0 0
    %478 = vmatpush1.bf16.msra.mxu0 %v473
    %479 = vmatprep.subr.bf16.mxu0 0
    %480 = vmatpush1.bf16.msra.mxu0 %v474
    %481 = vmatprep.subr.bf16.mxu0 0
    %482 = vmatpush1.bf16.msra.mxu0 0
    %483 = vmatprep.subr.bf16.mxu0 0
    %484 = vmatpush1.bf16.msra.mxu0 0
    %485 = vmatprep.subr.bf16.mxu0 0
    %486 = vmatpush1.bf16.msra.mxu0 0
    %487 = vmatprep.subr.bf16.mxu0 0
    %488 = vmatpush1.bf16.msra.mxu0 0
    %489 = vmatprep.subr.bf16.mxu0 0
    %490 = vmatpush1.bf16.msra.mxu0 0
    %491 = vmatprep.subr.bf16.mxu0 0
    %492 = vmatpush1.bf16.msra.mxu0 0
    %493 = vmatprep.subr.bf16.mxu0 0
    %494 = vmatpush1.bf16.msra.mxu0 0
    %495 = vmatprep.subr.bf16.mxu0 0
    %496 = vmatpush1.bf16.msra.mxu0 0
    %497 = vmatprep.subr.bf16.mxu0 0
    %498 = vmatpush1.bf16.msra.mxu0 0
    %499 = vmatprep.subr.bf16.mxu0 0
    %500 = vmatpush1.bf16.msra.mxu0 0
    %501 = vmatprep.subr.bf16.mxu0 0
    %502 = vmatpush1.bf16.msra.mxu0 0
    %503 = vmatprep.subr.bf16.mxu0 0
    %504 = vmatpush1.bf16.msra.mxu0 0
    %505 = vmatprep.subr.bf16.mxu0 0
    %506 = vmatpush1.bf16.msra.mxu0 0
    %507 = vmatprep.subr.bf16.mxu0 0
    %508 = vmatpush1.bf16.msra.mxu0 0
    %509 = vmatprep.mubr.bf16.mxu0 0
    %510 = vmatmul.mubr.bf16.gmra.mrb[0].mxu0 %v83
    %v511 = vpop.f32.mrb[0].mxu0
    %v512 = vadd.f32 %v463, %v511
    %v513 = vpop.f32.mrb[0].mxu0
    %v514 = vpop.f32.mrb[0].mxu0
    %v515 = vadd.f32 %v463, %v514
    %v516 = vpop.f32.mrb[0].mxu0
    %517 = vdwg.mxu0
    %s518 = scalar_lea.vmem %s4, 32
    %v519 = vld [vmem:[%s518] sm:$0xf]
    %v520 = vld [vmem:[%s518 + $0x4] sm:$0xf]
    %v521 = vld [vmem:[%s518 + $0x8] sm:$0xf]
    %v522 = vld [vmem:[%s518 + $0xc] sm:$0xf]
    %s523 = scalar_lea.vmem %s5, 2
    %v524 = vld [vmem:[%s523] sm:$0x1]
    %v526 = vlaneseq
    %v527 = vshrl.u32 %v526, 7
    %v528 = vsub.s32 0, %v527
    %v529 = vrot.slane %v524, %v528
    %v535 = vunpack.c.l.b16 %v519
    %v536 = vunpack.c.l.b16 %v520
    %v537 = vunpack.c.l.b16 %v521
    %v538 = vunpack.c.l.b16 %v522
    %v539 = vpack.c.b16 %v536, %v535
    %v540 = vpack.c.b16 %v538, %v537
    %543 = vmatprep.subr.bf16.mxu0 0
    %544 = vmatpush1.bf16.msra.mxu0 %v539
    %545 = vmatprep.subr.bf16.mxu0 0
    %546 = vmatpush1.bf16.msra.mxu0 %v540
    %547 = vmatprep.subr.bf16.mxu0 0
    %548 = vmatpush1.bf16.msra.mxu0 0
    %549 = vmatprep.subr.bf16.mxu0 0
    %550 = vmatpush1.bf16.msra.mxu0 0
    %551 = vmatprep.subr.bf16.mxu0 0
    %552 = vmatpush1.bf16.msra.mxu0 0
    %553 = vmatprep.subr.bf16.mxu0 0
    %554 = vmatpush1.bf16.msra.mxu0 0
    %555 = vmatprep.subr.bf16.mxu0 0
    %556 = vmatpush1.bf16.msra.mxu0 0
    %557 = vmatprep.subr.bf16.mxu0 0
    %558 = vmatpush1.bf16.msra.mxu0 0
    %559 = vmatprep.subr.bf16.mxu0 0
    %560 = vmatpush1.bf16.msra.mxu0 0
    %561 = vmatprep.subr.bf16.mxu0 0
    %562 = vmatpush1.bf16.msra.mxu0 0
    %563 = vmatprep.subr.bf16.mxu0 0
    %564 = vmatpush1.bf16.msra.mxu0 0
    %565 = vmatprep.subr.bf16.mxu0 0
    %566 = vmatpush1.bf16.msra.mxu0 0
    %567 = vmatprep.subr.bf16.mxu0 0
    %568 = vmatpush1.bf16.msra.mxu0 0
    %569 = vmatprep.subr.bf16.mxu0 0
    %570 = vmatpush1.bf16.msra.mxu0 0
    %571 = vmatprep.subr.bf16.mxu0 0
    %572 = vmatpush1.bf16.msra.mxu0 0
    %573 = vmatprep.subr.bf16.mxu0 0
    %574 = vmatpush1.bf16.msra.mxu0 0
    %575 = vmatprep.mubr.bf16.mxu0 0
    %576 = vmatmul.mubr.bf16.gmra.mrb[0].mxu0 %v83
    %v577 = vpop.f32.mrb[0].mxu0
    %v578 = vadd.f32 %v529, %v577
    %v579 = vpop.f32.mrb[0].mxu0
    %v580 = vpop.f32.mrb[0].mxu0
    %v581 = vadd.f32 %v529, %v580
    %v582 = vpop.f32.mrb[0].mxu0
    %583 = vdwg.mxu0
    %s584 = scalar_lea.vmem %s6, 32
    %v585 = vld [vmem:[%s584] sm:$0xf]
    %v586 = vld [vmem:[%s584 + $0x4] sm:$0xf]
    %v587 = vld [vmem:[%s584 + $0x8] sm:$0xf]
    %v588 = vld [vmem:[%s584 + $0xc] sm:$0xf]
    %s589 = scalar_lea.vmem %s7, 2
    %v590 = vld [vmem:[%s589] sm:$0x1]
    %v592 = vlaneseq
    %v593 = vshrl.u32 %v592, 7
    %v594 = vsub.s32 0, %v593
    %v595 = vrot.slane %v590, %v594
    %v601 = vunpack.c.l.b16 %v585
    %v602 = vunpack.c.l.b16 %v586
    %v603 = vunpack.c.l.b16 %v587
    %v604 = vunpack.c.l.b16 %v588
    %v605 = vpack.c.b16 %v602, %v601
    %v606 = vpack.c.b16 %v604, %v603
    %609 = vmatprep.subr.bf16.mxu0 0
    %610 = vmatpush1.bf16.msra.mxu0 %v605
    %611 = vmatprep.subr.bf16.mxu0 0
    %612 = vmatpush1.bf16.msra.mxu0 %v606
    %613 = vmatprep.subr.bf16.mxu0 0
    %614 = vmatpush1.bf16.msra.mxu0 0
    %615 = vmatprep.subr.bf16.mxu0 0
    %616 = vmatpush1.bf16.msra.mxu0 0
    %617 = vmatprep.subr.bf16.mxu0 0
    %618 = vmatpush1.bf16.msra.mxu0 0
    %619 = vmatprep.subr.bf16.mxu0 0
    %620 = vmatpush1.bf16.msra.mxu0 0
    %621 = vmatprep.subr.bf16.mxu0 0
    %622 = vmatpush1.bf16.msra.mxu0 0
    %623 = vmatprep.subr.bf16.mxu0 0
    %624 = vmatpush1.bf16.msra.mxu0 0
    %625 = vmatprep.subr.bf16.mxu0 0
    %626 = vmatpush1.bf16.msra.mxu0 0
    %627 = vmatprep.subr.bf16.mxu0 0
    %628 = vmatpush1.bf16.msra.mxu0 0
    %629 = vmatprep.subr.bf16.mxu0 0
    %630 = vmatpush1.bf16.msra.mxu0 0
    %631 = vmatprep.subr.bf16.mxu0 0
    %632 = vmatpush1.bf16.msra.mxu0 0
    %633 = vmatprep.subr.bf16.mxu0 0
    %634 = vmatpush1.bf16.msra.mxu0 0
    %635 = vmatprep.subr.bf16.mxu0 0
    %636 = vmatpush1.bf16.msra.mxu0 0
    %637 = vmatprep.subr.bf16.mxu0 0
    %638 = vmatpush1.bf16.msra.mxu0 0
    %639 = vmatprep.subr.bf16.mxu0 0
    %640 = vmatpush1.bf16.msra.mxu0 0
    %641 = vmatprep.mubr.bf16.mxu0 0
    %642 = vmatmul.mubr.bf16.gmra.mrb[0].mxu0 %v83
    %v643 = vpop.f32.mrb[0].mxu0
    %v644 = vadd.f32 %v595, %v643
    %v645 = vpop.f32.mrb[0].mxu0
    %v646 = vpop.f32.mrb[0].mxu0
    %v647 = vadd.f32 %v595, %v646
    %v648 = vpop.f32.mrb[0].mxu0
    %649 = vdwg.mxu0
    %s650 = scalar_lea.vmem %s2, 48
    %v651 = vld [vmem:[%s650] sm:$0xf]
    %v652 = vld [vmem:[%s650 + $0x4] sm:$0xf]
    %v653 = vld [vmem:[%s650 + $0x8] sm:$0xf]
    %v654 = vld [vmem:[%s650 + $0xc] sm:$0xf]
    %s655 = scalar_lea.vmem %s3, 3
    %v656 = vld [vmem:[%s655] sm:$0x1]
    %v658 = vlaneseq
    %v659 = vshrl.u32 %v658, 7
    %v660 = vsub.s32 0, %v659
    %v661 = vrot.slane %v656, %v660
    %v667 = vunpack.c.l.b16 %v651
    %v668 = vunpack.c.l.b16 %v652
    %v669 = vunpack.c.l.b16 %v653
    %v670 = vunpack.c.l.b16 %v654
    %v671 = vpack.c.b16 %v668, %v667
    %v672 = vpack.c.b16 %v670, %v669
    %675 = vmatprep.subr.bf16.mxu0 0
    %676 = vmatpush1.bf16.msra.mxu0 %v671
    %677 = vmatprep.subr.bf16.mxu0 0
    %678 = vmatpush1.bf16.msra.mxu0 %v672
    %679 = vmatprep.subr.bf16.mxu0 0
    %680 = vmatpush1.bf16.msra.mxu0 0
    %681 = vmatprep.subr.bf16.mxu0 0
    %682 = vmatpush1.bf16.msra.mxu0 0
    %683 = vmatprep.subr.bf16.mxu0 0
    %684 = vmatpush1.bf16.msra.mxu0 0
    %685 = vmatprep.subr.bf16.mxu0 0
    %686 = vmatpush1.bf16.msra.mxu0 0
    %687 = vmatprep.subr.bf16.mxu0 0
    %688 = vmatpush1.bf16.msra.mxu0 0
    %689 = vmatprep.subr.bf16.mxu0 0
    %690 = vmatpush1.bf16.msra.mxu0 0
    %691 = vmatprep.subr.bf16.mxu0 0
    %692 = vmatpush1.bf16.msra.mxu0 0
    %693 = vmatprep.subr.bf16.mxu0 0
    %694 = vmatpush1.bf16.msra.mxu0 0
    %695 = vmatprep.subr.bf16.mxu0 0
    %696 = vmatpush1.bf16.msra.mxu0 0
    %697 = vmatprep.subr.bf16.mxu0 0
    %698 = vmatpush1.bf16.msra.mxu0 0
    %699 = vmatprep.subr.bf16.mxu0 0
    %700 = vmatpush1.bf16.msra.mxu0 0
    %701 = vmatprep.subr.bf16.mxu0 0
    %702 = vmatpush1.bf16.msra.mxu0 0
    %703 = vmatprep.subr.bf16.mxu0 0
    %704 = vmatpush1.bf16.msra.mxu0 0
    %705 = vmatprep.subr.bf16.mxu0 0
    %706 = vmatpush1.bf16.msra.mxu0 0
    %707 = vmatprep.mubr.bf16.mxu0 0
    %708 = vmatmul.mubr.bf16.gmra.mrb[0].mxu0 %v83
    %v709 = vpop.f32.mrb[0].mxu0
    %v710 = vadd.f32 %v661, %v709
    %v711 = vpop.f32.mrb[0].mxu0
    %v712 = vpop.f32.mrb[0].mxu0
    %v713 = vadd.f32 %v661, %v712
    %v714 = vpop.f32.mrb[0].mxu0
    %715 = vdwg.mxu0
    %s716 = scalar_lea.vmem %s4, 48
    %v717 = vld [vmem:[%s716] sm:$0xf]
    %v718 = vld [vmem:[%s716 + $0x4] sm:$0xf]
    %v719 = vld [vmem:[%s716 + $0x8] sm:$0xf]
    %v720 = vld [vmem:[%s716 + $0xc] sm:$0xf]
    %s721 = scalar_lea.vmem %s5, 3
    %v722 = vld [vmem:[%s721] sm:$0x1]
    %v724 = vlaneseq
    %v725 = vshrl.u32 %v724, 7
    %v726 = vsub.s32 0, %v725
    %v727 = vrot.slane %v722, %v726
    %v733 = vunpack.c.l.b16 %v717
    %v734 = vunpack.c.l.b16 %v718
    %v735 = vunpack.c.l.b16 %v719
    %v736 = vunpack.c.l.b16 %v720
    %v737 = vpack.c.b16 %v734, %v733
    %v738 = vpack.c.b16 %v736, %v735
    %741 = vmatprep.subr.bf16.mxu0 0
    %742 = vmatpush1.bf16.msra.mxu0 %v737
    %743 = vmatprep.subr.bf16.mxu0 0
    %744 = vmatpush1.bf16.msra.mxu0 %v738
    %745 = vmatprep.subr.bf16.mxu0 0
    %746 = vmatpush1.bf16.msra.mxu0 0
    %747 = vmatprep.subr.bf16.mxu0 0
    %748 = vmatpush1.bf16.msra.mxu0 0
    %749 = vmatprep.subr.bf16.mxu0 0
    %750 = vmatpush1.bf16.msra.mxu0 0
    %751 = vmatprep.subr.bf16.mxu0 0
    %752 = vmatpush1.bf16.msra.mxu0 0
    %753 = vmatprep.subr.bf16.mxu0 0
    %754 = vmatpush1.bf16.msra.mxu0 0
    %755 = vmatprep.subr.bf16.mxu0 0
    %756 = vmatpush1.bf16.msra.mxu0 0
    %757 = vmatprep.subr.bf16.mxu0 0
    %758 = vmatpush1.bf16.msra.mxu0 0
    %759 = vmatprep.subr.bf16.mxu0 0
    %760 = vmatpush1.bf16.msra.mxu0 0
    %761 = vmatprep.subr.bf16.mxu0 0
    %762 = vmatpush1.bf16.msra.mxu0 0
    %763 = vmatprep.subr.bf16.mxu0 0
    %764 = vmatpush1.bf16.msra.mxu0 0
    %765 = vmatprep.subr.bf16.mxu0 0
    %766 = vmatpush1.bf16.msra.mxu0 0
    %767 = vmatprep.subr.bf16.mxu0 0
    %768 = vmatpush1.bf16.msra.mxu0 0
    %769 = vmatprep.subr.bf16.mxu0 0
    %770 = vmatpush1.bf16.msra.mxu0 0
    %771 = vmatprep.subr.bf16.mxu0 0
    %772 = vmatpush1.bf16.msra.mxu0 0
    %773 = vmatprep.mubr.bf16.mxu0 0
    %774 = vmatmul.mubr.bf16.gmra.mrb[0].mxu0 %v83
    %v775 = vpop.f32.mrb[0].mxu0
    %v776 = vadd.f32 %v727, %v775
    %v777 = vpop.f32.mrb[0].mxu0
    %v778 = vpop.f32.mrb[0].mxu0
    %v779 = vadd.f32 %v727, %v778
    %v780 = vpop.f32.mrb[0].mxu0
    %781 = vdwg.mxu0
    %s782 = scalar_lea.vmem %s6, 48
    %v783 = vld [vmem:[%s782] sm:$0xf]
    %v784 = vld [vmem:[%s782 + $0x4] sm:$0xf]
    %v785 = vld [vmem:[%s782 + $0x8] sm:$0xf]
    %v786 = vld [vmem:[%s782 + $0xc] sm:$0xf]
    %s787 = scalar_lea.vmem %s7, 3
    %v788 = vld [vmem:[%s787] sm:$0x1]
    %v790 = vlaneseq
    %v791 = vshrl.u32 %v790, 7
    %v792 = vsub.s32 0, %v791
    %v793 = vrot.slane %v788, %v792
    %v799 = vunpack.c.l.b16 %v783
    %v800 = vunpack.c.l.b16 %v784
    %v801 = vunpack.c.l.b16 %v785
    %v802 = vunpack.c.l.b16 %v786
    %v803 = vpack.c.b16 %v800, %v799
    %v804 = vpack.c.b16 %v802, %v801
    %807 = vmatprep.subr.bf16.mxu0 0
    %808 = vmatpush1.bf16.msra.mxu0 %v803
    %809 = vmatprep.subr.bf16.mxu0 0
    %810 = vmatpush1.bf16.msra.mxu0 %v804
    %811 = vmatprep.subr.bf16.mxu0 0
    %812 = vmatpush1.bf16.msra.mxu0 0
    %813 = vmatprep.subr.bf16.mxu0 0
    %814 = vmatpush1.bf16.msra.mxu0 0
    %815 = vmatprep.subr.bf16.mxu0 0
    %816 = vmatpush1.bf16.msra.mxu0 0
    %817 = vmatprep.subr.bf16.mxu0 0
    %818 = vmatpush1.bf16.msra.mxu0 0
    %819 = vmatprep.subr.bf16.mxu0 0
    %820 = vmatpush1.bf16.msra.mxu0 0
    %821 = vmatprep.subr.bf16.mxu0 0
    %822 = vmatpush1.bf16.msra.mxu0 0
    %823 = vmatprep.subr.bf16.mxu0 0
    %824 = vmatpush1.bf16.msra.mxu0 0
    %825 = vmatprep.subr.bf16.mxu0 0
    %826 = vmatpush1.bf16.msra.mxu0 0
    %827 = vmatprep.subr.bf16.mxu0 0
    %828 = vmatpush1.bf16.msra.mxu0 0
    %829 = vmatprep.subr.bf16.mxu0 0
    %830 = vmatpush1.bf16.msra.mxu0 0
    %831 = vmatprep.subr.bf16.mxu0 0
    %832 = vmatpush1.bf16.msra.mxu0 0
    %833 = vmatprep.subr.bf16.mxu0 0
    %834 = vmatpush1.bf16.msra.mxu0 0
    %835 = vmatprep.subr.bf16.mxu0 0
    %836 = vmatpush1.bf16.msra.mxu0 0
    %837 = vmatprep.subr.bf16.mxu0 0
    %838 = vmatpush1.bf16.msra.mxu0 0
    %839 = vmatprep.mubr.bf16.mxu0 0
    %840 = vmatmul.mubr.bf16.gmra.mrb[0].mxu0 %v83
    %v841 = vpop.f32.mrb[0].mxu0
    %v842 = vadd.f32 %v793, %v841
    %v843 = vpop.f32.mrb[0].mxu0
    %v844 = vpop.f32.mrb[0].mxu0
    %v845 = vadd.f32 %v793, %v844
    %v846 = vpop.f32.mrb[0].mxu0
    %847 = vdwg.mxu0
    %v848 = vld [vmem:[%s1] sm:$0x1]
    %v849 = vpack.c.bf16 %v120, %v120
    %850 = vxpose.xlu0.b32.start [1/16] %v184, 128
    %851 = vxpose.xlu0.b32.cont [2/16] 0.0, 128
    %852 = vxpose.xlu0.b32.cont [3/16] 0.0, 128
    %853 = vxpose.xlu0.b32.cont [4/16] 0.0, 128
    %854 = vxpose.xlu0.b32.cont [5/16] 0.0, 128
    %855 = vxpose.xlu0.b32.cont [6/16] 0.0, 128
    %856 = vxpose.xlu0.b32.cont [7/16] 0.0, 128
    %857 = vxpose.xlu0.b32.cont [8/16] 0.0, 128
    %858 = vxpose.xlu0.b32.cont [9/16] 0.0, 128
    %859 = vxpose.xlu0.b32.cont [10/16] 0.0, 128
    %860 = vxpose.xlu0.b32.cont [11/16] 0.0, 128
    %861 = vxpose.xlu0.b32.cont [12/16] 0.0, 128
    %862 = vxpose.xlu0.b32.cont [13/16] 0.0, 128
    %863 = vxpose.xlu0.b32.cont [14/16] 0.0, 128
    %864 = vxpose.xlu0.b32.cont [15/16] 0.0, 128
    %865 = vxpose.xlu0.b32.end [16/16] 0.0, 128
    %v866 = vpop.trf.xlu0
    %v867 = vpop.trf.xlu0
    %v868 = vpop.trf.xlu0
    %v869 = vpop.trf.xlu0
    %v870 = vpop.trf.xlu0
    %v871 = vpop.trf.xlu0
    %v872 = vpop.trf.xlu0
    %v873 = vpop.trf.xlu0
    %v874 = vpop.trf.xlu0
    %v875 = vpop.trf.xlu0
    %v876 = vpop.trf.xlu0
    %v877 = vpop.trf.xlu0
    %v878 = vpop.trf.xlu0
    %v879 = vpop.trf.xlu0
    %v880 = vpop.trf.xlu0
    %v881 = vpop.trf.xlu0
    %v882 = vpack.c.bf16 %v866, %v866
    %v884 = vlaneseq
    %v885 = vshrl.u32 %v884, 7
    %v886 = vsub.s32 0, %v885
    %v887 = vrot.slane %v848, %v886
    %vm889 = vcmask 64512
    %v891 = vsel %vm889, %v849, 0
    %vm893 = vcmask 1043456
    %v895 = vsel %vm893, %v882, 0
    %897 = vmatprep.subr.bf16.mxu0 0
    %898 = vmatpush1.bf16.msra.mxu0 %v895
    %899 = vmatprep.subr.bf16.mxu0 0
    %900 = vmatpush1.bf16.msra.mxu0 0
    %901 = vmatprep.subr.bf16.mxu0 0
    %902 = vmatpush1.bf16.msra.mxu0 0
    %903 = vmatprep.subr.bf16.mxu0 0
    %904 = vmatpush1.bf16.msra.mxu0 0
    %905 = vmatprep.subr.bf16.mxu0 0
    %906 = vmatpush1.bf16.msra.mxu0 0
    %907 = vmatprep.subr.bf16.mxu0 0
    %908 = vmatpush1.bf16.msra.mxu0 0
    %909 = vmatprep.subr.bf16.mxu0 0
    %910 = vmatpush1.bf16.msra.mxu0 0
    %911 = vmatprep.subr.bf16.mxu0 0
    %912 = vmatpush1.bf16.msra.mxu0 0
    %913 = vmatprep.subr.bf16.mxu0 0
    %914 = vmatpush1.bf16.msra.mxu0 0
    %915 = vmatprep.subr.bf16.mxu0 0
    %916 = vmatpush1.bf16.msra.mxu0 0
    %917 = vmatprep.subr.bf16.mxu0 0
    %918 = vmatpush1.bf16.msra.mxu0 0
    %919 = vmatprep.subr.bf16.mxu0 0
    %920 = vmatpush1.bf16.msra.mxu0 0
    %921 = vmatprep.subr.bf16.mxu0 0
    %922 = vmatpush1.bf16.msra.mxu0 0
    %923 = vmatprep.subr.bf16.mxu0 0
    %924 = vmatpush1.bf16.msra.mxu0 0
    %925 = vmatprep.subr.bf16.mxu0 0
    %926 = vmatpush1.bf16.msra.mxu0 0
    %927 = vmatprep.subr.bf16.mxu0 0
    %928 = vmatpush1.bf16.msra.mxu0 0
    %929 = vmatprep.mubr.bf16.mxu0 0
    %930 = vmatmul.mubr.bf16.gmra.mrb[0].mxu0 %v891
    %v931 = vpop.f32.mrb[0].mxu0
    %v932 = vadd.f32 %v887, %v931
    %v933 = vpop.f32.mrb[0].mxu0
    %v934 = vpop.f32.mrb[0].mxu0
    %v935 = vpop.f32.mrb[0].mxu0
    %936 = vdwg.mxu0
    %v937 = vsel %vm889, %v932, -inf
    %938 = vmax.xlane.f32.xlu0 %v937
    %v939 = vpop.xlane.xlu0 %938
    %v940 = vsub.f32 %v932, %v939
    %v941 = vmul.f32 %v940, 1.442695
    %v942 = vpow.pop %v941
    %v943 = vsel %vm889, %v942, 0.0
    %944 = vadd.xlane.f32.xlu0 %v943
    %v945 = vpop.xlane.xlu0 %944
    %v946 = vrcp.pop %v945
    %v947 = vmul.f32 %v942, %v946
    %v948 = vpack.c.bf16 %v947, %v947
    %v949 = vpack.c.bf16 %v248, %v248
    %v951 = vsel %vm889, %v948, 0
    %v954 = vsel %vm893, %v949, 0
    %956 = vmatprep.subr.bf16.mxu0 0
    %957 = vmatpush1.bf16.msra.mxu0 %v954
    %958 = vmatprep.subr.bf16.mxu0 0
    %959 = vmatpush1.bf16.msra.mxu0 0
    %960 = vmatprep.subr.bf16.mxu0 0
    %961 = vmatpush1.bf16.msra.mxu0 0
    %962 = vmatprep.subr.bf16.mxu0 0
    %963 = vmatpush1.bf16.msra.mxu0 0
    %964 = vmatprep.subr.bf16.mxu0 0
    %965 = vmatpush1.bf16.msra.mxu0 0
    %966 = vmatprep.subr.bf16.mxu0 0
    %967 = vmatpush1.bf16.msra.mxu0 0
    %968 = vmatprep.subr.bf16.mxu0 0
    %969 = vmatpush1.bf16.msra.mxu0 0
    %970 = vmatprep.subr.bf16.mxu0 0
    %971 = vmatpush1.bf16.msra.mxu0 0
    %972 = vmatprep.subr.bf16.mxu0 0
    %973 = vmatpush1.bf16.msra.mxu0 0
    %974 = vmatprep.subr.bf16.mxu0 0
    %975 = vmatpush1.bf16.msra.mxu0 0
    %976 = vmatprep.subr.bf16.mxu0 0
    %977 = vmatpush1.bf16.msra.mxu0 0
    %978 = vmatprep.subr.bf16.mxu0 0
    %979 = vmatpush1.bf16.msra.mxu0 0
    %980 = vmatprep.subr.bf16.mxu0 0
    %981 = vmatpush1.bf16.msra.mxu0 0
    %982 = vmatprep.subr.bf16.mxu0 0
    %983 = vmatpush1.bf16.msra.mxu0 0
    %984 = vmatprep.subr.bf16.mxu0 0
    %985 = vmatpush1.bf16.msra.mxu0 0
    %986 = vmatprep.subr.bf16.mxu0 0
    %987 = vmatpush1.bf16.msra.mxu0 0
    %988 = vmatprep.mubr.bf16.mxu0 0
    %989 = vmatmul.mubr.bf16.gmra.mrb[0].mxu0 %v951
    %v990 = vpop.f32.mrb[0].mxu0
    %v991 = vadd.f32 0.0, %v990
    %v992 = vpop.f32.mrb[0].mxu0
    %v993 = vpop.f32.mrb[0].mxu0
    %v994 = vpop.f32.mrb[0].mxu0
    %995 = vdwg.mxu0
    %v996 = vpack.c.bf16 %v991, %v991
    %v997 = vld [vmem:[%s8] sm:$0xf]
    %v998 = vpack.c.bf16 %v314, %v314
    %999 = vxpose.xlu0.b32.start [1/16] %v380, 128
    %1000 = vxpose.xlu0.b32.cont [2/16] 0.0, 128
    %1001 = vxpose.xlu0.b32.cont [3/16] 0.0, 128
    %1002 = vxpose.xlu0.b32.cont [4/16] 0.0, 128
    %1003 = vxpose.xlu0.b32.cont [5/16] 0.0, 128
    %1004 = vxpose.xlu0.b32.cont [6/16] 0.0, 128
    %1005 = vxpose.xlu0.b32.cont [7/16] 0.0, 128
    %1006 = vxpose.xlu0.b32.cont [8/16] 0.0, 128
    %1007 = vxpose.xlu0.b32.cont [9/16] 0.0, 128
    %1008 = vxpose.xlu0.b32.cont [10/16] 0.0, 128
    %1009 = vxpose.xlu0.b32.cont [11/16] 0.0, 128
    %1010 = vxpose.xlu0.b32.cont [12/16] 0.0, 128
    %1011 = vxpose.xlu0.b32.cont [13/16] 0.0, 128
    %1012 = vxpose.xlu0.b32.cont [14/16] 0.0, 128
    %1013 = vxpose.xlu0.b32.cont [15/16] 0.0, 128
    %1014 = vxpose.xlu0.b32.end [16/16] 0.0, 128
    %v1015 = vpop.trf.xlu0
    %v1016 = vpop.trf.xlu0
    %v1017 = vpop.trf.xlu0
    %v1018 = vpop.trf.xlu0
    %v1019 = vpop.trf.xlu0
    %v1020 = vpop.trf.xlu0
    %v1021 = vpop.trf.xlu0
    %v1022 = vpop.trf.xlu0
    %v1023 = vpop.trf.xlu0
    %v1024 = vpop.trf.xlu0
    %v1025 = vpop.trf.xlu0
    %v1026 = vpop.trf.xlu0
    %v1027 = vpop.trf.xlu0
    %v1028 = vpop.trf.xlu0
    %v1029 = vpop.trf.xlu0
    %v1030 = vpop.trf.xlu0
    %v1031 = vpack.c.bf16 %v1015, %v1015
    %v1033 = vsel %vm889, %v998, 0
    %v1036 = vsel %vm893, %v1031, 0
    %1038 = vmatprep.subr.bf16.mxu0 0
    %1039 = vmatpush1.bf16.msra.mxu0 %v1036
    %1040 = vmatprep.subr.bf16.mxu0 0
    %1041 = vmatpush1.bf16.msra.mxu0 0
    %1042 = vmatprep.subr.bf16.mxu0 0
    %1043 = vmatpush1.bf16.msra.mxu0 0
    %1044 = vmatprep.subr.bf16.mxu0 0
    %1045 = vmatpush1.bf16.msra.mxu0 0
    %1046 = vmatprep.subr.bf16.mxu0 0
    %1047 = vmatpush1.bf16.msra.mxu0 0
    %1048 = vmatprep.subr.bf16.mxu0 0
    %1049 = vmatpush1.bf16.msra.mxu0 0
    %1050 = vmatprep.subr.bf16.mxu0 0
    %1051 = vmatpush1.bf16.msra.mxu0 0
    %1052 = vmatprep.subr.bf16.mxu0 0
    %1053 = vmatpush1.bf16.msra.mxu0 0
    %1054 = vmatprep.subr.bf16.mxu0 0
    %1055 = vmatpush1.bf16.msra.mxu0 0
    %1056 = vmatprep.subr.bf16.mxu0 0
    %1057 = vmatpush1.bf16.msra.mxu0 0
    %1058 = vmatprep.subr.bf16.mxu0 0
    %1059 = vmatpush1.bf16.msra.mxu0 0
    %1060 = vmatprep.subr.bf16.mxu0 0
    %1061 = vmatpush1.bf16.msra.mxu0 0
    %1062 = vmatprep.subr.bf16.mxu0 0
    %1063 = vmatpush1.bf16.msra.mxu0 0
    %1064 = vmatprep.subr.bf16.mxu0 0
    %1065 = vmatpush1.bf16.msra.mxu0 0
    %1066 = vmatprep.subr.bf16.mxu0 0
    %1067 = vmatpush1.bf16.msra.mxu0 0
    %1068 = vmatprep.subr.bf16.mxu0 0
    %1069 = vmatpush1.bf16.msra.mxu0 0
    %1070 = vmatprep.mubr.bf16.mxu0 0
    %1071 = vmatmul.mubr.bf16.gmra.mrb[0].mxu0 %v1033
    %v1072 = vpop.f32.mrb[0].mxu0
    %v1073 = vadd.f32 %v887, %v1072
    %v1074 = vpop.f32.mrb[0].mxu0
    %v1075 = vpop.f32.mrb[0].mxu0
    %v1076 = vpop.f32.mrb[0].mxu0
    %1077 = vdwg.mxu0
    %v1078 = vsel %vm889, %v1073, -inf
    %1079 = vmax.xlane.f32.xlu0 %v1078
    %v1080 = vpop.xlane.xlu0 %1079
    %v1081 = vsub.f32 %v1073, %v1080
    %v1082 = vmul.f32 %v1081, 1.442695
    %v1083 = vpow.pop %v1082
    %v1084 = vsel %vm889, %v1083, 0.0
    %1085 = vadd.xlane.f32.xlu0 %v1084
    %v1086 = vpop.xlane.xlu0 %1085
    %v1087 = vrcp.pop %v1086
    %v1088 = vmul.f32 %v1083, %v1087
    %v1089 = vpack.c.bf16 %v1088, %v1088
    %v1090 = vpack.c.bf16 %v446, %v446
    %v1092 = vsel %vm889, %v1089, 0
    %v1095 = vsel %vm893, %v1090, 0
    %1097 = vmatprep.subr.bf16.mxu0 0
    %1098 = vmatpush1.bf16.msra.mxu0 %v1095
    %1099 = vmatprep.subr.bf16.mxu0 0
    %1100 = vmatpush1.bf16.msra.mxu0 0
    %1101 = vmatprep.subr.bf16.mxu0 0
    %1102 = vmatpush1.bf16.msra.mxu0 0
    %1103 = vmatprep.subr.bf16.mxu0 0
    %1104 = vmatpush1.bf16.msra.mxu0 0
    %1105 = vmatprep.subr.bf16.mxu0 0
    %1106 = vmatpush1.bf16.msra.mxu0 0
    %1107 = vmatprep.subr.bf16.mxu0 0
    %1108 = vmatpush1.bf16.msra.mxu0 0
    %1109 = vmatprep.subr.bf16.mxu0 0
    %1110 = vmatpush1.bf16.msra.mxu0 0
    %1111 = vmatprep.subr.bf16.mxu0 0
    %1112 = vmatpush1.bf16.msra.mxu0 0
    %1113 = vmatprep.subr.bf16.mxu0 0
    %1114 = vmatpush1.bf16.msra.mxu0 0
    %1115 = vmatprep.subr.bf16.mxu0 0
    %1116 = vmatpush1.bf16.msra.mxu0 0
    %1117 = vmatprep.subr.bf16.mxu0 0
    %1118 = vmatpush1.bf16.msra.mxu0 0
    %1119 = vmatprep.subr.bf16.mxu0 0
    %1120 = vmatpush1.bf16.msra.mxu0 0
    %1121 = vmatprep.subr.bf16.mxu0 0
    %1122 = vmatpush1.bf16.msra.mxu0 0
    %1123 = vmatprep.subr.bf16.mxu0 0
    %1124 = vmatpush1.bf16.msra.mxu0 0
    %1125 = vmatprep.subr.bf16.mxu0 0
    %1126 = vmatpush1.bf16.msra.mxu0 0
    %1127 = vmatprep.subr.bf16.mxu0 0
    %1128 = vmatpush1.bf16.msra.mxu0 0
    %1129 = vmatprep.mubr.bf16.mxu0 0
    %1130 = vmatmul.mubr.bf16.gmra.mrb[0].mxu0 %v1092
    %v1131 = vpop.f32.mrb[0].mxu0
    %v1132 = vadd.f32 0.0, %v1131
    %v1133 = vpop.f32.mrb[0].mxu0
    %v1134 = vpop.f32.mrb[0].mxu0
    %v1135 = vpop.f32.mrb[0].mxu0
    %1136 = vdwg.mxu0
    %v1137 = vpack.c.bf16 %v1132, %v1132
    %s1138 = scalar_lea.vmem %s8, 4
    %v1139 = vld [vmem:[%s1138] sm:$0xf]
    %v1141 = vsel %vm889, %v1137, 0
    %v1144 = vsel %vm893, %v1139, 0
    %1146 = vmatprep.subr.bf16.mxu0 0
    %1147 = vmatpush1.bf16.msra.mxu0 %v1144
    %1148 = vmatprep.subr.bf16.mxu0 0
    %1149 = vmatpush1.bf16.msra.mxu0 0
    %1150 = vmatprep.subr.bf16.mxu0 0
    %1151 = vmatpush1.bf16.msra.mxu0 0
    %1152 = vmatprep.subr.bf16.mxu0 0
    %1153 = vmatpush1.bf16.msra.mxu0 0
    %1154 = vmatprep.subr.bf16.mxu0 0
    %1155 = vmatpush1.bf16.msra.mxu0 0
    %1156 = vmatprep.subr.bf16.mxu0 0
    %1157 = vmatpush1.bf16.msra.mxu0 0
    %1158 = vmatprep.subr.bf16.mxu0 0
    %1159 = vmatpush1.bf16.msra.mxu0 0
    %1160 = vmatprep.subr.bf16.mxu0 0
    %1161 = vmatpush1.bf16.msra.mxu0 0
    %1162 = vmatprep.subr.bf16.mxu0 0
    %1163 = vmatpush1.bf16.msra.mxu0 0
    %1164 = vmatprep.subr.bf16.mxu0 0
    %1165 = vmatpush1.bf16.msra.mxu0 0
    %1166 = vmatprep.subr.bf16.mxu0 0
    %1167 = vmatpush1.bf16.msra.mxu0 0
    %1168 = vmatprep.subr.bf16.mxu0 0
    %1169 = vmatpush1.bf16.msra.mxu0 0
    %1170 = vmatprep.subr.bf16.mxu0 0
    %1171 = vmatpush1.bf16.msra.mxu0 0
    %1172 = vmatprep.subr.bf16.mxu0 0
    %1173 = vmatpush1.bf16.msra.mxu0 0
    %1174 = vmatprep.subr.bf16.mxu0 0
    %1175 = vmatpush1.bf16.msra.mxu0 0
    %1176 = vmatprep.subr.bf16.mxu0 0
    %1177 = vmatpush1.bf16.msra.mxu0 0
    %1178 = vmatprep.mubr.bf16.mxu0 0
    %1179 = vmatmul.mubr.bf16.gmra.mrb[0].mxu0 %v1141
    %v1180 = vpop.f32.mrb[0].mxu0
    %v1181 = vadd.f32 0.0, %v1180
    %v1182 = vpop.f32.mrb[0].mxu0
    %v1183 = vpop.f32.mrb[0].mxu0
    %v1184 = vpop.f32.mrb[0].mxu0
    %1185 = vdwg.mxu0
    %v1187 = vsel %vm889, %v996, 0
    %v1190 = vsel %vm893, %v997, 0
    %1192 = vmatprep.subr.bf16.mxu0 0
    %1193 = vmatpush1.bf16.msra.mxu0 %v1190
    %1194 = vmatprep.subr.bf16.mxu0 0
    %1195 = vmatpush1.bf16.msra.mxu0 0
    %1196 = vmatprep.subr.bf16.mxu0 0
    %1197 = vmatpush1.bf16.msra.mxu0 0
    %1198 = vmatprep.subr.bf16.mxu0 0
    %1199 = vmatpush1.bf16.msra.mxu0 0
    %1200 = vmatprep.subr.bf16.mxu0 0
    %1201 = vmatpush1.bf16.msra.mxu0 0
    %1202 = vmatprep.subr.bf16.mxu0 0
    %1203 = vmatpush1.bf16.msra.mxu0 0
    %1204 = vmatprep.subr.bf16.mxu0 0
    %1205 = vmatpush1.bf16.msra.mxu0 0
    %1206 = vmatprep.subr.bf16.mxu0 0
    %1207 = vmatpush1.bf16.msra.mxu0 0
    %1208 = vmatprep.subr.bf16.mxu0 0
    %1209 = vmatpush1.bf16.msra.mxu0 0
    %1210 = vmatprep.subr.bf16.mxu0 0
    %1211 = vmatpush1.bf16.msra.mxu0 0
    %1212 = vmatprep.subr.bf16.mxu0 0
    %1213 = vmatpush1.bf16.msra.mxu0 0
    %1214 = vmatprep.subr.bf16.mxu0 0
    %1215 = vmatpush1.bf16.msra.mxu0 0
    %1216 = vmatprep.subr.bf16.mxu0 0
    %1217 = vmatpush1.bf16.msra.mxu0 0
    %1218 = vmatprep.subr.bf16.mxu0 0
    %1219 = vmatpush1.bf16.msra.mxu0 0
    %1220 = vmatprep.subr.bf16.mxu0 0
    %1221 = vmatpush1.bf16.msra.mxu0 0
    %1222 = vmatprep.subr.bf16.mxu0 0
    %1223 = vmatpush1.bf16.msra.mxu0 0
    %1224 = vmatprep.mubr.bf16.mxu0 0
    %1225 = vmatmul.mubr.bf16.gmra.mrb[0].mxu0 %v1187
    %v1226 = vpop.f32.mrb[0].mxu0
    %v1227 = vadd.f32 %v1181, %v1226
    %v1228 = vpop.f32.mrb[0].mxu0
    %v1229 = vpop.f32.mrb[0].mxu0
    %v1230 = vpop.f32.mrb[0].mxu0
    %1231 = vdwg.mxu0
    %v1232 = vpack.c.bf16 %v512, %v512
    %1233 = vxpose.xlu0.b32.start [1/16] %v578, 128
    %1234 = vxpose.xlu0.b32.cont [2/16] 0.0, 128
    %1235 = vxpose.xlu0.b32.cont [3/16] 0.0, 128
    %1236 = vxpose.xlu0.b32.cont [4/16] 0.0, 128
    %1237 = vxpose.xlu0.b32.cont [5/16] 0.0, 128
    %1238 = vxpose.xlu0.b32.cont [6/16] 0.0, 128
    %1239 = vxpose.xlu0.b32.cont [7/16] 0.0, 128
    %1240 = vxpose.xlu0.b32.cont [8/16] 0.0, 128
    %1241 = vxpose.xlu0.b32.cont [9/16] 0.0, 128
    %1242 = vxpose.xlu0.b32.cont [10/16] 0.0, 128
    %1243 = vxpose.xlu0.b32.cont [11/16] 0.0, 128
    %1244 = vxpose.xlu0.b32.cont [12/16] 0.0, 128
    %1245 = vxpose.xlu0.b32.cont [13/16] 0.0, 128
    %1246 = vxpose.xlu0.b32.cont [14/16] 0.0, 128
    %1247 = vxpose.xlu0.b32.cont [15/16] 0.0, 128
    %1248 = vxpose.xlu0.b32.end [16/16] 0.0, 128
    %v1249 = vpop.trf.xlu0
    %v1250 = vpop.trf.xlu0
    %v1251 = vpop.trf.xlu0
    %v1252 = vpop.trf.xlu0
    %v1253 = vpop.trf.xlu0
    %v1254 = vpop.trf.xlu0
    %v1255 = vpop.trf.xlu0
    %v1256 = vpop.trf.xlu0
    %v1257 = vpop.trf.xlu0
    %v1258 = vpop.trf.xlu0
    %v1259 = vpop.trf.xlu0
    %v1260 = vpop.trf.xlu0
    %v1261 = vpop.trf.xlu0
    %v1262 = vpop.trf.xlu0
    %v1263 = vpop.trf.xlu0
    %v1264 = vpop.trf.xlu0
    %v1265 = vpack.c.bf16 %v1249, %v1249
    %v1267 = vsel %vm889, %v1232, 0
    %v1270 = vsel %vm893, %v1265, 0
    %1272 = vmatprep.subr.bf16.mxu0 0
    %1273 = vmatpush1.bf16.msra.mxu0 %v1270
    %1274 = vmatprep.subr.bf16.mxu0 0
    %1275 = vmatpush1.bf16.msra.mxu0 0
    %1276 = vmatprep.subr.bf16.mxu0 0
    %1277 = vmatpush1.bf16.msra.mxu0 0
    %1278 = vmatprep.subr.bf16.mxu0 0
    %1279 = vmatpush1.bf16.msra.mxu0 0
    %1280 = vmatprep.subr.bf16.mxu0 0
    %1281 = vmatpush1.bf16.msra.mxu0 0
    %1282 = vmatprep.subr.bf16.mxu0 0
    %1283 = vmatpush1.bf16.msra.mxu0 0
    %1284 = vmatprep.subr.bf16.mxu0 0
    %1285 = vmatpush1.bf16.msra.mxu0 0
    %1286 = vmatprep.subr.bf16.mxu0 0
    %1287 = vmatpush1.bf16.msra.mxu0 0
    %1288 = vmatprep.subr.bf16.mxu0 0
    %1289 = vmatpush1.bf16.msra.mxu0 0
    %1290 = vmatprep.subr.bf16.mxu0 0
    %1291 = vmatpush1.bf16.msra.mxu0 0
    %1292 = vmatprep.subr.bf16.mxu0 0
    %1293 = vmatpush1.bf16.msra.mxu0 0
    %1294 = vmatprep.subr.bf16.mxu0 0
    %1295 = vmatpush1.bf16.msra.mxu0 0
    %1296 = vmatprep.subr.bf16.mxu0 0
    %1297 = vmatpush1.bf16.msra.mxu0 0
    %1298 = vmatprep.subr.bf16.mxu0 0
    %1299 = vmatpush1.bf16.msra.mxu0 0
    %1300 = vmatprep.subr.bf16.mxu0 0
    %1301 = vmatpush1.bf16.msra.mxu0 0
    %1302 = vmatprep.subr.bf16.mxu0 0
    %1303 = vmatpush1.bf16.msra.mxu0 0
    %1304 = vmatprep.mubr.bf16.mxu0 0
    %1305 = vmatmul.mubr.bf16.gmra.mrb[0].mxu0 %v1267
    %v1306 = vpop.f32.mrb[0].mxu0
    %v1307 = vadd.f32 %v887, %v1306
    %v1308 = vpop.f32.mrb[0].mxu0
    %v1309 = vpop.f32.mrb[0].mxu0
    %v1310 = vpop.f32.mrb[0].mxu0
    %1311 = vdwg.mxu0
    %v1312 = vsel %vm889, %v1307, -inf
    %1313 = vmax.xlane.f32.xlu0 %v1312
    %v1314 = vpop.xlane.xlu0 %1313
    %v1315 = vsub.f32 %v1307, %v1314
    %v1316 = vmul.f32 %v1315, 1.442695
    %v1317 = vpow.pop %v1316
    %v1318 = vsel %vm889, %v1317, 0.0
    %1319 = vadd.xlane.f32.xlu0 %v1318
    %v1320 = vpop.xlane.xlu0 %1319
    %v1321 = vrcp.pop %v1320
    %v1322 = vmul.f32 %v1317, %v1321
    %v1323 = vpack.c.bf16 %v1322, %v1322
    %v1324 = vpack.c.bf16 %v644, %v644
    %v1326 = vsel %vm889, %v1323, 0
    %v1329 = vsel %vm893, %v1324, 0
    %1331 = vmatprep.subr.bf16.mxu0 0
    %1332 = vmatpush1.bf16.msra.mxu0 %v1329
    %1333 = vmatprep.subr.bf16.mxu0 0
    %1334 = vmatpush1.bf16.msra.mxu0 0
    %1335 = vmatprep.subr.bf16.mxu0 0
    %1336 = vmatpush1.bf16.msra.mxu0 0
    %1337 = vmatprep.subr.bf16.mxu0 0
    %1338 = vmatpush1.bf16.msra.mxu0 0
    %1339 = vmatprep.subr.bf16.mxu0 0
    %1340 = vmatpush1.bf16.msra.mxu0 0
    %1341 = vmatprep.subr.bf16.mxu0 0
    %1342 = vmatpush1.bf16.msra.mxu0 0
    %1343 = vmatprep.subr.bf16.mxu0 0
    %1344 = vmatpush1.bf16.msra.mxu0 0
    %1345 = vmatprep.subr.bf16.mxu0 0
    %1346 = vmatpush1.bf16.msra.mxu0 0
    %1347 = vmatprep.subr.bf16.mxu0 0
    %1348 = vmatpush1.bf16.msra.mxu0 0
    %1349 = vmatprep.subr.bf16.mxu0 0
    %1350 = vmatpush1.bf16.msra.mxu0 0
    %1351 = vmatprep.subr.bf16.mxu0 0
    %1352 = vmatpush1.bf16.msra.mxu0 0
    %1353 = vmatprep.subr.bf16.mxu0 0
    %1354 = vmatpush1.bf16.msra.mxu0 0
    %1355 = vmatprep.subr.bf16.mxu0 0
    %1356 = vmatpush1.bf16.msra.mxu0 0
    %1357 = vmatprep.subr.bf16.mxu0 0
    %1358 = vmatpush1.bf16.msra.mxu0 0
    %1359 = vmatprep.subr.bf16.mxu0 0
    %1360 = vmatpush1.bf16.msra.mxu0 0
    %1361 = vmatprep.subr.bf16.mxu0 0
    %1362 = vmatpush1.bf16.msra.mxu0 0
    %1363 = vmatprep.mubr.bf16.mxu0 0
    %1364 = vmatmul.mubr.bf16.gmra.mrb[0].mxu0 %v1326
    %v1365 = vpop.f32.mrb[0].mxu0
    %v1366 = vadd.f32 0.0, %v1365
    %v1367 = vpop.f32.mrb[0].mxu0
    %v1368 = vpop.f32.mrb[0].mxu0
    %v1369 = vpop.f32.mrb[0].mxu0
    %1370 = vdwg.mxu0
    %v1371 = vpack.c.bf16 %v1366, %v1366
    %s1372 = scalar_lea.vmem %s8, 8
    %v1373 = vld [vmem:[%s1372] sm:$0xf]
    %v1375 = vsel %vm889, %v1371, 0
    %v1378 = vsel %vm893, %v1373, 0
    %1380 = vmatprep.subr.bf16.mxu0 0
    %1381 = vmatpush1.bf16.msra.mxu0 %v1378
    %1382 = vmatprep.subr.bf16.mxu0 0
    %1383 = vmatpush1.bf16.msra.mxu0 0
    %1384 = vmatprep.subr.bf16.mxu0 0
    %1385 = vmatpush1.bf16.msra.mxu0 0
    %1386 = vmatprep.subr.bf16.mxu0 0
    %1387 = vmatpush1.bf16.msra.mxu0 0
    %1388 = vmatprep.subr.bf16.mxu0 0
    %1389 = vmatpush1.bf16.msra.mxu0 0
    %1390 = vmatprep.subr.bf16.mxu0 0
    %1391 = vmatpush1.bf16.msra.mxu0 0
    %1392 = vmatprep.subr.bf16.mxu0 0
    %1393 = vmatpush1.bf16.msra.mxu0 0
    %1394 = vmatprep.subr.bf16.mxu0 0
    %1395 = vmatpush1.bf16.msra.mxu0 0
    %1396 = vmatprep.subr.bf16.mxu0 0
    %1397 = vmatpush1.bf16.msra.mxu0 0
    %1398 = vmatprep.subr.bf16.mxu0 0
    %1399 = vmatpush1.bf16.msra.mxu0 0
    %1400 = vmatprep.subr.bf16.mxu0 0
    %1401 = vmatpush1.bf16.msra.mxu0 0
    %1402 = vmatprep.subr.bf16.mxu0 0
    %1403 = vmatpush1.bf16.msra.mxu0 0
    %1404 = vmatprep.subr.bf16.mxu0 0
    %1405 = vmatpush1.bf16.msra.mxu0 0
    %1406 = vmatprep.subr.bf16.mxu0 0
    %1407 = vmatpush1.bf16.msra.mxu0 0
    %1408 = vmatprep.subr.bf16.mxu0 0
    %1409 = vmatpush1.bf16.msra.mxu0 0
    %1410 = vmatprep.subr.bf16.mxu0 0
    %1411 = vmatpush1.bf16.msra.mxu0 0
    %1412 = vmatprep.mubr.bf16.mxu0 0
    %1413 = vmatmul.mubr.bf16.gmra.mrb[0].mxu0 %v1375
    %v1414 = vpop.f32.mrb[0].mxu0
    %v1415 = vadd.f32 0.0, %v1414
    %v1416 = vpop.f32.mrb[0].mxu0
    %v1417 = vpop.f32.mrb[0].mxu0
    %v1418 = vpop.f32.mrb[0].mxu0
    %1419 = vdwg.mxu0
    %v1420 = vadd.f32 %v1227, %v1415
    %v1421 = vpack.c.bf16 %v710, %v710
    %1422 = vxpose.xlu0.b32.start [1/16] %v776, 128
    %1423 = vxpose.xlu0.b32.cont [2/16] 0.0, 128
    %1424 = vxpose.xlu0.b32.cont [3/16] 0.0, 128
    %1425 = vxpose.xlu0.b32.cont [4/16] 0.0, 128
    %1426 = vxpose.xlu0.b32.cont [5/16] 0.0, 128
    %1427 = vxpose.xlu0.b32.cont [6/16] 0.0, 128
    %1428 = vxpose.xlu0.b32.cont [7/16] 0.0, 128
    %1429 = vxpose.xlu0.b32.cont [8/16] 0.0, 128
    %1430 = vxpose.xlu0.b32.cont [9/16] 0.0, 128
    %1431 = vxpose.xlu0.b32.cont [10/16] 0.0, 128
    %1432 = vxpose.xlu0.b32.cont [11/16] 0.0, 128
    %1433 = vxpose.xlu0.b32.cont [12/16] 0.0, 128
    %1434 = vxpose.xlu0.b32.cont [13/16] 0.0, 128
    %1435 = vxpose.xlu0.b32.cont [14/16] 0.0, 128
    %1436 = vxpose.xlu0.b32.cont [15/16] 0.0, 128
    %1437 = vxpose.xlu0.b32.end [16/16] 0.0, 128
    %v1438 = vpop.trf.xlu0
    %v1439 = vpop.trf.xlu0
    %v1440 = vpop.trf.xlu0
    %v1441 = vpop.trf.xlu0
    %v1442 = vpop.trf.xlu0
    %v1443 = vpop.trf.xlu0
    %v1444 = vpop.trf.xlu0
    %v1445 = vpop.trf.xlu0
    %v1446 = vpop.trf.xlu0
    %v1447 = vpop.trf.xlu0
    %v1448 = vpop.trf.xlu0
    %v1449 = vpop.trf.xlu0
    %v1450 = vpop.trf.xlu0
    %v1451 = vpop.trf.xlu0
    %v1452 = vpop.trf.xlu0
    %v1453 = vpop.trf.xlu0
    %v1454 = vpack.c.bf16 %v1438, %v1438
    %v1456 = vsel %vm889, %v1421, 0
    %v1459 = vsel %vm893, %v1454, 0
    %1461 = vmatprep.subr.bf16.mxu0 0
    %1462 = vmatpush1.bf16.msra.mxu0 %v1459
    %1463 = vmatprep.subr.bf16.mxu0 0
    %1464 = vmatpush1.bf16.msra.mxu0 0
    %1465 = vmatprep.subr.bf16.mxu0 0
    %1466 = vmatpush1.bf16.msra.mxu0 0
    %1467 = vmatprep.subr.bf16.mxu0 0
    %1468 = vmatpush1.bf16.msra.mxu0 0
    %1469 = vmatprep.subr.bf16.mxu0 0
    %1470 = vmatpush1.bf16.msra.mxu0 0
    %1471 = vmatprep.subr.bf16.mxu0 0
    %1472 = vmatpush1.bf16.msra.mxu0 0
    %1473 = vmatprep.subr.bf16.mxu0 0
    %1474 = vmatpush1.bf16.msra.mxu0 0
    %1475 = vmatprep.subr.bf16.mxu0 0
    %1476 = vmatpush1.bf16.msra.mxu0 0
    %1477 = vmatprep.subr.bf16.mxu0 0
    %1478 = vmatpush1.bf16.msra.mxu0 0
    %1479 = vmatprep.subr.bf16.mxu0 0
    %1480 = vmatpush1.bf16.msra.mxu0 0
    %1481 = vmatprep.subr.bf16.mxu0 0
    %1482 = vmatpush1.bf16.msra.mxu0 0
    %1483 = vmatprep.subr.bf16.mxu0 0
    %1484 = vmatpush1.bf16.msra.mxu0 0
    %1485 = vmatprep.subr.bf16.mxu0 0
    %1486 = vmatpush1.bf16.msra.mxu0 0
    %1487 = vmatprep.subr.bf16.mxu0 0
    %1488 = vmatpush1.bf16.msra.mxu0 0
    %1489 = vmatprep.subr.bf16.mxu0 0
    %1490 = vmatpush1.bf16.msra.mxu0 0
    %1491 = vmatprep.subr.bf16.mxu0 0
    %1492 = vmatpush1.bf16.msra.mxu0 0
    %1493 = vmatprep.mubr.bf16.mxu0 0
    %1494 = vmatmul.mubr.bf16.gmra.mrb[0].mxu0 %v1456
    %v1495 = vpop.f32.mrb[0].mxu0
    %v1496 = vadd.f32 %v887, %v1495
    %v1497 = vpop.f32.mrb[0].mxu0
    %v1498 = vpop.f32.mrb[0].mxu0
    %v1499 = vpop.f32.mrb[0].mxu0
    %1500 = vdwg.mxu0
    %v1501 = vsel %vm889, %v1496, -inf
    %1502 = vmax.xlane.f32.xlu0 %v1501
    %v1503 = vpop.xlane.xlu0 %1502
    %v1504 = vsub.f32 %v1496, %v1503
    %v1505 = vmul.f32 %v1504, 1.442695
    %v1506 = vpow.pop %v1505
    %v1507 = vsel %vm889, %v1506, 0.0
    %1508 = vadd.xlane.f32.xlu0 %v1507
    %v1509 = vpop.xlane.xlu0 %1508
    %v1510 = vrcp.pop %v1509
    %v1511 = vmul.f32 %v1506, %v1510
    %v1512 = vpack.c.bf16 %v1511, %v1511
    %v1513 = vpack.c.bf16 %v842, %v842
    %v1515 = vsel %vm889, %v1512, 0
    %v1518 = vsel %vm893, %v1513, 0
    %1520 = vmatprep.subr.bf16.mxu0 0
    %1521 = vmatpush1.bf16.msra.mxu0 %v1518
    %1522 = vmatprep.subr.bf16.mxu0 0
    %1523 = vmatpush1.bf16.msra.mxu0 0
    %1524 = vmatprep.subr.bf16.mxu0 0
    %1525 = vmatpush1.bf16.msra.mxu0 0
    %1526 = vmatprep.subr.bf16.mxu0 0
    %1527 = vmatpush1.bf16.msra.mxu0 0
    %1528 = vmatprep.subr.bf16.mxu0 0
    %1529 = vmatpush1.bf16.msra.mxu0 0
    %1530 = vmatprep.subr.bf16.mxu0 0
    %1531 = vmatpush1.bf16.msra.mxu0 0
    %1532 = vmatprep.subr.bf16.mxu0 0
    %1533 = vmatpush1.bf16.msra.mxu0 0
    %1534 = vmatprep.subr.bf16.mxu0 0
    %1535 = vmatpush1.bf16.msra.mxu0 0
    %1536 = vmatprep.subr.bf16.mxu0 0
    %1537 = vmatpush1.bf16.msra.mxu0 0
    %1538 = vmatprep.subr.bf16.mxu0 0
    %1539 = vmatpush1.bf16.msra.mxu0 0
    %1540 = vmatprep.subr.bf16.mxu0 0
    %1541 = vmatpush1.bf16.msra.mxu0 0
    %1542 = vmatprep.subr.bf16.mxu0 0
    %1543 = vmatpush1.bf16.msra.mxu0 0
    %1544 = vmatprep.subr.bf16.mxu0 0
    %1545 = vmatpush1.bf16.msra.mxu0 0
    %1546 = vmatprep.subr.bf16.mxu0 0
    %1547 = vmatpush1.bf16.msra.mxu0 0
    %1548 = vmatprep.subr.bf16.mxu0 0
    %1549 = vmatpush1.bf16.msra.mxu0 0
    %1550 = vmatprep.subr.bf16.mxu0 0
    %1551 = vmatpush1.bf16.msra.mxu0 0
    %1552 = vmatprep.mubr.bf16.mxu0 0
    %1553 = vmatmul.mubr.bf16.gmra.mrb[0].mxu0 %v1515
    %v1554 = vpop.f32.mrb[0].mxu0
    %v1555 = vadd.f32 0.0, %v1554
    %v1556 = vpop.f32.mrb[0].mxu0
    %v1557 = vpop.f32.mrb[0].mxu0
    %v1558 = vpop.f32.mrb[0].mxu0
    %1559 = vdwg.mxu0
    %v1560 = vpack.c.bf16 %v1555, %v1555
    %s1561 = scalar_lea.vmem %s8, 12
    %v1562 = vld [vmem:[%s1561] sm:$0xf]
    %v1564 = vsel %vm889, %v1560, 0
    %v1567 = vsel %vm893, %v1562, 0
    %1569 = vmatprep.subr.bf16.mxu0 0
    %1570 = vmatpush1.bf16.msra.mxu0 %v1567
    %1571 = vmatprep.subr.bf16.mxu0 0
    %1572 = vmatpush1.bf16.msra.mxu0 0
    %1573 = vmatprep.subr.bf16.mxu0 0
    %1574 = vmatpush1.bf16.msra.mxu0 0
    %1575 = vmatprep.subr.bf16.mxu0 0
    %1576 = vmatpush1.bf16.msra.mxu0 0
    %1577 = vmatprep.subr.bf16.mxu0 0
    %1578 = vmatpush1.bf16.msra.mxu0 0
    %1579 = vmatprep.subr.bf16.mxu0 0
    %1580 = vmatpush1.bf16.msra.mxu0 0
    %1581 = vmatprep.subr.bf16.mxu0 0
    %1582 = vmatpush1.bf16.msra.mxu0 0
    %1583 = vmatprep.subr.bf16.mxu0 0
    %1584 = vmatpush1.bf16.msra.mxu0 0
    %1585 = vmatprep.subr.bf16.mxu0 0
    %1586 = vmatpush1.bf16.msra.mxu0 0
    %1587 = vmatprep.subr.bf16.mxu0 0
    %1588 = vmatpush1.bf16.msra.mxu0 0
    %1589 = vmatprep.subr.bf16.mxu0 0
    %1590 = vmatpush1.bf16.msra.mxu0 0
    %1591 = vmatprep.subr.bf16.mxu0 0
    %1592 = vmatpush1.bf16.msra.mxu0 0
    %1593 = vmatprep.subr.bf16.mxu0 0
    %1594 = vmatpush1.bf16.msra.mxu0 0
    %1595 = vmatprep.subr.bf16.mxu0 0
    %1596 = vmatpush1.bf16.msra.mxu0 0
    %1597 = vmatprep.subr.bf16.mxu0 0
    %1598 = vmatpush1.bf16.msra.mxu0 0
    %1599 = vmatprep.subr.bf16.mxu0 0
    %1600 = vmatpush1.bf16.msra.mxu0 0
    %1601 = vmatprep.mubr.bf16.mxu0 0
    %1602 = vmatmul.mubr.bf16.gmra.mrb[0].mxu0 %v1564
    %v1603 = vpop.f32.mrb[0].mxu0
    %v1604 = vadd.f32 0.0, %v1603
    %v1605 = vpop.f32.mrb[0].mxu0
    %v1606 = vpop.f32.mrb[0].mxu0
    %v1607 = vpop.f32.mrb[0].mxu0
    %1608 = vdwg.mxu0
    %v1609 = vadd.f32 %v1420, %v1604
    %s1610 = scalar_lea.vmem %s1, 1
    %v1611 = vld [vmem:[%s1610] sm:$0x1]
    %v1612 = vpack.c.bf16 %v123, %v123
    %1613 = vxpose.xlu0.b32.start [1/16] %v187, 128
    %1614 = vxpose.xlu0.b32.cont [2/16] 0.0, 128
    %1615 = vxpose.xlu0.b32.cont [3/16] 0.0, 128
    %1616 = vxpose.xlu0.b32.cont [4/16] 0.0, 128
    %1617 = vxpose.xlu0.b32.cont [5/16] 0.0, 128
    %1618 = vxpose.xlu0.b32.cont [6/16] 0.0, 128
    %1619 = vxpose.xlu0.b32.cont [7/16] 0.0, 128
    %1620 = vxpose.xlu0.b32.cont [8/16] 0.0, 128
    %1621 = vxpose.xlu0.b32.cont [9/16] 0.0, 128
    %1622 = vxpose.xlu0.b32.cont [10/16] 0.0, 128
    %1623 = vxpose.xlu0.b32.cont [11/16] 0.0, 128
    %1624 = vxpose.xlu0.b32.cont [12/16] 0.0, 128
    %1625 = vxpose.xlu0.b32.cont [13/16] 0.0, 128
    %1626 = vxpose.xlu0.b32.cont [14/16] 0.0, 128
    %1627 = vxpose.xlu0.b32.cont [15/16] 0.0, 128
    %1628 = vxpose.xlu0.b32.end [16/16] 0.0, 128
    %v1629 = vpop.trf.xlu0
    %v1630 = vpop.trf.xlu0
    %v1631 = vpop.trf.xlu0
    %v1632 = vpop.trf.xlu0
    %v1633 = vpop.trf.xlu0
    %v1634 = vpop.trf.xlu0
    %v1635 = vpop.trf.xlu0
    %v1636 = vpop.trf.xlu0
    %v1637 = vpop.trf.xlu0
    %v1638 = vpop.trf.xlu0
    %v1639 = vpop.trf.xlu0
    %v1640 = vpop.trf.xlu0
    %v1641 = vpop.trf.xlu0
    %v1642 = vpop.trf.xlu0
    %v1643 = vpop.trf.xlu0
    %v1644 = vpop.trf.xlu0
    %v1645 = vpack.c.bf16 %v1629, %v1629
    %v1647 = vlaneseq
    %v1648 = vshrl.u32 %v1647, 7
    %v1649 = vsub.s32 0, %v1648
    %v1650 = vrot.slane %v1611, %v1649
    %v1653 = vsel %vm889, %v1612, 0
    %v1656 = vsel %vm893, %v1645, 0
    %1658 = vmatprep.subr.bf16.mxu0 0
    %1659 = vmatpush1.bf16.msra.mxu0 %v1656
    %1660 = vmatprep.subr.bf16.mxu0 0
    %1661 = vmatpush1.bf16.msra.mxu0 0
    %1662 = vmatprep.subr.bf16.mxu0 0
    %1663 = vmatpush1.bf16.msra.mxu0 0
    %1664 = vmatprep.subr.bf16.mxu0 0
    %1665 = vmatpush1.bf16.msra.mxu0 0
    %1666 = vmatprep.subr.bf16.mxu0 0
    %1667 = vmatpush1.bf16.msra.mxu0 0
    %1668 = vmatprep.subr.bf16.mxu0 0
    %1669 = vmatpush1.bf16.msra.mxu0 0
    %1670 = vmatprep.subr.bf16.mxu0 0
    %1671 = vmatpush1.bf16.msra.mxu0 0
    %1672 = vmatprep.subr.bf16.mxu0 0
    %1673 = vmatpush1.bf16.msra.mxu0 0
    %1674 = vmatprep.subr.bf16.mxu0 0
    %1675 = vmatpush1.bf16.msra.mxu0 0
    %1676 = vmatprep.subr.bf16.mxu0 0
    %1677 = vmatpush1.bf16.msra.mxu0 0
    %1678 = vmatprep.subr.bf16.mxu0 0
    %1679 = vmatpush1.bf16.msra.mxu0 0
    %1680 = vmatprep.subr.bf16.mxu0 0
    %1681 = vmatpush1.bf16.msra.mxu0 0
    %1682 = vmatprep.subr.bf16.mxu0 0
    %1683 = vmatpush1.bf16.msra.mxu0 0
    %1684 = vmatprep.subr.bf16.mxu0 0
    %1685 = vmatpush1.bf16.msra.mxu0 0
    %1686 = vmatprep.subr.bf16.mxu0 0
    %1687 = vmatpush1.bf16.msra.mxu0 0
    %1688 = vmatprep.subr.bf16.mxu0 0
    %1689 = vmatpush1.bf16.msra.mxu0 0
    %1690 = vmatprep.mubr.bf16.mxu0 0
    %1691 = vmatmul.mubr.bf16.gmra.mrb[0].mxu0 %v1653
    %v1692 = vpop.f32.mrb[0].mxu0
    %v1693 = vadd.f32 %v1650, %v1692
    %v1694 = vpop.f32.mrb[0].mxu0
    %v1695 = vpop.f32.mrb[0].mxu0
    %v1696 = vpop.f32.mrb[0].mxu0
    %1697 = vdwg.mxu0
    %v1698 = vsel %vm889, %v1693, -inf
    %1699 = vmax.xlane.f32.xlu0 %v1698
    %v1700 = vpop.xlane.xlu0 %1699
    %v1701 = vsub.f32 %v1693, %v1700
    %v1702 = vmul.f32 %v1701, 1.442695
    %v1703 = vpow.pop %v1702
    %v1704 = vsel %vm889, %v1703, 0.0
    %1705 = vadd.xlane.f32.xlu0 %v1704
    %v1706 = vpop.xlane.xlu0 %1705
    %v1707 = vrcp.pop %v1706
    %v1708 = vmul.f32 %v1703, %v1707
    %v1709 = vpack.c.bf16 %v1708, %v1708
    %v1710 = vpack.c.bf16 %v251, %v251
    %v1712 = vsel %vm889, %v1709, 0
    %v1715 = vsel %vm893, %v1710, 0
    %1717 = vmatprep.subr.bf16.mxu0 0
    %1718 = vmatpush1.bf16.msra.mxu0 %v1715
    %1719 = vmatprep.subr.bf16.mxu0 0
    %1720 = vmatpush1.bf16.msra.mxu0 0
    %1721 = vmatprep.subr.bf16.mxu0 0
    %1722 = vmatpush1.bf16.msra.mxu0 0
    %1723 = vmatprep.subr.bf16.mxu0 0
    %1724 = vmatpush1.bf16.msra.mxu0 0
    %1725 = vmatprep.subr.bf16.mxu0 0
    %1726 = vmatpush1.bf16.msra.mxu0 0
    %1727 = vmatprep.subr.bf16.mxu0 0
    %1728 = vmatpush1.bf16.msra.mxu0 0
    %1729 = vmatprep.subr.bf16.mxu0 0
    %1730 = vmatpush1.bf16.msra.mxu0 0
    %1731 = vmatprep.subr.bf16.mxu0 0
    %1732 = vmatpush1.bf16.msra.mxu0 0
    %1733 = vmatprep.subr.bf16.mxu0 0
    %1734 = vmatpush1.bf16.msra.mxu0 0
    %1735 = vmatprep.subr.bf16.mxu0 0
    %1736 = vmatpush1.bf16.msra.mxu0 0
    %1737 = vmatprep.subr.bf16.mxu0 0
    %1738 = vmatpush1.bf16.msra.mxu0 0
    %1739 = vmatprep.subr.bf16.mxu0 0
    %1740 = vmatpush1.bf16.msra.mxu0 0
    %1741 = vmatprep.subr.bf16.mxu0 0
    %1742 = vmatpush1.bf16.msra.mxu0 0
    %1743 = vmatprep.subr.bf16.mxu0 0
    %1744 = vmatpush1.bf16.msra.mxu0 0
    %1745 = vmatprep.subr.bf16.mxu0 0
    %1746 = vmatpush1.bf16.msra.mxu0 0
    %1747 = vmatprep.subr.bf16.mxu0 0
    %1748 = vmatpush1.bf16.msra.mxu0 0
    %1749 = vmatprep.mubr.bf16.mxu0 0
    %1750 = vmatmul.mubr.bf16.gmra.mrb[0].mxu0 %v1712
    %v1751 = vpop.f32.mrb[0].mxu0
    %v1752 = vadd.f32 0.0, %v1751
    %v1753 = vpop.f32.mrb[0].mxu0
    %v1754 = vpop.f32.mrb[0].mxu0
    %v1755 = vpop.f32.mrb[0].mxu0
    %1756 = vdwg.mxu0
    %v1757 = vpack.c.bf16 %v1752, %v1752
    %v1758 = vpack.c.bf16 %v317, %v317
    %1759 = vxpose.xlu0.b32.start [1/16] %v383, 128
    %1760 = vxpose.xlu0.b32.cont [2/16] 0.0, 128
    %1761 = vxpose.xlu0.b32.cont [3/16] 0.0, 128
    %1762 = vxpose.xlu0.b32.cont [4/16] 0.0, 128
    %1763 = vxpose.xlu0.b32.cont [5/16] 0.0, 128
    %1764 = vxpose.xlu0.b32.cont [6/16] 0.0, 128
    %1765 = vxpose.xlu0.b32.cont [7/16] 0.0, 128
    %1766 = vxpose.xlu0.b32.cont [8/16] 0.0, 128
    %1767 = vxpose.xlu0.b32.cont [9/16] 0.0, 128
    %1768 = vxpose.xlu0.b32.cont [10/16] 0.0, 128
    %1769 = vxpose.xlu0.b32.cont [11/16] 0.0, 128
    %1770 = vxpose.xlu0.b32.cont [12/16] 0.0, 128
    %1771 = vxpose.xlu0.b32.cont [13/16] 0.0, 128
    %1772 = vxpose.xlu0.b32.cont [14/16] 0.0, 128
    %1773 = vxpose.xlu0.b32.cont [15/16] 0.0, 128
    %1774 = vxpose.xlu0.b32.end [16/16] 0.0, 128
    %v1775 = vpop.trf.xlu0
    %v1776 = vpop.trf.xlu0
    %v1777 = vpop.trf.xlu0
    %v1778 = vpop.trf.xlu0
    %v1779 = vpop.trf.xlu0
    %v1780 = vpop.trf.xlu0
    %v1781 = vpop.trf.xlu0
    %v1782 = vpop.trf.xlu0
    %v1783 = vpop.trf.xlu0
    %v1784 = vpop.trf.xlu0
    %v1785 = vpop.trf.xlu0
    %v1786 = vpop.trf.xlu0
    %v1787 = vpop.trf.xlu0
    %v1788 = vpop.trf.xlu0
    %v1789 = vpop.trf.xlu0
    %v1790 = vpop.trf.xlu0
    %v1791 = vpack.c.bf16 %v1775, %v1775
    %v1793 = vsel %vm889, %v1758, 0
    %v1796 = vsel %vm893, %v1791, 0
    %1798 = vmatprep.subr.bf16.mxu0 0
    %1799 = vmatpush1.bf16.msra.mxu0 %v1796
    %1800 = vmatprep.subr.bf16.mxu0 0
    %1801 = vmatpush1.bf16.msra.mxu0 0
    %1802 = vmatprep.subr.bf16.mxu0 0
    %1803 = vmatpush1.bf16.msra.mxu0 0
    %1804 = vmatprep.subr.bf16.mxu0 0
    %1805 = vmatpush1.bf16.msra.mxu0 0
    %1806 = vmatprep.subr.bf16.mxu0 0
    %1807 = vmatpush1.bf16.msra.mxu0 0
    %1808 = vmatprep.subr.bf16.mxu0 0
    %1809 = vmatpush1.bf16.msra.mxu0 0
    %1810 = vmatprep.subr.bf16.mxu0 0
    %1811 = vmatpush1.bf16.msra.mxu0 0
    %1812 = vmatprep.subr.bf16.mxu0 0
    %1813 = vmatpush1.bf16.msra.mxu0 0
    %1814 = vmatprep.subr.bf16.mxu0 0
    %1815 = vmatpush1.bf16.msra.mxu0 0
    %1816 = vmatprep.subr.bf16.mxu0 0
    %1817 = vmatpush1.bf16.msra.mxu0 0
    %1818 = vmatprep.subr.bf16.mxu0 0
    %1819 = vmatpush1.bf16.msra.mxu0 0
    %1820 = vmatprep.subr.bf16.mxu0 0
    %1821 = vmatpush1.bf16.msra.mxu0 0
    %1822 = vmatprep.subr.bf16.mxu0 0
    %1823 = vmatpush1.bf16.msra.mxu0 0
    %1824 = vmatprep.subr.bf16.mxu0 0
    %1825 = vmatpush1.bf16.msra.mxu0 0
    %1826 = vmatprep.subr.bf16.mxu0 0
    %1827 = vmatpush1.bf16.msra.mxu0 0
    %1828 = vmatprep.subr.bf16.mxu0 0
    %1829 = vmatpush1.bf16.msra.mxu0 0
    %1830 = vmatprep.mubr.bf16.mxu0 0
    %1831 = vmatmul.mubr.bf16.gmra.mrb[0].mxu0 %v1793
    %v1832 = vpop.f32.mrb[0].mxu0
    %v1833 = vadd.f32 %v1650, %v1832
    %v1834 = vpop.f32.mrb[0].mxu0
    %v1835 = vpop.f32.mrb[0].mxu0
    %v1836 = vpop.f32.mrb[0].mxu0
    %1837 = vdwg.mxu0
    %v1838 = vsel %vm889, %v1833, -inf
    %1839 = vmax.xlane.f32.xlu0 %v1838
    %v1840 = vpop.xlane.xlu0 %1839
    %v1841 = vsub.f32 %v1833, %v1840
    %v1842 = vmul.f32 %v1841, 1.442695
    %v1843 = vpow.pop %v1842
    %v1844 = vsel %vm889, %v1843, 0.0
    %1845 = vadd.xlane.f32.xlu0 %v1844
    %v1846 = vpop.xlane.xlu0 %1845
    %v1847 = vrcp.pop %v1846
    %v1848 = vmul.f32 %v1843, %v1847
    %v1849 = vpack.c.bf16 %v1848, %v1848
    %v1850 = vpack.c.bf16 %v449, %v449
    %v1852 = vsel %vm889, %v1849, 0
    %v1855 = vsel %vm893, %v1850, 0
    %1857 = vmatprep.subr.bf16.mxu0 0
    %1858 = vmatpush1.bf16.msra.mxu0 %v1855
    %1859 = vmatprep.subr.bf16.mxu0 0
    %1860 = vmatpush1.bf16.msra.mxu0 0
    %1861 = vmatprep.subr.bf16.mxu0 0
    %1862 = vmatpush1.bf16.msra.mxu0 0
    %1863 = vmatprep.subr.bf16.mxu0 0
    %1864 = vmatpush1.bf16.msra.mxu0 0
    %1865 = vmatprep.subr.bf16.mxu0 0
    %1866 = vmatpush1.bf16.msra.mxu0 0
    %1867 = vmatprep.subr.bf16.mxu0 0
    %1868 = vmatpush1.bf16.msra.mxu0 0
    %1869 = vmatprep.subr.bf16.mxu0 0
    %1870 = vmatpush1.bf16.msra.mxu0 0
    %1871 = vmatprep.subr.bf16.mxu0 0
    %1872 = vmatpush1.bf16.msra.mxu0 0
    %1873 = vmatprep.subr.bf16.mxu0 0
    %1874 = vmatpush1.bf16.msra.mxu0 0
    %1875 = vmatprep.subr.bf16.mxu0 0
    %1876 = vmatpush1.bf16.msra.mxu0 0
    %1877 = vmatprep.subr.bf16.mxu0 0
    %1878 = vmatpush1.bf16.msra.mxu0 0
    %1879 = vmatprep.subr.bf16.mxu0 0
    %1880 = vmatpush1.bf16.msra.mxu0 0
    %1881 = vmatprep.subr.bf16.mxu0 0
    %1882 = vmatpush1.bf16.msra.mxu0 0
    %1883 = vmatprep.subr.bf16.mxu0 0
    %1884 = vmatpush1.bf16.msra.mxu0 0
    %1885 = vmatprep.subr.bf16.mxu0 0
    %1886 = vmatpush1.bf16.msra.mxu0 0
    %1887 = vmatprep.subr.bf16.mxu0 0
    %1888 = vmatpush1.bf16.msra.mxu0 0
    %1889 = vmatprep.mubr.bf16.mxu0 0
    %1890 = vmatmul.mubr.bf16.gmra.mrb[0].mxu0 %v1852
    %v1891 = vpop.f32.mrb[0].mxu0
    %v1892 = vadd.f32 0.0, %v1891
    %v1893 = vpop.f32.mrb[0].mxu0
    %v1894 = vpop.f32.mrb[0].mxu0
    %v1895 = vpop.f32.mrb[0].mxu0
    %1896 = vdwg.mxu0
    %v1897 = vpack.c.bf16 %v1892, %v1892
    %v1899 = vsel %vm889, %v1897, 0
    %1901 = vmatprep.subr.bf16.mxu0 0
    %1902 = vmatpush1.bf16.msra.mxu0 %v1144
    %1903 = vmatprep.subr.bf16.mxu0 0
    %1904 = vmatpush1.bf16.msra.mxu0 0
    %1905 = vmatprep.subr.bf16.mxu0 0
    %1906 = vmatpush1.bf16.msra.mxu0 0
    %1907 = vmatprep.subr.bf16.mxu0 0
    %1908 = vmatpush1.bf16.msra.mxu0 0
    %1909 = vmatprep.subr.bf16.mxu0 0
    %1910 = vmatpush1.bf16.msra.mxu0 0
    %1911 = vmatprep.subr.bf16.mxu0 0
    %1912 = vmatpush1.bf16.msra.mxu0 0
    %1913 = vmatprep.subr.bf16.mxu0 0
    %1914 = vmatpush1.bf16.msra.mxu0 0
    %1915 = vmatprep.subr.bf16.mxu0 0
    %1916 = vmatpush1.bf16.msra.mxu0 0
    %1917 = vmatprep.subr.bf16.mxu0 0
    %1918 = vmatpush1.bf16.msra.mxu0 0
    %1919 = vmatprep.subr.bf16.mxu0 0
    %1920 = vmatpush1.bf16.msra.mxu0 0
    %1921 = vmatprep.subr.bf16.mxu0 0
    %1922 = vmatpush1.bf16.msra.mxu0 0
    %1923 = vmatprep.subr.bf16.mxu0 0
    %1924 = vmatpush1.bf16.msra.mxu0 0
    %1925 = vmatprep.subr.bf16.mxu0 0
    %1926 = vmatpush1.bf16.msra.mxu0 0
    %1927 = vmatprep.subr.bf16.mxu0 0
    %1928 = vmatpush1.bf16.msra.mxu0 0
    %1929 = vmatprep.subr.bf16.mxu0 0
    %1930 = vmatpush1.bf16.msra.mxu0 0
    %1931 = vmatprep.subr.bf16.mxu0 0
    %1932 = vmatpush1.bf16.msra.mxu0 0
    %1933 = vmatprep.mubr.bf16.mxu0 0
    %1934 = vmatmul.mubr.bf16.gmra.mrb[0].mxu0 %v1899
    %v1935 = vpop.f32.mrb[0].mxu0
    %v1936 = vadd.f32 0.0, %v1935
    %v1937 = vpop.f32.mrb[0].mxu0
    %v1938 = vpop.f32.mrb[0].mxu0
    %v1939 = vpop.f32.mrb[0].mxu0
    %1940 = vdwg.mxu0
    %v1942 = vsel %vm889, %v1757, 0
    %1944 = vmatprep.subr.bf16.mxu0 0
    %1945 = vmatpush1.bf16.msra.mxu0 %v1190
    %1946 = vmatprep.subr.bf16.mxu0 0
    %1947 = vmatpush1.bf16.msra.mxu0 0
    %1948 = vmatprep.subr.bf16.mxu0 0
    %1949 = vmatpush1.bf16.msra.mxu0 0
    %1950 = vmatprep.subr.bf16.mxu0 0
    %1951 = vmatpush1.bf16.msra.mxu0 0
    %1952 = vmatprep.subr.bf16.mxu0 0
    %1953 = vmatpush1.bf16.msra.mxu0 0
    %1954 = vmatprep.subr.bf16.mxu0 0
    %1955 = vmatpush1.bf16.msra.mxu0 0
    %1956 = vmatprep.subr.bf16.mxu0 0
    %1957 = vmatpush1.bf16.msra.mxu0 0
    %1958 = vmatprep.subr.bf16.mxu0 0
    %1959 = vmatpush1.bf16.msra.mxu0 0
    %1960 = vmatprep.subr.bf16.mxu0 0
    %1961 = vmatpush1.bf16.msra.mxu0 0
    %1962 = vmatprep.subr.bf16.mxu0 0
    %1963 = vmatpush1.bf16.msra.mxu0 0
    %1964 = vmatprep.subr.bf16.mxu0 0
    %1965 = vmatpush1.bf16.msra.mxu0 0
    %1966 = vmatprep.subr.bf16.mxu0 0
    %1967 = vmatpush1.bf16.msra.mxu0 0
    %1968 = vmatprep.subr.bf16.mxu0 0
    %1969 = vmatpush1.bf16.msra.mxu0 0
    %1970 = vmatprep.subr.bf16.mxu0 0
    %1971 = vmatpush1.bf16.msra.mxu0 0
    %1972 = vmatprep.subr.bf16.mxu0 0
    %1973 = vmatpush1.bf16.msra.mxu0 0
    %1974 = vmatprep.subr.bf16.mxu0 0
    %1975 = vmatpush1.bf16.msra.mxu0 0
    %1976 = vmatprep.mubr.bf16.mxu0 0
    %1977 = vmatmul.mubr.bf16.gmra.mrb[0].mxu0 %v1942
    %v1978 = vpop.f32.mrb[0].mxu0
    %v1979 = vadd.f32 %v1936, %v1978
    %v1980 = vpop.f32.mrb[0].mxu0
    %v1981 = vpop.f32.mrb[0].mxu0
    %v1982 = vpop.f32.mrb[0].mxu0
    %1983 = vdwg.mxu0
    %v1984 = vpack.c.bf16 %v515, %v515
    %1985 = vxpose.xlu0.b32.start [1/16] %v581, 128
    %1986 = vxpose.xlu0.b32.cont [2/16] 0.0, 128
    %1987 = vxpose.xlu0.b32.cont [3/16] 0.0, 128
    %1988 = vxpose.xlu0.b32.cont [4/16] 0.0, 128
    %1989 = vxpose.xlu0.b32.cont [5/16] 0.0, 128
    %1990 = vxpose.xlu0.b32.cont [6/16] 0.0, 128
    %1991 = vxpose.xlu0.b32.cont [7/16] 0.0, 128
    %1992 = vxpose.xlu0.b32.cont [8/16] 0.0, 128
    %1993 = vxpose.xlu0.b32.cont [9/16] 0.0, 128
    %1994 = vxpose.xlu0.b32.cont [10/16] 0.0, 128
    %1995 = vxpose.xlu0.b32.cont [11/16] 0.0, 128
    %1996 = vxpose.xlu0.b32.cont [12/16] 0.0, 128
    %1997 = vxpose.xlu0.b32.cont [13/16] 0.0, 128
    %1998 = vxpose.xlu0.b32.cont [14/16] 0.0, 128
    %1999 = vxpose.xlu0.b32.cont [15/16] 0.0, 128
    %2000 = vxpose.xlu0.b32.end [16/16] 0.0, 128
    %v2001 = vpop.trf.xlu0
    %v2002 = vpop.trf.xlu0
    %v2003 = vpop.trf.xlu0
    %v2004 = vpop.trf.xlu0
    %v2005 = vpop.trf.xlu0
    %v2006 = vpop.trf.xlu0
    %v2007 = vpop.trf.xlu0
    %v2008 = vpop.trf.xlu0
    %v2009 = vpop.trf.xlu0
    %v2010 = vpop.trf.xlu0
    %v2011 = vpop.trf.xlu0
    %v2012 = vpop.trf.xlu0
    %v2013 = vpop.trf.xlu0
    %v2014 = vpop.trf.xlu0
    %v2015 = vpop.trf.xlu0
    %v2016 = vpop.trf.xlu0
    %v2017 = vpack.c.bf16 %v2001, %v2001
    %v2019 = vsel %vm889, %v1984, 0
    %v2022 = vsel %vm893, %v2017, 0
    %2024 = vmatprep.subr.bf16.mxu0 0
    %2025 = vmatpush1.bf16.msra.mxu0 %v2022
    %2026 = vmatprep.subr.bf16.mxu0 0
    %2027 = vmatpush1.bf16.msra.mxu0 0
    %2028 = vmatprep.subr.bf16.mxu0 0
    %2029 = vmatpush1.bf16.msra.mxu0 0
    %2030 = vmatprep.subr.bf16.mxu0 0
    %2031 = vmatpush1.bf16.msra.mxu0 0
    %2032 = vmatprep.subr.bf16.mxu0 0
    %2033 = vmatpush1.bf16.msra.mxu0 0
    %2034 = vmatprep.subr.bf16.mxu0 0
    %2035 = vmatpush1.bf16.msra.mxu0 0
    %2036 = vmatprep.subr.bf16.mxu0 0
    %2037 = vmatpush1.bf16.msra.mxu0 0
    %2038 = vmatprep.subr.bf16.mxu0 0
    %2039 = vmatpush1.bf16.msra.mxu0 0
    %2040 = vmatprep.subr.bf16.mxu0 0
    %2041 = vmatpush1.bf16.msra.mxu0 0
    %2042 = vmatprep.subr.bf16.mxu0 0
    %2043 = vmatpush1.bf16.msra.mxu0 0
    %2044 = vmatprep.subr.bf16.mxu0 0
    %2045 = vmatpush1.bf16.msra.mxu0 0
    %2046 = vmatprep.subr.bf16.mxu0 0
    %2047 = vmatpush1.bf16.msra.mxu0 0
    %2048 = vmatprep.subr.bf16.mxu0 0
    %2049 = vmatpush1.bf16.msra.mxu0 0
    %2050 = vmatprep.subr.bf16.mxu0 0
    %2051 = vmatpush1.bf16.msra.mxu0 0
    %2052 = vmatprep.subr.bf16.mxu0 0
    %2053 = vmatpush1.bf16.msra.mxu0 0
    %2054 = vmatprep.subr.bf16.mxu0 0
    %2055 = vmatpush1.bf16.msra.mxu0 0
    %2056 = vmatprep.mubr.bf16.mxu0 0
    %2057 = vmatmul.mubr.bf16.gmra.mrb[0].mxu0 %v2019
    %v2058 = vpop.f32.mrb[0].mxu0
    %v2059 = vadd.f32 %v1650, %v2058
    %v2060 = vpop.f32.mrb[0].mxu0
    %v2061 = vpop.f32.mrb[0].mxu0
    %v2062 = vpop.f32.mrb[0].mxu0
    %2063 = vdwg.mxu0
    %v2064 = vsel %vm889, %v2059, -inf
    %2065 = vmax.xlane.f32.xlu0 %v2064
    %v2066 = vpop.xlane.xlu0 %2065
    %v2067 = vsub.f32 %v2059, %v2066
    %v2068 = vmul.f32 %v2067, 1.442695
    %v2069 = vpow.pop %v2068
    %v2070 = vsel %vm889, %v2069, 0.0
    %2071 = vadd.xlane.f32.xlu0 %v2070
    %v2072 = vpop.xlane.xlu0 %2071
    %v2073 = vrcp.pop %v2072
    %v2074 = vmul.f32 %v2069, %v2073
    %v2075 = vpack.c.bf16 %v2074, %v2074
    %v2076 = vpack.c.bf16 %v647, %v647
    %v2078 = vsel %vm889, %v2075, 0
    %v2081 = vsel %vm893, %v2076, 0
    %2083 = vmatprep.subr.bf16.mxu0 0
    %2084 = vmatpush1.bf16.msra.mxu0 %v2081
    %2085 = vmatprep.subr.bf16.mxu0 0
    %2086 = vmatpush1.bf16.msra.mxu0 0
    %2087 = vmatprep.subr.bf16.mxu0 0
    %2088 = vmatpush1.bf16.msra.mxu0 0
    %2089 = vmatprep.subr.bf16.mxu0 0
    %2090 = vmatpush1.bf16.msra.mxu0 0
    %2091 = vmatprep.subr.bf16.mxu0 0
    %2092 = vmatpush1.bf16.msra.mxu0 0
    %2093 = vmatprep.subr.bf16.mxu0 0
    %2094 = vmatpush1.bf16.msra.mxu0 0
    %2095 = vmatprep.subr.bf16.mxu0 0
    %2096 = vmatpush1.bf16.msra.mxu0 0
    %2097 = vmatprep.subr.bf16.mxu0 0
    %2098 = vmatpush1.bf16.msra.mxu0 0
    %2099 = vmatprep.subr.bf16.mxu0 0
    %2100 = vmatpush1.bf16.msra.mxu0 0
    %2101 = vmatprep.subr.bf16.mxu0 0
    %2102 = vmatpush1.bf16.msra.mxu0 0
    %2103 = vmatprep.subr.bf16.mxu0 0
    %2104 = vmatpush1.bf16.msra.mxu0 0
    %2105 = vmatprep.subr.bf16.mxu0 0
    %2106 = vmatpush1.bf16.msra.mxu0 0
    %2107 = vmatprep.subr.bf16.mxu0 0
    %2108 = vmatpush1.bf16.msra.mxu0 0
    %2109 = vmatprep.subr.bf16.mxu0 0
    %2110 = vmatpush1.bf16.msra.mxu0 0
    %2111 = vmatprep.subr.bf16.mxu0 0
    %2112 = vmatpush1.bf16.msra.mxu0 0
    %2113 = vmatprep.subr.bf16.mxu0 0
    %2114 = vmatpush1.bf16.msra.mxu0 0
    %2115 = vmatprep.mubr.bf16.mxu0 0
    %2116 = vmatmul.mubr.bf16.gmra.mrb[0].mxu0 %v2078
    %v2117 = vpop.f32.mrb[0].mxu0
    %v2118 = vadd.f32 0.0, %v2117
    %v2119 = vpop.f32.mrb[0].mxu0
    %v2120 = vpop.f32.mrb[0].mxu0
    %v2121 = vpop.f32.mrb[0].mxu0
    %2122 = vdwg.mxu0
    %v2123 = vpack.c.bf16 %v2118, %v2118
    %v2125 = vsel %vm889, %v2123, 0
    %2127 = vmatprep.subr.bf16.mxu0 0
    %2128 = vmatpush1.bf16.msra.mxu0 %v1378
    %2129 = vmatprep.subr.bf16.mxu0 0
    %2130 = vmatpush1.bf16.msra.mxu0 0
    %2131 = vmatprep.subr.bf16.mxu0 0
    %2132 = vmatpush1.bf16.msra.mxu0 0
    %2133 = vmatprep.subr.bf16.mxu0 0
    %2134 = vmatpush1.bf16.msra.mxu0 0
    %2135 = vmatprep.subr.bf16.mxu0 0
    %2136 = vmatpush1.bf16.msra.mxu0 0
    %2137 = vmatprep.subr.bf16.mxu0 0
    %2138 = vmatpush1.bf16.msra.mxu0 0
    %2139 = vmatprep.subr.bf16.mxu0 0
    %2140 = vmatpush1.bf16.msra.mxu0 0
    %2141 = vmatprep.subr.bf16.mxu0 0
    %2142 = vmatpush1.bf16.msra.mxu0 0
    %2143 = vmatprep.subr.bf16.mxu0 0
    %2144 = vmatpush1.bf16.msra.mxu0 0
    %2145 = vmatprep.subr.bf16.mxu0 0
    %2146 = vmatpush1.bf16.msra.mxu0 0
    %2147 = vmatprep.subr.bf16.mxu0 0
    %2148 = vmatpush1.bf16.msra.mxu0 0
    %2149 = vmatprep.subr.bf16.mxu0 0
    %2150 = vmatpush1.bf16.msra.mxu0 0
    %2151 = vmatprep.subr.bf16.mxu0 0
    %2152 = vmatpush1.bf16.msra.mxu0 0
    %2153 = vmatprep.subr.bf16.mxu0 0
    %2154 = vmatpush1.bf16.msra.mxu0 0
    %2155 = vmatprep.subr.bf16.mxu0 0
    %2156 = vmatpush1.bf16.msra.mxu0 0
    %2157 = vmatprep.subr.bf16.mxu0 0
    %2158 = vmatpush1.bf16.msra.mxu0 0
    %2159 = vmatprep.mubr.bf16.mxu0 0
    %2160 = vmatmul.mubr.bf16.gmra.mrb[0].mxu0 %v2125
    %v2161 = vpop.f32.mrb[0].mxu0
    %v2162 = vadd.f32 0.0, %v2161
    %v2163 = vpop.f32.mrb[0].mxu0
    %v2164 = vpop.f32.mrb[0].mxu0
    %v2165 = vpop.f32.mrb[0].mxu0
    %2166 = vdwg.mxu0
    %v2167 = vadd.f32 %v1979, %v2162
    %v2168 = vpack.c.bf16 %v713, %v713
    %2169 = vxpose.xlu0.b32.start [1/16] %v779, 128
    %2170 = vxpose.xlu0.b32.cont [2/16] 0.0, 128
    %2171 = vxpose.xlu0.b32.cont [3/16] 0.0, 128
    %2172 = vxpose.xlu0.b32.cont [4/16] 0.0, 128
    %2173 = vxpose.xlu0.b32.cont [5/16] 0.0, 128
    %2174 = vxpose.xlu0.b32.cont [6/16] 0.0, 128
    %2175 = vxpose.xlu0.b32.cont [7/16] 0.0, 128
    %2176 = vxpose.xlu0.b32.cont [8/16] 0.0, 128
    %2177 = vxpose.xlu0.b32.cont [9/16] 0.0, 128
    %2178 = vxpose.xlu0.b32.cont [10/16] 0.0, 128
    %2179 = vxpose.xlu0.b32.cont [11/16] 0.0, 128
    %2180 = vxpose.xlu0.b32.cont [12/16] 0.0, 128
    %2181 = vxpose.xlu0.b32.cont [13/16] 0.0, 128
    %2182 = vxpose.xlu0.b32.cont [14/16] 0.0, 128
    %2183 = vxpose.xlu0.b32.cont [15/16] 0.0, 128
    %2184 = vxpose.xlu0.b32.end [16/16] 0.0, 128
    %v2185 = vpop.trf.xlu0
    %v2186 = vpop.trf.xlu0
    %v2187 = vpop.trf.xlu0
    %v2188 = vpop.trf.xlu0
    %v2189 = vpop.trf.xlu0
    %v2190 = vpop.trf.xlu0
    %v2191 = vpop.trf.xlu0
    %v2192 = vpop.trf.xlu0
    %v2193 = vpop.trf.xlu0
    %v2194 = vpop.trf.xlu0
    %v2195 = vpop.trf.xlu0
    %v2196 = vpop.trf.xlu0
    %v2197 = vpop.trf.xlu0
    %v2198 = vpop.trf.xlu0
    %v2199 = vpop.trf.xlu0
    %v2200 = vpop.trf.xlu0
    %v2201 = vpack.c.bf16 %v2185, %v2185
    %v2203 = vsel %vm889, %v2168, 0
    %v2206 = vsel %vm893, %v2201, 0
    %2208 = vmatprep.subr.bf16.mxu0 0
    %2209 = vmatpush1.bf16.msra.mxu0 %v2206
    %2210 = vmatprep.subr.bf16.mxu0 0
    %2211 = vmatpush1.bf16.msra.mxu0 0
    %2212 = vmatprep.subr.bf16.mxu0 0
    %2213 = vmatpush1.bf16.msra.mxu0 0
    %2214 = vmatprep.subr.bf16.mxu0 0
    %2215 = vmatpush1.bf16.msra.mxu0 0
    %2216 = vmatprep.subr.bf16.mxu0 0
    %2217 = vmatpush1.bf16.msra.mxu0 0
    %2218 = vmatprep.subr.bf16.mxu0 0
    %2219 = vmatpush1.bf16.msra.mxu0 0
    %2220 = vmatprep.subr.bf16.mxu0 0
    %2221 = vmatpush1.bf16.msra.mxu0 0
    %2222 = vmatprep.subr.bf16.mxu0 0
    %2223 = vmatpush1.bf16.msra.mxu0 0
    %2224 = vmatprep.subr.bf16.mxu0 0
    %2225 = vmatpush1.bf16.msra.mxu0 0
    %2226 = vmatprep.subr.bf16.mxu0 0
    %2227 = vmatpush1.bf16.msra.mxu0 0
    %2228 = vmatprep.subr.bf16.mxu0 0
    %2229 = vmatpush1.bf16.msra.mxu0 0
    %2230 = vmatprep.subr.bf16.mxu0 0
    %2231 = vmatpush1.bf16.msra.mxu0 0
    %2232 = vmatprep.subr.bf16.mxu0 0
    %2233 = vmatpush1.bf16.msra.mxu0 0
    %2234 = vmatprep.subr.bf16.mxu0 0
    %2235 = vmatpush1.bf16.msra.mxu0 0
    %2236 = vmatprep.subr.bf16.mxu0 0
    %2237 = vmatpush1.bf16.msra.mxu0 0
    %2238 = vmatprep.subr.bf16.mxu0 0
    %2239 = vmatpush1.bf16.msra.mxu0 0
    %2240 = vmatprep.mubr.bf16.mxu0 0
    %2241 = vmatmul.mubr.bf16.gmra.mrb[0].mxu0 %v2203
    %v2242 = vpop.f32.mrb[0].mxu0
    %v2243 = vadd.f32 %v1650, %v2242
    %v2244 = vpop.f32.mrb[0].mxu0
    %v2245 = vpop.f32.mrb[0].mxu0
    %v2246 = vpop.f32.mrb[0].mxu0
    %2247 = vdwg.mxu0
    %v2248 = vsel %vm889, %v2243, -inf
    %2249 = vmax.xlane.f32.xlu0 %v2248
    %v2250 = vpop.xlane.xlu0 %2249
    %v2251 = vsub.f32 %v2243, %v2250
    %v2252 = vmul.f32 %v2251, 1.442695
    %v2253 = vpow.pop %v2252
    %v2254 = vsel %vm889, %v2253, 0.0
    %2255 = vadd.xlane.f32.xlu0 %v2254
    %v2256 = vpop.xlane.xlu0 %2255
    %v2257 = vrcp.pop %v2256
    %v2258 = vmul.f32 %v2253, %v2257
    %v2259 = vpack.c.bf16 %v2258, %v2258
    %v2260 = vpack.c.bf16 %v845, %v845
    %v2262 = vsel %vm889, %v2259, 0
    %v2265 = vsel %vm893, %v2260, 0
    %2267 = vmatprep.subr.bf16.mxu0 0
    %2268 = vmatpush1.bf16.msra.mxu0 %v2265
    %2269 = vmatprep.subr.bf16.mxu0 0
    %2270 = vmatpush1.bf16.msra.mxu0 0
    %2271 = vmatprep.subr.bf16.mxu0 0
    %2272 = vmatpush1.bf16.msra.mxu0 0
    %2273 = vmatprep.subr.bf16.mxu0 0
    %2274 = vmatpush1.bf16.msra.mxu0 0
    %2275 = vmatprep.subr.bf16.mxu0 0
    %2276 = vmatpush1.bf16.msra.mxu0 0
    %2277 = vmatprep.subr.bf16.mxu0 0
    %2278 = vmatpush1.bf16.msra.mxu0 0
    %2279 = vmatprep.subr.bf16.mxu0 0
    %2280 = vmatpush1.bf16.msra.mxu0 0
    %2281 = vmatprep.subr.bf16.mxu0 0
    %2282 = vmatpush1.bf16.msra.mxu0 0
    %2283 = vmatprep.subr.bf16.mxu0 0
    %2284 = vmatpush1.bf16.msra.mxu0 0
    %2285 = vmatprep.subr.bf16.mxu0 0
    %2286 = vmatpush1.bf16.msra.mxu0 0
    %2287 = vmatprep.subr.bf16.mxu0 0
    %2288 = vmatpush1.bf16.msra.mxu0 0
    %2289 = vmatprep.subr.bf16.mxu0 0
    %2290 = vmatpush1.bf16.msra.mxu0 0
    %2291 = vmatprep.subr.bf16.mxu0 0
    %2292 = vmatpush1.bf16.msra.mxu0 0
    %2293 = vmatprep.subr.bf16.mxu0 0
    %2294 = vmatpush1.bf16.msra.mxu0 0
    %2295 = vmatprep.subr.bf16.mxu0 0
    %2296 = vmatpush1.bf16.msra.mxu0 0
    %2297 = vmatprep.subr.bf16.mxu0 0
    %2298 = vmatpush1.bf16.msra.mxu0 0
    %2299 = vmatprep.mubr.bf16.mxu0 0
    %2300 = vmatmul.mubr.bf16.gmra.mrb[0].mxu0 %v2262
    %v2301 = vpop.f32.mrb[0].mxu0
    %v2302 = vadd.f32 0.0, %v2301
    %v2303 = vpop.f32.mrb[0].mxu0
    %v2304 = vpop.f32.mrb[0].mxu0
    %v2305 = vpop.f32.mrb[0].mxu0
    %2306 = vdwg.mxu0
    %v2307 = vpack.c.bf16 %v2302, %v2302
    %v2309 = vsel %vm889, %v2307, 0
    %2311 = vmatprep.subr.bf16.mxu0 0
    %2312 = vmatpush1.bf16.msra.mxu0 %v1567
    %2313 = vmatprep.subr.bf16.mxu0 0
    %2314 = vmatpush1.bf16.msra.mxu0 0
    %2315 = vmatprep.subr.bf16.mxu0 0
    %2316 = vmatpush1.bf16.msra.mxu0 0
    %2317 = vmatprep.subr.bf16.mxu0 0
    %2318 = vmatpush1.bf16.msra.mxu0 0
    %2319 = vmatprep.subr.bf16.mxu0 0
    %2320 = vmatpush1.bf16.msra.mxu0 0
    %2321 = vmatprep.subr.bf16.mxu0 0
    %2322 = vmatpush1.bf16.msra.mxu0 0
    %2323 = vmatprep.subr.bf16.mxu0 0
    %2324 = vmatpush1.bf16.msra.mxu0 0
    %2325 = vmatprep.subr.bf16.mxu0 0
    %2326 = vmatpush1.bf16.msra.mxu0 0
    %2327 = vmatprep.subr.bf16.mxu0 0
    %2328 = vmatpush1.bf16.msra.mxu0 0
    %2329 = vmatprep.subr.bf16.mxu0 0
    %2330 = vmatpush1.bf16.msra.mxu0 0
    %2331 = vmatprep.subr.bf16.mxu0 0
    %2332 = vmatpush1.bf16.msra.mxu0 0
    %2333 = vmatprep.subr.bf16.mxu0 0
    %2334 = vmatpush1.bf16.msra.mxu0 0
    %2335 = vmatprep.subr.bf16.mxu0 0
    %2336 = vmatpush1.bf16.msra.mxu0 0
    %2337 = vmatprep.subr.bf16.mxu0 0
    %2338 = vmatpush1.bf16.msra.mxu0 0
    %2339 = vmatprep.subr.bf16.mxu0 0
    %2340 = vmatpush1.bf16.msra.mxu0 0
    %2341 = vmatprep.subr.bf16.mxu0 0
    %2342 = vmatpush1.bf16.msra.mxu0 0
    %2343 = vmatprep.mubr.bf16.mxu0 0
    %2344 = vmatmul.mubr.bf16.gmra.mrb[0].mxu0 %v2309
    %v2345 = vpop.f32.mrb[0].mxu0
    %v2346 = vadd.f32 0.0, %v2345
    %v2347 = vpop.f32.mrb[0].mxu0
    %v2348 = vpop.f32.mrb[0].mxu0
    %v2349 = vpop.f32.mrb[0].mxu0
    %2350 = vdwg.mxu0
    %v2351 = vadd.f32 %v2167, %v2346
    %v2352 = vld [vmem:[%s9] sm:$0x1]
    %v2354 = vlaneseq
    %v2355 = vshrl.u32 %v2354, 7
    %v2356 = vsub.s32 0, %v2355
    %v2357 = vrot.slane %v2352, %v2356
    %v2359 = vadd.f32 %v1609, %v2357
    %v2360 = vadd.f32 %v2351, %v2357
    %v2361 = vpack.c.bf16 %v2360, %v2359
    %v2362 = vld [vmem:[%s10] sm:$0xf]
    %v2363 = vld [vmem:[%s10 + $0x4] sm:$0xf]
    %v2364 = vld [vmem:[%s10 + $0x8] sm:$0xf]
    %v2365 = vld [vmem:[%s10 + $0xc] sm:$0xf]
    %v2366 = vld [vmem:[%s11] sm:$0x1]
    %v2368 = vlaneseq
    %v2369 = vshrl.u32 %v2368, 7
    %v2370 = vsub.s32 0, %v2369
    %v2371 = vrot.slane %v2366, %v2370
    %v2377 = vunpack.c.l.b16 %v2362
    %v2378 = vunpack.c.l.b16 %v2363
    %v2379 = vunpack.c.l.b16 %v2364
    %v2380 = vunpack.c.l.b16 %v2365
    %v2381 = vpack.c.b16 %v2378, %v2377
    %v2382 = vpack.c.b16 %v2380, %v2379
    %v2386 = vsel %vm81, %v2361, 0
    %2388 = vmatprep.subr.bf16.mxu0 0
    %2389 = vmatpush1.bf16.msra.mxu0 %v2381
    %2390 = vmatprep.subr.bf16.mxu0 0
    %2391 = vmatpush1.bf16.msra.mxu0 %v2382
    %2392 = vmatprep.subr.bf16.mxu0 0
    %2393 = vmatpush1.bf16.msra.mxu0 0
    %2394 = vmatprep.subr.bf16.mxu0 0
    %2395 = vmatpush1.bf16.msra.mxu0 0
    %2396 = vmatprep.subr.bf16.mxu0 0
    %2397 = vmatpush1.bf16.msra.mxu0 0
    %2398 = vmatprep.subr.bf16.mxu0 0
    %2399 = vmatpush1.bf16.msra.mxu0 0
    %2400 = vmatprep.subr.bf16.mxu0 0
    %2401 = vmatpush1.bf16.msra.mxu0 0
    %2402 = vmatprep.subr.bf16.mxu0 0
    %2403 = vmatpush1.bf16.msra.mxu0 0
    %2404 = vmatprep.subr.bf16.mxu0 0
    %2405 = vmatpush1.bf16.msra.mxu0 0
    %2406 = vmatprep.subr.bf16.mxu0 0
    %2407 = vmatpush1.bf16.msra.mxu0 0
    %2408 = vmatprep.subr.bf16.mxu0 0
    %2409 = vmatpush1.bf16.msra.mxu0 0
    %2410 = vmatprep.subr.bf16.mxu0 0
    %2411 = vmatpush1.bf16.msra.mxu0 0
    %2412 = vmatprep.subr.bf16.mxu0 0
    %2413 = vmatpush1.bf16.msra.mxu0 0
    %2414 = vmatprep.subr.bf16.mxu0 0
    %2415 = vmatpush1.bf16.msra.mxu0 0
    %2416 = vmatprep.subr.bf16.mxu0 0
    %2417 = vmatpush1.bf16.msra.mxu0 0
    %2418 = vmatprep.subr.bf16.mxu0 0
    %2419 = vmatpush1.bf16.msra.mxu0 0
    %2420 = vmatprep.mubr.bf16.mxu0 0
    %2421 = vmatmul.mubr.bf16.gmra.mrb[0].mxu0 %v2386
    %v2422 = vpop.f32.mrb[0].mxu0
    %v2423 = vadd.f32 %v2371, %v2422
    %v2424 = vpop.f32.mrb[0].mxu0
    %v2425 = vpop.f32.mrb[0].mxu0
    %v2426 = vadd.f32 %v2371, %v2425
    %v2427 = vpop.f32.mrb[0].mxu0
    %2428 = vdwg.mxu0
    %v2429 = vmax.f32 %v2423, 0.0
    %v2430 = vmax.f32 %v2426, 0.0
    %v2431 = vpack.c.bf16 %v2430, %v2429
    %v2432 = vld [vmem:[%s12] sm:$0xf]
    %v2433 = vld [vmem:[%s12 + $0x4] sm:$0xf]
    %v2434 = vld [vmem:[%s12 + $0x8] sm:$0xf]
    %v2435 = vld [vmem:[%s12 + $0xc] sm:$0xf]
    %v2436 = vld [vmem:[%s12 + $0x10] sm:$0xf]
    %v2437 = vld [vmem:[%s12 + $0x14] sm:$0xf]
    %v2438 = vld [vmem:[%s12 + $0x18] sm:$0xf]
    %v2439 = vld [vmem:[%s12 + $0x1c] sm:$0xf]
    %v2440 = vld [vmem:[%s13] sm:$0x1]
    %v2442 = vlaneseq
    %v2443 = vshrl.u32 %v2442, 7
    %v2444 = vsub.s32 0, %v2443
    %v2445 = vrot.slane %v2440, %v2444
    %v2455 = vunpack.c.l.b16 %v2432
    %v2456 = vunpack.c.l.b16 %v2433
    %v2457 = vunpack.c.l.b16 %v2434
    %v2458 = vunpack.c.l.b16 %v2435
    %v2459 = vunpack.c.l.b16 %v2436
    %v2460 = vunpack.c.l.b16 %v2437
    %v2461 = vunpack.c.l.b16 %v2438
    %v2462 = vunpack.c.l.b16 %v2439
    %v2463 = vpack.c.b16 %v2456, %v2455
    %v2464 = vpack.c.b16 %v2458, %v2457
    %v2465 = vpack.c.b16 %v2460, %v2459
    %v2466 = vpack.c.b16 %v2462, %v2461
    %vm2471 = vcmask 523264
    %v2473 = vsel %vm2471, %v2431, 0
    %2475 = vmatprep.subr.bf16.mxu0 0
    %2476 = vmatpush1.bf16.msra.mxu0 %v2463
    %2477 = vmatprep.subr.bf16.mxu0 0
    %2478 = vmatpush1.bf16.msra.mxu0 %v2464
    %2479 = vmatprep.subr.bf16.mxu0 0
    %2480 = vmatpush1.bf16.msra.mxu0 %v2465
    %2481 = vmatprep.subr.bf16.mxu0 0
    %2482 = vmatpush1.bf16.msra.mxu0 %v2466
    %2483 = vmatprep.subr.bf16.mxu0 0
    %2484 = vmatpush1.bf16.msra.mxu0 0
    %2485 = vmatprep.subr.bf16.mxu0 0
    %2486 = vmatpush1.bf16.msra.mxu0 0
    %2487 = vmatprep.subr.bf16.mxu0 0
    %2488 = vmatpush1.bf16.msra.mxu0 0
    %2489 = vmatprep.subr.bf16.mxu0 0
    %2490 = vmatpush1.bf16.msra.mxu0 0
    %2491 = vmatprep.subr.bf16.mxu0 0
    %2492 = vmatpush1.bf16.msra.mxu0 0
    %2493 = vmatprep.subr.bf16.mxu0 0
    %2494 = vmatpush1.bf16.msra.mxu0 0
    %2495 = vmatprep.subr.bf16.mxu0 0
    %2496 = vmatpush1.bf16.msra.mxu0 0
    %2497 = vmatprep.subr.bf16.mxu0 0
    %2498 = vmatpush1.bf16.msra.mxu0 0
    %2499 = vmatprep.subr.bf16.mxu0 0
    %2500 = vmatpush1.bf16.msra.mxu0 0
    %2501 = vmatprep.subr.bf16.mxu0 0
    %2502 = vmatpush1.bf16.msra.mxu0 0
    %2503 = vmatprep.subr.bf16.mxu0 0
    %2504 = vmatpush1.bf16.msra.mxu0 0
    %2505 = vmatprep.subr.bf16.mxu0 0
    %2506 = vmatpush1.bf16.msra.mxu0 0
    %2507 = vmatprep.mubr.bf16.mxu0 0
    %2508 = vmatmul.mubr.bf16.gmra.mrb[0].mxu0 %v2473
    %v2509 = vpop.f32.mrb[0].mxu0
    %v2510 = vadd.f32 %v2445, %v2509
    %v2511 = vpop.f32.mrb[0].mxu0
    %v2512 = vpop.f32.mrb[0].mxu0
    %v2513 = vadd.f32 %v2445, %v2512
    %v2514 = vpop.f32.mrb[0].mxu0
    %2515 = vdwg.mxu0
    %v2516 = vadd.f32 %v2510, %v2359
    %v2517 = vadd.f32 %v2513, %v2360
    %v2518 = vsel %vm81, %v2516, 0.0
    %2519 = vadd.xlane.f32.xlu0 %v2518
    %v2520 = vpop.xlane.xlu0 %2519
    %v2521 = vsel %vm81, %v2517, 0.0
    %2522 = vadd.xlane.f32.xlu0 %v2521
    %v2523 = vpop.xlane.xlu0 %2522
    %v2524 = vrcp.pop 32.0
    %v2525 = vmul.f32 %v2520, %v2524
    %v2526 = vmul.f32 %v2523, %v2524
    %v2527 = vmul.f32 %v2516, %v2516
    %v2528 = vmul.f32 %v2517, %v2517
    %v2529 = vsel %vm81, %v2527, 0.0
    %2530 = vadd.xlane.f32.xlu0 %v2529
    %v2531 = vpop.xlane.xlu0 %2530
    %v2532 = vsel %vm81, %v2528, 0.0
    %2533 = vadd.xlane.f32.xlu0 %v2532
    %v2534 = vpop.xlane.xlu0 %2533
    %v2535 = vmul.f32 %v2531, %v2524
    %v2536 = vmul.f32 %v2534, %v2524
    %v2537 = vmul.f32 %v2525, %v2525
    %v2538 = vmul.f32 %v2526, %v2526
    %v2539 = vsub.f32 %v2535, %v2537
    %v2540 = vsub.f32 %v2536, %v2538
    %v2541 = vsub.f32 %v2516, %v2525
    %v2542 = vsub.f32 %v2517, %v2526
    %v2543 = vadd.f32 %v2539, 1e-05
    %v2544 = vadd.f32 %v2540, 1e-05
    %v2545 = vrsqrt.pop %v2543
    %v2546 = vrsqrt.pop %v2544
    %v2547 = vmul.f32 %v2541, %v2545
    %v2548 = vmul.f32 %v2542, %v2546
    %v2549 = vld [vmem:[%s14] sm:$0x1]
    %v2551 = vlaneseq
    %v2552 = vshrl.u32 %v2551, 7
    %v2553 = vsub.s32 0, %v2552
    %v2554 = vrot.slane %v2549, %v2553
    %v2556 = vmul.f32 %v2547, %v2554
    %v2557 = vmul.f32 %v2548, %v2554
    %v2558 = vld [vmem:[%s15] sm:$0x1]
    %v2560 = vlaneseq
    %v2561 = vshrl.u32 %v2560, 7
    %v2562 = vsub.s32 0, %v2561
    %v2563 = vrot.slane %v2558, %v2562
    %v2565 = vadd.f32 %v2556, %v2563
    %v2566 = vadd.f32 %v2557, %v2563
    %2567 = vst.msk [vmem:[#allocation2] sm:$0xff] %vm81, %v2565
    %2568 = vst.msk [vmem:[#allocation2 + $0x8] sm:$0xff] %vm81, %v2566
    // Predicated region
    $region66: #{encoder_layer.1} parent=1 // pred_check
      _
    $region67: #{encoder_layer.1} parent=1 // pred_check_branch
      %2570 = sbr.rel (0) target = $region69
    $region68: #{encoder_layer.1} parent=1 // pred_region
      %s2572 = ssub.s32 256, 256
      %2573 = vsyncadd [#allocation3], %s2572
      %s2574 = sshll.u32 [#allocation2], 4
      %s2575 = int_to_ptr.vmem [resolvable:$true] %s2574
      %2580 = dma.vmem_to_hbm [thread:$0]  %s2575, 256, %s16, [#allocation3], 128, 128, 8
    $region69: #{encoder_layer.1} parent=1 // pred_fallthru
      _
    // Predicated region
    $region70: #{encoder_layer.1} parent=1 // pred_check
      _
    $region71: #{encoder_layer.1} parent=1 // pred_check_branch
      %2582 = sbr.rel (0) target = $region73
    $region72: #{encoder_layer.1} parent=1 // pred_region
      %2583 = dma.done [#allocation3], 256
    $region73: #{encoder_layer.1} parent=1 // pred_fallthru
      _
    %2584 = vsyncpa [#allocation3], 1

</llo_original>
